<compile_context>
chip_gen: v7x
topology: tpu7x:2x2x1
jax: 0.10.0
libtpu: 0.0.40
codegen_flags: <defaults>
</compile_context>

<pallas_src>
import math

import jax
import jax.numpy as jnp
from jax.experimental import pallas as pl
from jax.experimental.pallas import tpu as pltpu


# ----------------------------------------------------------------------------
# Generic fused kernel: valid 1-D conv over several channel slabs with all
# taps collapsed into one MXU contraction per W tile, optional fused x2
# nearest-upsample of a slab (0/1 expansion matmul), fused bias + activation,
# and an optional fused trailing 1x1 conv + tanh.
# ----------------------------------------------------------------------------
def _make_kernel(slab_cfg, act, neg_slope, has_second, compute_dtype):
    n_slabs = len(slab_cfg)
    n_halo = sum(1 for s in slab_cfg if s["halo"])
    n_exp = sum(1 for s in slab_cfg if s["expand"])

    def kernel(*refs):
        p = 0
        main_refs = refs[p:p + n_slabs]; p += n_slabs
        halo_refs = refs[p:p + n_halo]; p += n_halo
        exp_refs = refs[p:p + n_exp]; p += n_exp
        w_ref = refs[p]; p += 1
        b_ref = refs[p]; p += 1
        if has_second:
            w2_ref = refs[p]; p += 1
            b2_ref = refs[p]; p += 1
        o_ref = refs[p]

        t_out = o_ref.shape[-1]
        j = pl.program_id(1)

        rows = []
        hi = ei = 0
        for g, cfg in enumerate(slab_cfg):
            xg = main_refs[g][...]                        # (C_g, main_w) bf16
            if cfg["halo"]:
                xg = jnp.concatenate([xg, halo_refs[hi][...]], axis=-1)
                hi += 1
            if cfg["expand"]:
                if cfg["mask"]:
                    # Zero the (possibly stale) padded tail of a ragged block
                    # so it cannot leak through the expansion matmul.
                    lim = cfg["x_len"] - j * cfg["main_w"]
                    col = jax.lax.broadcasted_iota(jnp.int32, xg.shape, 1)
                    xg = jnp.where(col < lim, xg, jnp.zeros_like(xg))
                # Fused nearest x2 upsample: u[:, b] = x[:, b // 2].
                xg = jnp.dot(xg, exp_refs[ei][...],
                             preferred_element_type=jnp.float32)
                xg = xg.astype(compute_dtype)
                ei += 1
            for s in range(cfg["taps"]):                  # static, unrolled
                rows.append(xg[:, s:s + t_out])

        xstack = rows[0] if len(rows) == 1 else jnp.concatenate(rows, axis=0)
        # Single stacked MXU contraction per tile.
        acc = jnp.dot(w_ref[...], xstack, preferred_element_type=jnp.float32)
        acc = acc + b_ref[...]                            # (C_out, 1) broadcast
        if act == "leaky_relu":
            acc = jnp.where(acc >= 0, acc, neg_slope * acc)
        elif act == "tanh":
            acc = jnp.tanh(acc)
        if has_second:                                    # fused 1x1 + tanh
            acc = jnp.dot(w2_ref[...], acc.astype(compute_dtype),
                          preferred_element_type=jnp.float32)
            acc = acc + b2_ref[...]
            acc = jnp.tanh(acc)
        o_ref[...] = acc.astype(o_ref.dtype)

    return kernel


def fused_conv(slabs, w_stack, bias, *, act="none", neg_slope=0.01,
               second=None, tile_w=2048, compute_dtype=jnp.bfloat16,
               out_dtype=None):
    """Fused valid 1-D conv over channel-partitioned slabs (NCW layout).

    slabs: list of (x, taps, expand) with x: (N, C_g, W_g).
      expand=True consumes the slab through a fused x2 nearest upsample done
      in VMEM (the upsampled tensor never touches HBM).
    w_stack: (C_out, sum_g taps_g * C_g), taps pre-stacked at init time.
    bias:    (C_out,)
    second:  optional (w2 (K, C_out), b2 (K,)) fused 1x1 conv + tanh epilogue.
    """
    n = int(slabs[0][0].shape[0])
    c_out = int(w_stack.shape[0])

    # Output length: start-aligned crop to the shortest slab.
    avail = []
    for x, taps, expand in slabs:
        wg = int(x.shape[2])
        avail.append((2 * wg if expand else wg) - taps + 1)
    w_out = min(avail)

    if w_out <= tile_w:
        tile, nt = w_out, 1
    else:
        assert tile_w % 256 == 0, "tile_w must be a multiple of 256"
        tile, nt = tile_w, -(-w_out // tile_w)

    main_arrays, main_specs = [], []
    halo_arrays, halo_specs = [], []
    exp_arrays, exp_specs = [], []
    slab_cfg = []
    for x, taps, expand in slabs:
        x = x.astype(compute_dtype)
        c, wg = int(x.shape[1]), int(x.shape[2])
        if nt == 1:
            main_w, h = wg, 0
        elif expand:
            main_w, h = tile // 2, taps // 2
        else:
            main_w, h = tile, taps - 1

        main_arrays.append(x)
        if nt == 1:
            main_specs.append(
                pl.BlockSpec((None, c, main_w), lambda b, j: (b, 0, 0)))
        else:
            main_specs.append(
                pl.BlockSpec((None, c, main_w), lambda b, j: (b, 0, j)))

        if h > 0:
            # Tiny per-tile halo side-array (the taps-1 columns just past each
            # main block): W tiles never overlap, so every spec stays Blocked
            # and auto-pipelined.
            starts = (jnp.arange(nt) + 1) * main_w
            cols = starts[:, None] + jnp.arange(h)[None, :]          # (nt, h)
            hal = jnp.take(x, jnp.minimum(cols, wg - 1), axis=2)     # (N,C,nt,h)
            hal = jnp.where(cols[None, None] < wg, hal, 0).astype(compute_dtype)
            halo_arrays.append(jnp.transpose(hal, (0, 2, 1, 3)))     # (N,nt,C,h)
            halo_specs.append(
                pl.BlockSpec((None, None, c, h), lambda b, j: (b, j, 0, 0)))

        if expand:
            rows_r = main_w + h
            cols_r = tile + taps - 1
            rmat = (jnp.arange(rows_r)[:, None]
                    == (jnp.arange(cols_r)[None, :] // 2)).astype(compute_dtype)
            exp_arrays.append(rmat)
            exp_specs.append(
                pl.BlockSpec((rows_r, cols_r), lambda b, j: (0, 0)))

        slab_cfg.append(dict(taps=taps, halo=(h > 0), expand=expand,
                             main_w=main_w, x_len=wg,
                             mask=(expand and nt > 1)))

    w_stack = w_stack.astype(compute_dtype)
    bias2d = bias.reshape(c_out, 1).astype(jnp.float32)
    weight_arrays = [w_stack, bias2d]
    weight_specs = [pl.BlockSpec(tuple(map(int, w_stack.shape)),
                                 lambda b, j: (0, 0)),
                    pl.BlockSpec((c_out, 1), lambda b, j: (0, 0))]

    has_second = second is not None
    if has_second:
        w2, b2 = second
        out_c = int(w2.shape[0])
        weight_arrays += [w2.astype(compute_dtype),
                          b2.reshape(out_c, 1).astype(jnp.float32)]
        weight_specs += [pl.BlockSpec(tuple(map(int, w2.shape)),
                                      lambda b, j: (0, 0)),
                         pl.BlockSpec((out_c, 1), lambda b, j: (0, 0))]
    else:
        out_c = c_out

    if nt == 1:
        out_spec = pl.BlockSpec((None, out_c, w_out), lambda b, j: (b, 0, 0))
    else:
        out_spec = pl.BlockSpec((None, out_c, tile), lambda b, j: (b, 0, j))

    kernel = _make_kernel(tuple(slab_cfg), act, neg_slope, has_second,
                          compute_dtype)

    return pl.pallas_call(
        kernel,
        out_shape=jax.ShapeDtypeStruct((n, out_c, w_out),
                                       out_dtype or compute_dtype),
        grid=(n, nt),
        in_specs=main_specs + halo_specs + exp_specs + weight_specs,
        out_specs=out_spec,
        compiler_params=pltpu.CompilerParams(
            # Both grid axes independent -> megacore-shardable (v7x: 2 TCs).
            dimension_semantics=("parallel", "parallel"),
            # 48 MiB scoped VMEM is safe on every generation (64 MiB physical
            # on v7x, 128 MiB on v5e/v6e).  Per-tile footprint is O(C*tile_w)
            # with tiny C, so tile_w -- not this limit -- is the roofline knob
            # (raise tile_w on v5e/v6e, keep ~2K on v7x).
            vmem_limit_bytes=48 * 1024 * 1024,
        ),
    )(*main_arrays, *halo_arrays, *exp_arrays, *weight_arrays)


# ----------------------------------------------------------------------------
# Deterministic parameter construction (PyTorch-Conv1d-style uniform init).
# ----------------------------------------------------------------------------
def _init_conv(key, c_in, c_out, ksize):
    kw, kb = jax.random.split(key)
    bound = 1.0 / math.sqrt(c_in * ksize)
    w = jax.random.uniform(kw, (ksize, c_out, c_in), jnp.float32, -bound, bound)
    b = jax.random.uniform(kb, (c_out,), jnp.float32, -bound, bound)
    return w, b


class WaveUNetPallas:
    def __init__(self, L, K, Fc, fd, fu, key,
                 compute_dtype=jnp.bfloat16, tile_w=2048):
        assert tile_w % 256 == 0
        self.L, self.K, self.Fc, self.fd, self.fu = L, K, Fc, fd, fu
        self.compute_dtype = compute_dtype
        self.tile_w = tile_w
        self.ce = (fd + 1) // 2          # even-phase taps of the stride-2 conv
        self.co = fd // 2                # odd-phase taps

        keys = jax.random.split(key, 2 * L + 2)
        k = 0

        # Down-sampling: Conv1d(nr, Fc*i, fd) + LeakyReLU + decimate(2), with
        # the stride-2 decimation folded in via even/odd phase weight slabs
        # (pre-stacked for the single per-tile contraction).
        # TODO(synk): reference kernel_size is the 2-D tuple (fd, fd); using fd.
        self.ds_params = []
        nr = 1
        for I in range(L):
            i = I + 1
            w, b = _init_conv(keys[k], nr, Fc * i, fd); k += 1
            even = [w[s] for s in range(0, fd, 2)]
            odd = [w[s] for s in range(1, fd, 2)]
            self.ds_params.append((jnp.concatenate(even + odd, axis=1), b))
            nr = Fc * i

        w, b = _init_conv(keys[k], nr, Fc * (L + 1), fd); k += 1
        self.middle = (jnp.concatenate([w[s] for s in range(fd)], axis=1), b)
        nr = Fc * (L + 1)

        # Up-sampling: Upsample(2) -> concat skip -> Conv1d(fu) -> LeakyReLU.
        # The upsample AND the concat are fused; weights pre-split/stacked as
        # [up taps ..., skip taps ...].
        # TODO(synk): reference sizes the US conv for `nrLayers` input channels,
        # inconsistent with any concat; sized for the channel-concatenated skip.
        self.us_params = []
        for idx in range(L):
            i = L - idx
            skip_ch = Fc * i
            w, b = _init_conv(keys[k], nr + skip_ch, Fc * i, fu); k += 1
            up = [w[s][:, :nr] for s in range(fu)]
            sk = [w[s][:, nr:] for s in range(fu)]
            self.us_params.append((jnp.concatenate(up + sk, axis=1), b))
            nr = Fc * i

        # Final 1x1 conv + Tanh (fused into the last US kernel's epilogue).
        w, b = _init_conv(keys[k], nr, K, 1); k += 1
        self.last = (w[0], b)            # (K, nr), (K,)

        self._forward_jit = jax.jit(self._forward)

    def _forward(self, x_ncw):
        cd = self.compute_dtype
        x = x_ncw.astype(cd)             # NCW: channels on sublanes, W on lanes

        ds_blocks = []
        for (w_stack, b) in self.ds_params:
            # TODO(synk): even/odd phase split still done by an XLA strided
            # slice (one xe/xo materialisation per DS layer); DMA-level split
            # is not expressible with plain Blocked BlockSpecs.
            xe = x[:, :, 0::2]
            slabs = [(xe, self.ce, False)]
            if self.co > 0:
                slabs.append((x[:, :, 1::2], self.co, False))
            x = fused_conv(slabs, w_stack, b, act="leaky_relu",
                           tile_w=self.tile_w, compute_dtype=cd, out_dtype=cd)
            # TODO(synk): skips saved post-decimation, following the literal
            # op order of the reference forward().
            ds_blocks.append(x)

        w_stack, b = self.middle
        x = fused_conv([(x, self.fd, False)], w_stack, b, act="none",
                       tile_w=self.tile_w, compute_dtype=cd, out_dtype=cd)

        for idx, (w_stack, b) in enumerate(self.us_params):
            # TODO(synk): reference indexes DS_blocks[L - idx] (out of range)
            # and concatenates along batch; using L-1-idx and channel concat.
            skip = ds_blocks[self.L - 1 - idx]
            slabs = [(x, self.fu, True),       # fused x2 nearest upsample
                     (skip, self.fu, False)]   # fused skip concat
            if idx == self.L - 1:
                # TODO(synk): reference `np.concatenate(x)` would collapse
                # batch+channels; treated as a no-op.  Final 1x1 + tanh fused.
                x = fused_conv(slabs, w_stack, b, act="leaky_relu",
                               second=self.last, tile_w=self.tile_w,
                               compute_dtype=cd, out_dtype=jnp.float32)
            else:
                x = fused_conv(slabs, w_stack, b, act="leaky_relu",
                               tile_w=self.tile_w, compute_dtype=cd,
                               out_dtype=cd)
        return x

    def forward(self, x_ncw):
        return self._forward_jit(x_ncw)


if __name__ == "__main__":
    # Small shapes consistent with the module: mono input (1 channel), L=2.
    # tile_w=256 keeps the demo tiny while exercising the multi-tile + halo +
    # ragged-edge paths (production default: 2048, larger on v5e/v6e).
    L, K, Fc, fd, fu = 2, 2, 4, 3, 3
    N, W = 2, 2048

    key = jax.random.PRNGKey(0)
    kparam, kx = jax.random.split(key)

    model = WaveUNetPallas(L, K, Fc, fd, fu, kparam, tile_w=256)
    x = jax.random.normal(kx, (N, 1, W), jnp.float32)  # NCW like PyTorch

    out = model.forward(x)
    jax.block_until_ready(out)
    assert out.ndim == 3 and out.shape[0] == N and out.shape[1] == K
    assert bool(jnp.all(jnp.isfinite(out)))
    print("KERNEL_OK")
</pallas_src>

<mosaic_0001>
module attributes {stable_mosaic.version = 11 : i64} {
  func.func @kernel(%arg0: i32, %arg1: i32, %arg2: memref<1x1x256xbf16, #tpu.memory_space<vmem>>, %arg3: memref<1x1x256xbf16, #tpu.memory_space<vmem>>, %arg4: memref<1x1x1x1xbf16, #tpu.memory_space<vmem>>, %arg5: memref<4x3xbf16, #tpu.memory_space<vmem>>, %arg6: memref<4x1xf32, #tpu.memory_space<vmem>>, %arg7: memref<1x4x256xbf16, #tpu.memory_space<vmem>>) attributes {dimension_semantics = [#tpu.dimension_semantics<parallel>, #tpu.dimension_semantics<parallel>], iteration_bounds = array<i64: 2, 4>, scalar_prefetch = 0 : i64, scratch_operands = 0 : i64, tpu.core_type = #tpu.core_type<tc>, window_params = [{transform_indices = @transform_0, window_bounds = array<i64: 1, 1, 256>}, {transform_indices = @transform_1, window_bounds = array<i64: 1, 1, 256>}, {transform_indices = @transform_2, window_bounds = array<i64: 1, 1, 1, 1>}, {pipeline_mode = #tpu.pipeline_mode<synchronous>, transform_indices = @transform_3, window_bounds = array<i64: 4, 3>}, {pipeline_mode = #tpu.pipeline_mode<synchronous>, transform_indices = @transform_4, window_bounds = array<i64: 4, 1>}, {transform_indices = @transform_5, window_bounds = array<i64: 1, 4, 256>}]} {
    %c0 = arith.constant 0 : index
    %c0_0 = arith.constant 0 : index
    %c0_1 = arith.constant 0 : index
    %0 = vector.load %arg2[%c0, %c0_0, %c0_1] : memref<1x1x256xbf16, #tpu.memory_space<vmem>>, vector<1x1x256xbf16>
    %1 = vector.shape_cast %0 : vector<1x1x256xbf16> to vector<1x256xbf16>
    %c0_2 = arith.constant 0 : index
    %c0_3 = arith.constant 0 : index
    %c0_4 = arith.constant 0 : index
    %c0_5 = arith.constant 0 : index
    %2 = vector.load %arg4[%c0_2, %c0_3, %c0_4, %c0_5] : memref<1x1x1x1xbf16, #tpu.memory_space<vmem>>, vector<1x1x1x1xbf16>
    %3 = vector.shape_cast %2 : vector<1x1x1x1xbf16> to vector<1x1xbf16>
    %4 = tpu.concatenate %1, %3 in 1 : vector<1x256xbf16>, vector<1x1xbf16> -> vector<1x257xbf16>
    %5 = vector.extract_strided_slice %4 {offsets = [0, 0], sizes = [1, 256], strides = [1, 1]} : vector<1x257xbf16> to vector<1x256xbf16>
    %6 = vector.extract_strided_slice %4 {offsets = [0, 1], sizes = [1, 256], strides = [1, 1]} : vector<1x257xbf16> to vector<1x256xbf16>
    %c0_6 = arith.constant 0 : index
    %c0_7 = arith.constant 0 : index
    %c0_8 = arith.constant 0 : index
    %7 = vector.load %arg3[%c0_6, %c0_7, %c0_8] : memref<1x1x256xbf16, #tpu.memory_space<vmem>>, vector<1x1x256xbf16>
    %8 = vector.shape_cast %7 : vector<1x1x256xbf16> to vector<1x256xbf16>
    %9 = tpu.concatenate %5, %6, %8 in 0 : vector<1x256xbf16>, vector<1x256xbf16>, vector<1x256xbf16> -> vector<3x256xbf16>
    %c0_9 = arith.constant 0 : index
    %c0_10 = arith.constant 0 : index
    %10 = vector.load %arg5[%c0_9, %c0_10] : memref<4x3xbf16, #tpu.memory_space<vmem>>, vector<4x3xbf16>
    %cst = arith.constant dense<0.000000e+00> : vector<4x256xf32>
    %11 = tpu.matmul %10, %9, %cst {dimension_numbers = #tpu.dot_dimension_numbers<[1], [0], [0], [1], [0, 0, 1, 1], [], []>} : vector<4x3xbf16>, vector<3x256xbf16>, vector<4x256xf32> -> vector<4x256xf32>
    %c0_11 = arith.constant 0 : index
    %c0_12 = arith.constant 0 : index
    %12 = vector.load %arg6[%c0_11, %c0_12] : memref<4x1xf32, #tpu.memory_space<vmem>>, vector<4x1xf32>
    %13 = vector.broadcast %12 : vector<4x1xf32> to vector<4x256xf32>
    %14 = arith.addf %11, %13 : vector<4x256xf32>
    %cst_13 = arith.constant 0.000000e+00 : f32
    %15 = vector.broadcast %cst_13 : f32 to vector<4x256xf32>
    %16 = arith.cmpf oge, %14, %15 : vector<4x256xf32>
    %cst_14 = arith.constant 0.00999999977 : f32
    %17 = vector.broadcast %cst_14 : f32 to vector<4x256xf32>
    %18 = arith.mulf %17, %14 : vector<4x256xf32>
    %19 = arith.select %16, %14, %18 : vector<4x256xi1>, vector<4x256xf32>
    %20 = arith.truncf %19 : vector<4x256xf32> to vector<4x256xbf16>
    %c0_15 = arith.constant 0 : index
    %c0_16 = arith.constant 0 : index
    %c0_17 = arith.constant 0 : index
    %21 = vector.load %arg7[%c0_15, %c0_16, %c0_17] : memref<1x4x256xbf16, #tpu.memory_space<vmem>>, vector<1x4x256xbf16>
    %22 = vector.shape_cast %21 : vector<1x4x256xbf16> to vector<4x256xbf16>
    %23 = vector.shape_cast %20 : vector<4x256xbf16> to vector<1x4x256xbf16>
    tpu.vector_store %arg7[%c0_15, %c0_16, %c0_17], %23 {strides = array<i32>} : memref<1x4x256xbf16, #tpu.memory_space<vmem>>, vector<1x4x256xbf16>,
    return
  }
  func.func @transform_0(%arg0: i32, %arg1: i32) -> (i32, i32, i32) {
    %c0_i32 = arith.constant 0 : i32
    %c0_i32_0 = arith.constant 0 : i32
    return %arg0, %c0_i32, %arg1 : i32, i32, i32
  }
  func.func @transform_1(%arg0: i32, %arg1: i32) -> (i32, i32, i32) {
    %c0_i32 = arith.constant 0 : i32
    %c0_i32_0 = arith.constant 0 : i32
    return %arg0, %c0_i32, %arg1 : i32, i32, i32
  }
  func.func @transform_2(%arg0: i32, %arg1: i32) -> (i32, i32, i32, i32) {
    %c0_i32 = arith.constant 0 : i32
    %c0_i32_0 = arith.constant 0 : i32
    %c0_i32_1 = arith.constant 0 : i32
    return %arg0, %arg1, %c0_i32, %c0_i32_0 : i32, i32, i32, i32
  }
  func.func @transform_3(%arg0: i32, %arg1: i32) -> (i32, i32) {
    %c0_i32 = arith.constant 0 : i32
    %c0_i32_0 = arith.constant 0 : i32
    %c0_i32_1 = arith.constant 0 : i32
    return %c0_i32, %c0_i32_0 : i32, i32
  }
  func.func @transform_4(%arg0: i32, %arg1: i32) -> (i32, i32) {
    %c0_i32 = arith.constant 0 : i32
    %c0_i32_0 = arith.constant 0 : i32
    %c0_i32_1 = arith.constant 0 : i32
    return %c0_i32, %c0_i32_0 : i32, i32
  }
  func.func @transform_5(%arg0: i32, %arg1: i32) -> (i32, i32, i32) {
    %c0_i32 = arith.constant 0 : i32
    %c0_i32_0 = arith.constant 0 : i32
    return %arg0, %c0_i32, %arg1 : i32, i32, i32
  }
}

module attributes {stable_mosaic.version = 11 : i64} {
  func.func @kernel(%arg0: i32, %arg1: i32, %arg2: memref<1x4x256xbf16, #tpu.memory_space<vmem>>, %arg3: memref<1x4x256xbf16, #tpu.memory_space<vmem>>, %arg4: memref<1x1x4x1xbf16, #tpu.memory_space<vmem>>, %arg5: memref<8x12xbf16, #tpu.memory_space<vmem>>, %arg6: memref<8x1xf32, #tpu.memory_space<vmem>>, %arg7: memref<1x8x256xbf16, #tpu.memory_space<vmem>>) attributes {dimension_semantics = [#tpu.dimension_semantics<parallel>, #tpu.dimension_semantics<parallel>], iteration_bounds = array<i64: 2, 2>, scalar_prefetch = 0 : i64, scratch_operands = 0 : i64, tpu.core_type = #tpu.core_type<tc>, window_params = [{transform_indices = @transform_0, window_bounds = array<i64: 1, 4, 256>}, {transform_indices = @transform_1, window_bounds = array<i64: 1, 4, 256>}, {transform_indices = @transform_2, window_bounds = array<i64: 1, 1, 4, 1>}, {pipeline_mode = #tpu.pipeline_mode<synchronous>, transform_indices = @transform_3, window_bounds = array<i64: 8, 12>}, {pipeline_mode = #tpu.pipeline_mode<synchronous>, transform_indices = @transform_4, window_bounds = array<i64: 8, 1>}, {transform_indices = @transform_5, window_bounds = array<i64: 1, 8, 256>}]} {
    %c0 = arith.constant 0 : index
    %c0_0 = arith.constant 0 : index
    %c0_1 = arith.constant 0 : index
    %0 = vector.load %arg2[%c0, %c0_0, %c0_1] : memref<1x4x256xbf16, #tpu.memory_space<vmem>>, vector<1x4x256xbf16>
    %1 = vector.shape_cast %0 : vector<1x4x256xbf16> to vector<4x256xbf16>
    %c0_2 = arith.constant 0 : index
    %c0_3 = arith.constant 0 : index
    %c0_4 = arith.constant 0 : index
    %c0_5 = arith.constant 0 : index
    %2 = vector.load %arg4[%c0_2, %c0_3, %c0_4, %c0_5] : memref<1x1x4x1xbf16, #tpu.memory_space<vmem>>, vector<1x1x4x1xbf16>
    %3 = vector.shape_cast %2 : vector<1x1x4x1xbf16> to vector<4x1xbf16>
    %4 = tpu.concatenate %1, %3 in 1 : vector<4x256xbf16>, vector<4x1xbf16> -> vector<4x257xbf16>
    %5 = vector.extract_strided_slice %4 {offsets = [0, 0], sizes = [4, 256], strides = [1, 1]} : vector<4x257xbf16> to vector<4x256xbf16>
    %6 = vector.extract_strided_slice %4 {offsets = [0, 1], sizes = [4, 256], strides = [1, 1]} : vector<4x257xbf16> to vector<4x256xbf16>
    %c0_6 = arith.constant 0 : index
    %c0_7 = arith.constant 0 : index
    %c0_8 = arith.constant 0 : index
    %7 = vector.load %arg3[%c0_6, %c0_7, %c0_8] : memref<1x4x256xbf16, #tpu.memory_space<vmem>>, vector<1x4x256xbf16>
    %8 = vector.shape_cast %7 : vector<1x4x256xbf16> to vector<4x256xbf16>
    %9 = tpu.concatenate %5, %6, %8 in 0 : vector<4x256xbf16>, vector<4x256xbf16>, vector<4x256xbf16> -> vector<12x256xbf16>
    %c0_9 = arith.constant 0 : index
    %c0_10 = arith.constant 0 : index
    %10 = vector.load %arg5[%c0_9, %c0_10] : memref<8x12xbf16, #tpu.memory_space<vmem>>, vector<8x12xbf16>
    %cst = arith.constant dense<0.000000e+00> : vector<8x256xf32>
    %11 = tpu.matmul %10, %9, %cst {dimension_numbers = #tpu.dot_dimension_numbers<[1], [0], [0], [1], [0, 0, 1, 1], [], []>} : vector<8x12xbf16>, vector<12x256xbf16>, vector<8x256xf32> -> vector<8x256xf32>
    %c0_11 = arith.constant 0 : index
    %c0_12 = arith.constant 0 : index
    %12 = vector.load %arg6[%c0_11, %c0_12] : memref<8x1xf32, #tpu.memory_space<vmem>>, vector<8x1xf32>
    %13 = vector.broadcast %12 : vector<8x1xf32> to vector<8x256xf32>
    %14 = arith.addf %11, %13 : vector<8x256xf32>
    %cst_13 = arith.constant 0.000000e+00 : f32
    %15 = vector.broadcast %cst_13 : f32 to vector<8x256xf32>
    %16 = arith.cmpf oge, %14, %15 : vector<8x256xf32>
    %cst_14 = arith.constant 0.00999999977 : f32
    %17 = vector.broadcast %cst_14 : f32 to vector<8x256xf32>
    %18 = arith.mulf %17, %14 : vector<8x256xf32>
    %19 = arith.select %16, %14, %18 : vector<8x256xi1>, vector<8x256xf32>
    %20 = arith.truncf %19 : vector<8x256xf32> to vector<8x256xbf16>
    %c0_15 = arith.constant 0 : index
    %c0_16 = arith.constant 0 : index
    %c0_17 = arith.constant 0 : index
    %21 = vector.load %arg7[%c0_15, %c0_16, %c0_17] : memref<1x8x256xbf16, #tpu.memory_space<vmem>>, vector<1x8x256xbf16>
    %22 = vector.shape_cast %21 : vector<1x8x256xbf16> to vector<8x256xbf16>
    %23 = vector.shape_cast %20 : vector<8x256xbf16> to vector<1x8x256xbf16>
    tpu.vector_store %arg7[%c0_15, %c0_16, %c0_17], %23 {strides = array<i32>} : memref<1x8x256xbf16, #tpu.memory_space<vmem>>, vector<1x8x256xbf16>,
    return
  }
  func.func @transform_0(%arg0: i32, %arg1: i32) -> (i32, i32, i32) {
    %c0_i32 = arith.constant 0 : i32
    %c0_i32_0 = arith.constant 0 : i32
    return %arg0, %c0_i32, %arg1 : i32, i32, i32
  }
  func.func @transform_1(%arg0: i32, %arg1: i32) -> (i32, i32, i32) {
    %c0_i32 = arith.constant 0 : i32
    %c0_i32_0 = arith.constant 0 : i32
    return %arg0, %c0_i32, %arg1 : i32, i32, i32
  }
  func.func @transform_2(%arg0: i32, %arg1: i32) -> (i32, i32, i32, i32) {
    %c0_i32 = arith.constant 0 : i32
    %c0_i32_0 = arith.constant 0 : i32
    %c0_i32_1 = arith.constant 0 : i32
    return %arg0, %arg1, %c0_i32, %c0_i32_0 : i32, i32, i32, i32
  }
  func.func @transform_3(%arg0: i32, %arg1: i32) -> (i32, i32) {
    %c0_i32 = arith.constant 0 : i32
    %c0_i32_0 = arith.constant 0 : i32
    %c0_i32_1 = arith.constant 0 : i32
    return %c0_i32, %c0_i32_0 : i32, i32
  }
  func.func @transform_4(%arg0: i32, %arg1: i32) -> (i32, i32) {
    %c0_i32 = arith.constant 0 : i32
    %c0_i32_0 = arith.constant 0 : i32
    %c0_i32_1 = arith.constant 0 : i32
    return %c0_i32, %c0_i32_0 : i32, i32
  }
  func.func @transform_5(%arg0: i32, %arg1: i32) -> (i32, i32, i32) {
    %c0_i32 = arith.constant 0 : i32
    %c0_i32_0 = arith.constant 0 : i32
    return %arg0, %c0_i32, %arg1 : i32, i32, i32
  }
}

module attributes {stable_mosaic.version = 11 : i64} {
  func.func @kernel(%arg0: i32, %arg1: i32, %arg2: memref<1x8x256xbf16, #tpu.memory_space<vmem>>, %arg3: memref<1x1x8x2xbf16, #tpu.memory_space<vmem>>, %arg4: memref<12x24xbf16, #tpu.memory_space<vmem>>, %arg5: memref<12x1xf32, #tpu.memory_space<vmem>>, %arg6: memref<1x12x256xbf16, #tpu.memory_space<vmem>>) attributes {dimension_semantics = [#tpu.dimension_semantics<parallel>, #tpu.dimension_semantics<parallel>], iteration_bounds = array<i64: 2, 2>, scalar_prefetch = 0 : i64, scratch_operands = 0 : i64, tpu.core_type = #tpu.core_type<tc>, window_params = [{transform_indices = @transform_0, window_bounds = array<i64: 1, 8, 256>}, {transform_indices = @transform_1, window_bounds = array<i64: 1, 1, 8, 2>}, {pipeline_mode = #tpu.pipeline_mode<synchronous>, transform_indices = @transform_2, window_bounds = array<i64: 12, 24>}, {pipeline_mode = #tpu.pipeline_mode<synchronous>, transform_indices = @transform_3, window_bounds = array<i64: 12, 1>}, {transform_indices = @transform_4, window_bounds = array<i64: 1, 12, 256>}]} {
    %c0 = arith.constant 0 : index
    %c0_0 = arith.constant 0 : index
    %c0_1 = arith.constant 0 : index
    %0 = vector.load %arg2[%c0, %c0_0, %c0_1] : memref<1x8x256xbf16, #tpu.memory_space<vmem>>, vector<1x8x256xbf16>
    %1 = vector.shape_cast %0 : vector<1x8x256xbf16> to vector<8x256xbf16>
    %c0_2 = arith.constant 0 : index
    %c0_3 = arith.constant 0 : index
    %c0_4 = arith.constant 0 : index
    %c0_5 = arith.constant 0 : index
    %2 = vector.load %arg3[%c0_2, %c0_3, %c0_4, %c0_5] : memref<1x1x8x2xbf16, #tpu.memory_space<vmem>>, vector<1x1x8x2xbf16>
    %3 = vector.shape_cast %2 : vector<1x1x8x2xbf16> to vector<8x2xbf16>
    %4 = tpu.concatenate %1, %3 in 1 : vector<8x256xbf16>, vector<8x2xbf16> -> vector<8x258xbf16>
    %5 = vector.extract_strided_slice %4 {offsets = [0, 0], sizes = [8, 256], strides = [1, 1]} : vector<8x258xbf16> to vector<8x256xbf16>
    %6 = vector.extract_strided_slice %4 {offsets = [0, 1], sizes = [8, 256], strides = [1, 1]} : vector<8x258xbf16> to vector<8x256xbf16>
    %7 = vector.extract_strided_slice %4 {offsets = [0, 2], sizes = [8, 256], strides = [1, 1]} : vector<8x258xbf16> to vector<8x256xbf16>
    %8 = tpu.concatenate %5, %6, %7 in 0 : vector<8x256xbf16>, vector<8x256xbf16>, vector<8x256xbf16> -> vector<24x256xbf16>
    %c0_6 = arith.constant 0 : index
    %c0_7 = arith.constant 0 : index
    %9 = vector.load %arg4[%c0_6, %c0_7] : memref<12x24xbf16, #tpu.memory_space<vmem>>, vector<12x24xbf16>
    %cst = arith.constant dense<0.000000e+00> : vector<12x256xf32>
    %10 = tpu.matmul %9, %8, %cst {dimension_numbers = #tpu.dot_dimension_numbers<[1], [0], [0], [1], [0, 0, 1, 1], [], []>} : vector<12x24xbf16>, vector<24x256xbf16>, vector<12x256xf32> -> vector<12x256xf32>
    %c0_8 = arith.constant 0 : index
    %c0_9 = arith.constant 0 : index
    %11 = vector.load %arg5[%c0_8, %c0_9] : memref<12x1xf32, #tpu.memory_space<vmem>>, vector<12x1xf32>
    %12 = vector.broadcast %11 : vector<12x1xf32> to vector<12x256xf32>
    %13 = arith.addf %10, %12 : vector<12x256xf32>
    %14 = arith.truncf %13 : vector<12x256xf32> to vector<12x256xbf16>
    %c0_10 = arith.constant 0 : index
    %c0_11 = arith.constant 0 : index
    %c0_12 = arith.constant 0 : index
    %15 = vector.load %arg6[%c0_10, %c0_11, %c0_12] : memref<1x12x256xbf16, #tpu.memory_space<vmem>>, vector<1x12x256xbf16>
    %16 = vector.shape_cast %15 : vector<1x12x256xbf16> to vector<12x256xbf16>
    %17 = vector.shape_cast %14 : vector<12x256xbf16> to vector<1x12x256xbf16>
    tpu.vector_store %arg6[%c0_10, %c0_11, %c0_12], %17 {strides = array<i32>} : memref<1x12x256xbf16, #tpu.memory_space<vmem>>, vector<1x12x256xbf16>,
    return
  }
  func.func @transform_0(%arg0: i32, %arg1: i32) -> (i32, i32, i32) {
    %c0_i32 = arith.constant 0 : i32
    %c0_i32_0 = arith.constant 0 : i32
    return %arg0, %c0_i32, %arg1 : i32, i32, i32
  }
  func.func @transform_1(%arg0: i32, %arg1: i32) -> (i32, i32, i32, i32) {
    %c0_i32 = arith.constant 0 : i32
    %c0_i32_0 = arith.constant 0 : i32
    %c0_i32_1 = arith.constant 0 : i32
    return %arg0, %arg1, %c0_i32, %c0_i32_0 : i32, i32, i32, i32
  }
  func.func @transform_2(%arg0: i32, %arg1: i32) -> (i32, i32) {
    %c0_i32 = arith.constant 0 : i32
    %c0_i32_0 = arith.constant 0 : i32
    %c0_i32_1 = arith.constant 0 : i32
    return %c0_i32, %c0_i32_0 : i32, i32
  }
  func.func @transform_3(%arg0: i32, %arg1: i32) -> (i32, i32) {
    %c0_i32 = arith.constant 0 : i32
    %c0_i32_0 = arith.constant 0 : i32
    %c0_i32_1 = arith.constant 0 : i32
    return %c0_i32, %c0_i32_0 : i32, i32
  }
  func.func @transform_4(%arg0: i32, %arg1: i32) -> (i32, i32, i32) {
    %c0_i32 = arith.constant 0 : i32
    %c0_i32_0 = arith.constant 0 : i32
    return %arg0, %c0_i32, %arg1 : i32, i32, i32
  }
}

module attributes {stable_mosaic.version = 11 : i64} {
  func.func @kernel(%arg0: i32, %arg1: i32, %arg2: memref<1x12x128xbf16, #tpu.memory_space<vmem>>, %arg3: memref<1x8x256xbf16, #tpu.memory_space<vmem>>, %arg4: memref<1x1x12x1xbf16, #tpu.memory_space<vmem>>, %arg5: memref<1x1x8x2xbf16, #tpu.memory_space<vmem>>, %arg6: memref<129x258xbf16, #tpu.memory_space<vmem>>, %arg7: memref<8x60xbf16, #tpu.memory_space<vmem>>, %arg8: memref<8x1xf32, #tpu.memory_space<vmem>>, %arg9: memref<1x8x256xbf16, #tpu.memory_space<vmem>>) attributes {dimension_semantics = [#tpu.dimension_semantics<parallel>, #tpu.dimension_semantics<parallel>], iteration_bounds = array<i64: 2, 2>, scalar_prefetch = 0 : i64, scratch_operands = 0 : i64, tpu.core_type = #tpu.core_type<tc>, window_params = [{transform_indices = @transform_0, window_bounds = array<i64: 1, 12, 128>}, {transform_indices = @transform_1, window_bounds = array<i64: 1, 8, 256>}, {transform_indices = @transform_2, window_bounds = array<i64: 1, 1, 12, 1>}, {transform_indices = @transform_3, window_bounds = array<i64: 1, 1, 8, 2>}, {pipeline_mode = #tpu.pipeline_mode<synchronous>, transform_indices = @transform_4, window_bounds = array<i64: 129, 258>}, {pipeline_mode = #tpu.pipeline_mode<synchronous>, transform_indices = @transform_5, window_bounds = array<i64: 8, 60>}, {pipeline_mode = #tpu.pipeline_mode<synchronous>, transform_indices = @transform_6, window_bounds = array<i64: 8, 1>}, {transform_indices = @transform_7, window_bounds = array<i64: 1, 8, 256>}]} {
    %c0 = arith.constant 0 : index
    %c0_0 = arith.constant 0 : index
    %c0_1 = arith.constant 0 : index
    %0 = vector.load %arg2[%c0, %c0_0, %c0_1] : memref<1x12x128xbf16, #tpu.memory_space<vmem>>, vector<1x12x128xbf16>
    %1 = vector.shape_cast %0 : vector<1x12x128xbf16> to vector<12x128xbf16>
    %c0_2 = arith.constant 0 : index
    %c0_3 = arith.constant 0 : index
    %c0_4 = arith.constant 0 : index
    %c0_5 = arith.constant 0 : index
    %2 = vector.load %arg4[%c0_2, %c0_3, %c0_4, %c0_5] : memref<1x1x12x1xbf16, #tpu.memory_space<vmem>>, vector<1x1x12x1xbf16>
    %3 = vector.shape_cast %2 : vector<1x1x12x1xbf16> to vector<12x1xbf16>
    %4 = tpu.concatenate %1, %3 in 1 : vector<12x128xbf16>, vector<12x1xbf16> -> vector<12x129xbf16>
    %c128_i32 = arith.constant 128 : i32
    %5 = arith.muli %arg1, %c128_i32 : i32
    %c509_i32 = arith.constant 509 : i32
    %6 = arith.subi %c509_i32, %5 : i32
    %7 = tpu.iota {dimensions = array<i32: 1>} : vector<12x129xi32>
    %8 = vector.broadcast %6 : i32 to vector<12x129xi32>
    %9 = arith.cmpi slt, %7, %8 : vector<12x129xi32>
    %cst = arith.constant 0.000000e+00 : bf16
    %10 = vector.broadcast %cst : bf16 to vector<12x129xbf16>
    %11 = arith.select %9, %4, %10 : vector<12x129xi1>, vector<12x129xbf16>
    %c0_6 = arith.constant 0 : index
    %c0_7 = arith.constant 0 : index
    %12 = vector.load %arg6[%c0_6, %c0_7] : memref<129x258xbf16, #tpu.memory_space<vmem>>, vector<129x258xbf16>
    %cst_8 = arith.constant dense<0.000000e+00> : vector<12x258xf32>
    %13 = tpu.matmul %11, %12, %cst_8 {dimension_numbers = #tpu.dot_dimension_numbers<[1], [0], [0], [1], [0, 0, 1, 1], [], []>} : vector<12x129xbf16>, vector<129x258xbf16>, vector<12x258xf32> -> vector<12x258xf32>
    %14 = arith.truncf %13 : vector<12x258xf32> to vector<12x258xbf16>
    %15 = vector.extract_strided_slice %14 {offsets = [0, 0], sizes = [12, 256], strides = [1, 1]} : vector<12x258xbf16> to vector<12x256xbf16>
    %16 = vector.extract_strided_slice %14 {offsets = [0, 1], sizes = [12, 256], strides = [1, 1]} : vector<12x258xbf16> to vector<12x256xbf16>
    %17 = vector.extract_strided_slice %14 {offsets = [0, 2], sizes = [12, 256], strides = [1, 1]} : vector<12x258xbf16> to vector<12x256xbf16>
    %c0_9 = arith.constant 0 : index
    %c0_10 = arith.constant 0 : index
    %c0_11 = arith.constant 0 : index
    %18 = vector.load %arg3[%c0_9, %c0_10, %c0_11] : memref<1x8x256xbf16, #tpu.memory_space<vmem>>, vector<1x8x256xbf16>
    %19 = vector.shape_cast %18 : vector<1x8x256xbf16> to vector<8x256xbf16>
    %c0_12 = arith.constant 0 : index
    %c0_13 = arith.constant 0 : index
    %c0_14 = arith.constant 0 : index
    %c0_15 = arith.constant 0 : index
    %20 = vector.load %arg5[%c0_12, %c0_13, %c0_14, %c0_15] : memref<1x1x8x2xbf16, #tpu.memory_space<vmem>>, vector<1x1x8x2xbf16>
    %21 = vector.shape_cast %20 : vector<1x1x8x2xbf16> to vector<8x2xbf16>
    %22 = tpu.concatenate %19, %21 in 1 : vector<8x256xbf16>, vector<8x2xbf16> -> vector<8x258xbf16>
    %23 = vector.extract_strided_slice %22 {offsets = [0, 0], sizes = [8, 256], strides = [1, 1]} : vector<8x258xbf16> to vector<8x256xbf16>
    %24 = vector.extract_strided_slice %22 {offsets = [0, 1], sizes = [8, 256], strides = [1, 1]} : vector<8x258xbf16> to vector<8x256xbf16>
    %25 = vector.extract_strided_slice %22 {offsets = [0, 2], sizes = [8, 256], strides = [1, 1]} : vector<8x258xbf16> to vector<8x256xbf16>
    %26 = tpu.concatenate %15, %16, %17, %23, %24, %25 in 0 : vector<12x256xbf16>, vector<12x256xbf16>, vector<12x256xbf16>, vector<8x256xbf16>, vector<8x256xbf16>, vector<8x256xbf16> -> vector<60x256xbf16>
    %c0_16 = arith.constant 0 : index
    %c0_17 = arith.constant 0 : index
    %27 = vector.load %arg7[%c0_16, %c0_17] : memref<8x60xbf16, #tpu.memory_space<vmem>>, vector<8x60xbf16>
    %cst_18 = arith.constant dense<0.000000e+00> : vector<8x256xf32>
    %28 = tpu.matmul %27, %26, %cst_18 {dimension_numbers = #tpu.dot_dimension_numbers<[1], [0], [0], [1], [0, 0, 1, 1], [], []>} : vector<8x60xbf16>, vector<60x256xbf16>, vector<8x256xf32> -> vector<8x256xf32>
    %c0_19 = arith.constant 0 : index
    %c0_20 = arith.constant 0 : index
    %29 = vector.load %arg8[%c0_19, %c0_20] : memref<8x1xf32, #tpu.memory_space<vmem>>, vector<8x1xf32>
    %30 = vector.broadcast %29 : vector<8x1xf32> to vector<8x256xf32>
    %31 = arith.addf %28, %30 : vector<8x256xf32>
    %cst_21 = arith.constant 0.000000e+00 : f32
    %32 = vector.broadcast %cst_21 : f32 to vector<8x256xf32>
    %33 = arith.cmpf oge, %31, %32 : vector<8x256xf32>
    %cst_22 = arith.constant 0.00999999977 : f32
    %34 = vector.broadcast %cst_22 : f32 to vector<8x256xf32>
    %35 = arith.mulf %34, %31 : vector<8x256xf32>
    %36 = arith.select %33, %31, %35 : vector<8x256xi1>, vector<8x256xf32>
    %37 = arith.truncf %36 : vector<8x256xf32> to vector<8x256xbf16>
    %c0_23 = arith.constant 0 : index
    %c0_24 = arith.constant 0 : index
    %c0_25 = arith.constant 0 : index
    %38 = vector.load %arg9[%c0_23, %c0_24, %c0_25] : memref<1x8x256xbf16, #tpu.memory_space<vmem>>, vector<1x8x256xbf16>
    %39 = vector.shape_cast %38 : vector<1x8x256xbf16> to vector<8x256xbf16>
    %40 = vector.shape_cast %37 : vector<8x256xbf16> to vector<1x8x256xbf16>
    tpu.vector_store %arg9[%c0_23, %c0_24, %c0_25], %40 {strides = array<i32>} : memref<1x8x256xbf16, #tpu.memory_space<vmem>>, vector<1x8x256xbf16>,
    return
  }
  func.func @transform_0(%arg0: i32, %arg1: i32) -> (i32, i32, i32) {
    %c0_i32 = arith.constant 0 : i32
    %c0_i32_0 = arith.constant 0 : i32
    return %arg0, %c0_i32, %arg1 : i32, i32, i32
  }
  func.func @transform_1(%arg0: i32, %arg1: i32) -> (i32, i32, i32) {
    %c0_i32 = arith.constant 0 : i32
    %c0_i32_0 = arith.constant 0 : i32
    return %arg0, %c0_i32, %arg1 : i32, i32, i32
  }
  func.func @transform_2(%arg0: i32, %arg1: i32) -> (i32, i32, i32, i32) {
    %c0_i32 = arith.constant 0 : i32
    %c0_i32_0 = arith.constant 0 : i32
    %c0_i32_1 = arith.constant 0 : i32
    return %arg0, %arg1, %c0_i32, %c0_i32_0 : i32, i32, i32, i32
  }
  func.func @transform_3(%arg0: i32, %arg1: i32) -> (i32, i32, i32, i32) {
    %c0_i32 = arith.constant 0 : i32
    %c0_i32_0 = arith.constant 0 : i32
    %c0_i32_1 = arith.constant 0 : i32
    return %arg0, %arg1, %c0_i32, %c0_i32_0 : i32, i32, i32, i32
  }
  func.func @transform_4(%arg0: i32, %arg1: i32) -> (i32, i32) {
    %c0_i32 = arith.constant 0 : i32
    %c0_i32_0 = arith.constant 0 : i32
    %c0_i32_1 = arith.constant 0 : i32
    return %c0_i32, %c0_i32_0 : i32, i32
  }
  func.func @transform_5(%arg0: i32, %arg1: i32) -> (i32, i32) {
    %c0_i32 = arith.constant 0 : i32
    %c0_i32_0 = arith.constant 0 : i32
    %c0_i32_1 = arith.constant 0 : i32
    return %c0_i32, %c0_i32_0 : i32, i32
  }
  func.func @transform_6(%arg0: i32, %arg1: i32) -> (i32, i32) {
    %c0_i32 = arith.constant 0 : i32
    %c0_i32_0 = arith.constant 0 : i32
    %c0_i32_1 = arith.constant 0 : i32
    return %c0_i32, %c0_i32_0 : i32, i32
  }
  func.func @transform_7(%arg0: i32, %arg1: i32) -> (i32, i32, i32) {
    %c0_i32 = arith.constant 0 : i32
    %c0_i32_0 = arith.constant 0 : i32
    return %arg0, %c0_i32, %arg1 : i32, i32, i32
  }
}

module attributes {stable_mosaic.version = 11 : i64} {
  func.func @kernel(%arg0: i32, %arg1: i32, %arg2: memref<1x8x128xbf16, #tpu.memory_space<vmem>>, %arg3: memref<1x4x256xbf16, #tpu.memory_space<vmem>>, %arg4: memref<1x1x8x1xbf16, #tpu.memory_space<vmem>>, %arg5: memref<1x1x4x2xbf16, #tpu.memory_space<vmem>>, %arg6: memref<129x258xbf16, #tpu.memory_space<vmem>>, %arg7: memref<4x36xbf16, #tpu.memory_space<vmem>>, %arg8: memref<4x1xf32, #tpu.memory_space<vmem>>, %arg9: memref<2x4xbf16, #tpu.memory_space<vmem>>, %arg10: memref<2x1xf32, #tpu.memory_space<vmem>>, %arg11: memref<1x2x256xf32, #tpu.memory_space<vmem>>) attributes {dimension_semantics = [#tpu.dimension_semantics<parallel>, #tpu.dimension_semantics<parallel>], iteration_bounds = array<i64: 2, 4>, scalar_prefetch = 0 : i64, scratch_operands = 0 : i64, tpu.core_type = #tpu.core_type<tc>, window_params = [{transform_indices = @transform_0, window_bounds = array<i64: 1, 8, 128>}, {transform_indices = @transform_1, window_bounds = array<i64: 1, 4, 256>}, {transform_indices = @transform_2, window_bounds = array<i64: 1, 1, 8, 1>}, {transform_indices = @transform_3, window_bounds = array<i64: 1, 1, 4, 2>}, {pipeline_mode = #tpu.pipeline_mode<synchronous>, transform_indices = @transform_4, window_bounds = array<i64: 129, 258>}, {pipeline_mode = #tpu.pipeline_mode<synchronous>, transform_indices = @transform_5, window_bounds = array<i64: 4, 36>}, {pipeline_mode = #tpu.pipeline_mode<synchronous>, transform_indices = @transform_6, window_bounds = array<i64: 4, 1>}, {pipeline_mode = #tpu.pipeline_mode<synchronous>, transform_indices = @transform_7, window_bounds = array<i64: 2, 4>}, {pipeline_mode = #tpu.pipeline_mode<synchronous>, transform_indices = @transform_8, window_bounds = array<i64: 2, 1>}, {transform_indices = @transform_9, window_bounds = array<i64: 1, 2, 256>}]} {
    %c0 = arith.constant 0 : index
    %c0_0 = arith.constant 0 : index
    %c0_1 = arith.constant 0 : index
    %0 = vector.load %arg2[%c0, %c0_0, %c0_1] : memref<1x8x128xbf16, #tpu.memory_space<vmem>>, vector<1x8x128xbf16>
    %1 = vector.shape_cast %0 : vector<1x8x128xbf16> to vector<8x128xbf16>
    %c0_2 = arith.constant 0 : index
    %c0_3 = arith.constant 0 : index
    %c0_4 = arith.constant 0 : index
    %c0_5 = arith.constant 0 : index
    %2 = vector.load %arg4[%c0_2, %c0_3, %c0_4, %c0_5] : memref<1x1x8x1xbf16, #tpu.memory_space<vmem>>, vector<1x1x8x1xbf16>
    %3 = vector.shape_cast %2 : vector<1x1x8x1xbf16> to vector<8x1xbf16>
    %4 = tpu.concatenate %1, %3 in 1 : vector<8x128xbf16>, vector<8x1xbf16> -> vector<8x129xbf16>
    %c128_i32 = arith.constant 128 : i32
    %5 = arith.muli %arg1, %c128_i32 : i32
    %c509_i32 = arith.constant 509 : i32
    %6 = arith.subi %c509_i32, %5 : i32
    %7 = tpu.iota {dimensions = array<i32: 1>} : vector<8x129xi32>
    %8 = vector.broadcast %6 : i32 to vector<8x129xi32>
    %9 = arith.cmpi slt, %7, %8 : vector<8x129xi32>
    %cst = arith.constant 0.000000e+00 : bf16
    %10 = vector.broadcast %cst : bf16 to vector<8x129xbf16>
    %11 = arith.select %9, %4, %10 : vector<8x129xi1>, vector<8x129xbf16>
    %c0_6 = arith.constant 0 : index
    %c0_7 = arith.constant 0 : index
    %12 = vector.load %arg6[%c0_6, %c0_7] : memref<129x258xbf16, #tpu.memory_space<vmem>>, vector<129x258xbf16>
    %cst_8 = arith.constant dense<0.000000e+00> : vector<8x258xf32>
    %13 = tpu.matmul %11, %12, %cst_8 {dimension_numbers = #tpu.dot_dimension_numbers<[1], [0], [0], [1], [0, 0, 1, 1], [], []>} : vector<8x129xbf16>, vector<129x258xbf16>, vector<8x258xf32> -> vector<8x258xf32>
    %14 = arith.truncf %13 : vector<8x258xf32> to vector<8x258xbf16>
    %15 = vector.extract_strided_slice %14 {offsets = [0, 0], sizes = [8, 256], strides = [1, 1]} : vector<8x258xbf16> to vector<8x256xbf16>
    %16 = vector.extract_strided_slice %14 {offsets = [0, 1], sizes = [8, 256], strides = [1, 1]} : vector<8x258xbf16> to vector<8x256xbf16>
    %17 = vector.extract_strided_slice %14 {offsets = [0, 2], sizes = [8, 256], strides = [1, 1]} : vector<8x258xbf16> to vector<8x256xbf16>
    %c0_9 = arith.constant 0 : index
    %c0_10 = arith.constant 0 : index
    %c0_11 = arith.constant 0 : index
    %18 = vector.load %arg3[%c0_9, %c0_10, %c0_11] : memref<1x4x256xbf16, #tpu.memory_space<vmem>>, vector<1x4x256xbf16>
    %19 = vector.shape_cast %18 : vector<1x4x256xbf16> to vector<4x256xbf16>
    %c0_12 = arith.constant 0 : index
    %c0_13 = arith.constant 0 : index
    %c0_14 = arith.constant 0 : index
    %c0_15 = arith.constant 0 : index
    %20 = vector.load %arg5[%c0_12, %c0_13, %c0_14, %c0_15] : memref<1x1x4x2xbf16, #tpu.memory_space<vmem>>, vector<1x1x4x2xbf16>
    %21 = vector.shape_cast %20 : vector<1x1x4x2xbf16> to vector<4x2xbf16>
    %22 = tpu.concatenate %19, %21 in 1 : vector<4x256xbf16>, vector<4x2xbf16> -> vector<4x258xbf16>
    %23 = vector.extract_strided_slice %22 {offsets = [0, 0], sizes = [4, 256], strides = [1, 1]} : vector<4x258xbf16> to vector<4x256xbf16>
    %24 = vector.extract_strided_slice %22 {offsets = [0, 1], sizes = [4, 256], strides = [1, 1]} : vector<4x258xbf16> to vector<4x256xbf16>
    %25 = vector.extract_strided_slice %22 {offsets = [0, 2], sizes = [4, 256], strides = [1, 1]} : vector<4x258xbf16> to vector<4x256xbf16>
    %26 = tpu.concatenate %15, %16, %17, %23, %24, %25 in 0 : vector<8x256xbf16>, vector<8x256xbf16>, vector<8x256xbf16>, vector<4x256xbf16>, vector<4x256xbf16>, vector<4x256xbf16> -> vector<36x256xbf16>
    %c0_16 = arith.constant 0 : index
    %c0_17 = arith.constant 0 : index
    %27 = vector.load %arg7[%c0_16, %c0_17] : memref<4x36xbf16, #tpu.memory_space<vmem>>, vector<4x36xbf16>
    %cst_18 = arith.constant dense<0.000000e+00> : vector<4x256xf32>
    %28 = tpu.matmul %27, %26, %cst_18 {dimension_numbers = #tpu.dot_dimension_numbers<[1], [0], [0], [1], [0, 0, 1, 1], [], []>} : vector<4x36xbf16>, vector<36x256xbf16>, vector<4x256xf32> -> vector<4x256xf32>
    %c0_19 = arith.constant 0 : index
    %c0_20 = arith.constant 0 : index
    %29 = vector.load %arg8[%c0_19, %c0_20] : memref<4x1xf32, #tpu.memory_space<vmem>>, vector<4x1xf32>
    %30 = vector.broadcast %29 : vector<4x1xf32> to vector<4x256xf32>
    %31 = arith.addf %28, %30 : vector<4x256xf32>
    %cst_21 = arith.constant 0.000000e+00 : f32
    %32 = vector.broadcast %cst_21 : f32 to vector<4x256xf32>
    %33 = arith.cmpf oge, %31, %32 : vector<4x256xf32>
    %cst_22 = arith.constant 0.00999999977 : f32
    %34 = vector.broadcast %cst_22 : f32 to vector<4x256xf32>
    %35 = arith.mulf %34, %31 : vector<4x256xf32>
    %36 = arith.select %33, %31, %35 : vector<4x256xi1>, vector<4x256xf32>
    %c0_23 = arith.constant 0 : index
    %c0_24 = arith.constant 0 : index
    %37 = vector.load %arg9[%c0_23, %c0_24] : memref<2x4xbf16, #tpu.memory_space<vmem>>, vector<2x4xbf16>
    %38 = arith.truncf %36 : vector<4x256xf32> to vector<4x256xbf16>
    %cst_25 = arith.constant dense<0.000000e+00> : vector<2x256xf32>
    %39 = tpu.matmul %37, %38, %cst_25 {dimension_numbers = #tpu.dot_dimension_numbers<[1], [0], [0], [1], [0, 0, 1, 1], [], []>} : vector<2x4xbf16>, vector<4x256xbf16>, vector<2x256xf32> -> vector<2x256xf32>
    %c0_26 = arith.constant 0 : index
    %c0_27 = arith.constant 0 : index
    %40 = vector.load %arg10[%c0_26, %c0_27] : memref<2x1xf32, #tpu.memory_space<vmem>>, vector<2x1xf32>
    %41 = vector.broadcast %40 : vector<2x1xf32> to vector<2x256xf32>
    %42 = arith.addf %39, %41 : vector<2x256xf32>
    %43 = math.tanh %42 : vector<2x256xf32>
    %c0_28 = arith.constant 0 : index
    %c0_29 = arith.constant 0 : index
    %c0_30 = arith.constant 0 : index
    %44 = vector.load %arg11[%c0_28, %c0_29, %c0_30] : memref<1x2x256xf32, #tpu.memory_space<vmem>>, vector<1x2x256xf32>
    %45 = vector.shape_cast %44 : vector<1x2x256xf32> to vector<2x256xf32>
    %46 = vector.shape_cast %43 : vector<2x256xf32> to vector<1x2x256xf32>
    tpu.vector_store %arg11[%c0_28, %c0_29, %c0_30], %46 {strides = array<i32>} : memref<1x2x256xf32, #tpu.memory_space<vmem>>, vector<1x2x256xf32>,
    return
  }
  func.func @transform_0(%arg0: i32, %arg1: i32) -> (i32, i32, i32) {
    %c0_i32 = arith.constant 0 : i32
    %c0_i32_0 = arith.constant 0 : i32
    return %arg0, %c0_i32, %arg1 : i32, i32, i32
  }
  func.func @transform_1(%arg0: i32, %arg1: i32) -> (i32, i32, i32) {
    %c0_i32 = arith.constant 0 : i32
    %c0_i32_0 = arith.constant 0 : i32
    return %arg0, %c0_i32, %arg1 : i32, i32, i32
  }
  func.func @transform_2(%arg0: i32, %arg1: i32) -> (i32, i32, i32, i32) {
    %c0_i32 = arith.constant 0 : i32
    %c0_i32_0 = arith.constant 0 : i32
    %c0_i32_1 = arith.constant 0 : i32
    return %arg0, %arg1, %c0_i32, %c0_i32_0 : i32, i32, i32, i32
  }
  func.func @transform_3(%arg0: i32, %arg1: i32) -> (i32, i32, i32, i32) {
    %c0_i32 = arith.constant 0 : i32
    %c0_i32_0 = arith.constant 0 : i32
    %c0_i32_1 = arith.constant 0 : i32
    return %arg0, %arg1, %c0_i32, %c0_i32_0 : i32, i32, i32, i32
  }
  func.func @transform_4(%arg0: i32, %arg1: i32) -> (i32, i32) {
    %c0_i32 = arith.constant 0 : i32
    %c0_i32_0 = arith.constant 0 : i32
    %c0_i32_1 = arith.constant 0 : i32
    return %c0_i32, %c0_i32_0 : i32, i32
  }
  func.func @transform_5(%arg0: i32, %arg1: i32) -> (i32, i32) {
    %c0_i32 = arith.constant 0 : i32
    %c0_i32_0 = arith.constant 0 : i32
    %c0_i32_1 = arith.constant 0 : i32
    return %c0_i32, %c0_i32_0 : i32, i32
  }
  func.func @transform_6(%arg0: i32, %arg1: i32) -> (i32, i32) {
    %c0_i32 = arith.constant 0 : i32
    %c0_i32_0 = arith.constant 0 : i32
    %c0_i32_1 = arith.constant 0 : i32
    return %c0_i32, %c0_i32_0 : i32, i32
  }
  func.func @transform_7(%arg0: i32, %arg1: i32) -> (i32, i32) {
    %c0_i32 = arith.constant 0 : i32
    %c0_i32_0 = arith.constant 0 : i32
    %c0_i32_1 = arith.constant 0 : i32
    return %c0_i32, %c0_i32_0 : i32, i32
  }
  func.func @transform_8(%arg0: i32, %arg1: i32) -> (i32, i32) {
    %c0_i32 = arith.constant 0 : i32
    %c0_i32_0 = arith.constant 0 : i32
    %c0_i32_1 = arith.constant 0 : i32
    return %c0_i32, %c0_i32_0 : i32, i32
  }
  func.func @transform_9(%arg0: i32, %arg1: i32) -> (i32, i32, i32) {
    %c0_i32 = arith.constant 0 : i32
    %c0_i32_0 = arith.constant 0 : i32
    return %arg0, %c0_i32, %arg1 : i32, i32, i32
  }
}

</mosaic_0001>

<llo_original>
// kernel: _forward.5
$region0: #{_forward.5}
  #allocation0 [shape = 'u32[]', space=smem, size = 0x4, offset = 0x4, fixed_abs, tag = 'smem constant byte address 0x4 - core index']
  #allocation1 [shape = 'u32[144,128]{1,0:T(1,128)}', space=vmem, size = 0x12000, scoped, tag = 'internal scratch']
  %s0 = inlined_call_operand.vmem [shape: bf16[2,1,1024], index: 0, kind: input, shape index: {}]
  %s1 = inlined_call_operand.vmem [shape: bf16[2,1,1024], index: 1, kind: input, shape index: {}]
  %s2 = inlined_call_operand.vmem [shape: bf16[2,4,1,1], index: 2, kind: input, shape index: {}]
  %s3 = inlined_call_operand.vmem [shape: bf16[4,3], index: 3, kind: input, shape index: {}]
  %s4 = inlined_call_operand.vmem [shape: f32[4,1], index: 4, kind: input, shape index: {}]
  %s5 = inlined_call_operand.vmem [shape: bf16[2,4,1023], index: 5, kind: output, shape index: {}]
  %s6 = sld [smem:[#allocation0]]
  $region53: #{_forward.5} parent=0
    _
  %s8 = ssub.s32 1, %s6
  %s9 = scalar_select 0, %s8, %s6
  loop: start=0, step=1, limit=10
  $region2: #{_forward.5} parent=0 // loop_pre_header
    _
  $region3: #{_forward.5} parent=0 // loop_header
    %s11 = sphi 0, %s15
    %p12 = scmp.ge.s32.totalorder %s11, 10
    %s18 = sphi 0, %s30
    %s19 = sphi 0, %s26
    %s20 = sphi 0, %s18
    %s21 = sphi 0, %s19
    %s22 = sphi 0, %s20
    %s23 = sphi 0, %s21
    %s35 = sphi 0, %s37
    %s38 = sphi 0, %s35
    %s39 = sphi 0, %s38
    %s55 = sphi 0, %s39
    %s63 = sphi 0, %s65
    %s66 = sphi 0, %s63
    %s67 = sphi 0, %s66
    %s83 = sphi 0, %s67
    %s91 = sphi 0, %s93
    %s94 = sphi 0, %s91
    %s95 = sphi 0, %s94
    %s111 = sphi 0, %s95
    %s115 = sphi 0, %s115
    %s117 = sphi 0, %s115
    %s118 = sphi 0, %s117
    %s132 = sphi 0, %s118
    %s136 = sphi 0, %s136
    %s138 = sphi 0, %s136
    %s139 = sphi 0, %s138
    %s153 = sphi 0, %s139
    %s161 = sphi 0, %s163
    %s164 = sphi 0, %s161
    %s165 = sphi 0, %s164
    %s181 = sphi 0, %s165
  $region4: #{_forward.5} parent=0 // loop_header_branch
    %14 = sbr.rel (%p12) target = $region8
  $region5: #{_forward.5} parent=0 // loop_body
    %s16 = ssub.s32 %s11, 1
    %s17 = ssub.s32 %s11, 2
    %s24 = sadd.s32 1, %s19
    %p25 = scmp.ge.s32.totalorder %s24, 4
    %s26 = scalar_select %p25, 0, %s24
    %s27 = sadd.s32 1, %s18
    %s28 = scalar_select %p25, %s27, %s18
    %p29 = scmp.ge.s32.totalorder %s28, 2
    %s30 = scalar_select %p29, 0, %s28
    %s31 = ssub.s32 %s18, %s30
    %s32 = ssub.s32 %s19, %s26
    %s33 = sor.u32 %s31, %s32
    %p34 = scmp.eq.s32.totalorder %s33, 0
    %s36 = sadd.s32 %s35, 1
    %s37 = scalar_select %p34, %s35, %s36
    %p40 = pneg %p34
    %p41 = scmp.eq.s32.totalorder %s11, 7
    %p42 = por %p40, %p41
    %p43 = scmp.ne.s32.totalorder %s35, %s38
    %p44 = scmp.eq.s32.totalorder %s11, 0
    %p45 = por %p43, %p44
    %p46 = scmp.ne.s32.totalorder %s35, %s38
    %p47 = scmp.eq.s32.totalorder %s16, 7
    %p48 = por %p46, %p47
    %p49 = scmp.ne.s32.totalorder %s38, %s39
    %p50 = scmp.eq.s32.totalorder %s16, 0
    %p51 = por %p49, %p50
    %p52 = scmp.ne.s32.totalorder %s38, %s39
    %p53 = scmp.eq.s32.totalorder %s17, 7
    %p54 = por %p52, %p53
    %p56 = scmp.ne.s32.totalorder %s39, %s55
    %p57 = scmp.eq.s32.totalorder %s17, 0
    %p58 = por %p56, %p57
    %s59 = ssub.s32 %s18, %s30
    %s60 = ssub.s32 %s19, %s26
    %s61 = sor.u32 %s59, %s60
    %p62 = scmp.eq.s32.totalorder %s61, 0
    %s64 = sadd.s32 %s63, 1
    %s65 = scalar_select %p62, %s63, %s64
    %p68 = pneg %p62
    %p69 = scmp.eq.s32.totalorder %s11, 7
    %p70 = por %p68, %p69
    %p71 = scmp.ne.s32.totalorder %s63, %s66
    %p72 = scmp.eq.s32.totalorder %s11, 0
    %p73 = por %p71, %p72
    %p74 = scmp.ne.s32.totalorder %s63, %s66
    %p75 = scmp.eq.s32.totalorder %s16, 7
    %p76 = por %p74, %p75
    %p77 = scmp.ne.s32.totalorder %s66, %s67
    %p78 = scmp.eq.s32.totalorder %s16, 0
    %p79 = por %p77, %p78
    %p80 = scmp.ne.s32.totalorder %s66, %s67
    %p81 = scmp.eq.s32.totalorder %s17, 7
    %p82 = por %p80, %p81
    %p84 = scmp.ne.s32.totalorder %s67, %s83
    %p85 = scmp.eq.s32.totalorder %s17, 0
    %p86 = por %p84, %p85
    %s87 = ssub.s32 %s18, %s30
    %s88 = ssub.s32 %s19, %s26
    %s89 = sor.u32 %s87, %s88
    %p90 = scmp.eq.s32.totalorder %s89, 0
    %s92 = sadd.s32 %s91, 1
    %s93 = scalar_select %p90, %s91, %s92
    %p96 = pneg %p90
    %p97 = scmp.eq.s32.totalorder %s11, 7
    %p98 = por %p96, %p97
    %p99 = scmp.ne.s32.totalorder %s91, %s94
    %p100 = scmp.eq.s32.totalorder %s11, 0
    %p101 = por %p99, %p100
    %p102 = scmp.ne.s32.totalorder %s91, %s94
    %p103 = scmp.eq.s32.totalorder %s16, 7
    %p104 = por %p102, %p103
    %p105 = scmp.ne.s32.totalorder %s94, %s95
    %p106 = scmp.eq.s32.totalorder %s16, 0
    %p107 = por %p105, %p106
    %p108 = scmp.ne.s32.totalorder %s94, %s95
    %p109 = scmp.eq.s32.totalorder %s17, 7
    %p110 = por %p108, %p109
    %p112 = scmp.ne.s32.totalorder %s95, %s111
    %p113 = scmp.eq.s32.totalorder %s17, 0
    %p114 = por %p112, %p113
    %s116 = sadd.s32 %s115, 1
    %p119 = scmp.eq.s32.totalorder %s11, 7
    %p120 = scmp.ne.s32.totalorder %s115, %s117
    %p121 = scmp.eq.s32.totalorder %s11, 0
    %p122 = por %p120, %p121
    %p123 = scmp.ne.s32.totalorder %s115, %s117
    %p124 = scmp.eq.s32.totalorder %s16, 7
    %p125 = por %p123, %p124
    %p126 = scmp.ne.s32.totalorder %s117, %s118
    %p127 = scmp.eq.s32.totalorder %s16, 0
    %p128 = por %p126, %p127
    %p129 = scmp.ne.s32.totalorder %s117, %s118
    %p130 = scmp.eq.s32.totalorder %s17, 7
    %p131 = por %p129, %p130
    %p133 = scmp.ne.s32.totalorder %s118, %s132
    %p134 = scmp.eq.s32.totalorder %s17, 0
    %p135 = por %p133, %p134
    %s137 = sadd.s32 %s136, 1
    %p140 = scmp.eq.s32.totalorder %s11, 7
    %p141 = scmp.ne.s32.totalorder %s136, %s138
    %p142 = scmp.eq.s32.totalorder %s11, 0
    %p143 = por %p141, %p142
    %p144 = scmp.ne.s32.totalorder %s136, %s138
    %p145 = scmp.eq.s32.totalorder %s16, 7
    %p146 = por %p144, %p145
    %p147 = scmp.ne.s32.totalorder %s138, %s139
    %p148 = scmp.eq.s32.totalorder %s16, 0
    %p149 = por %p147, %p148
    %p150 = scmp.ne.s32.totalorder %s138, %s139
    %p151 = scmp.eq.s32.totalorder %s17, 7
    %p152 = por %p150, %p151
    %p154 = scmp.ne.s32.totalorder %s139, %s153
    %p155 = scmp.eq.s32.totalorder %s17, 0
    %p156 = por %p154, %p155
    %s157 = ssub.s32 %s18, %s30
    %s158 = ssub.s32 %s19, %s26
    %s159 = sor.u32 %s157, %s158
    %p160 = scmp.eq.s32.totalorder %s159, 0
    %s162 = sadd.s32 %s161, 1
    %s163 = scalar_select %p160, %s161, %s162
    %p166 = pneg %p160
    %p167 = scmp.eq.s32.totalorder %s11, 7
    %p168 = por %p166, %p167
    %p169 = scmp.ne.s32.totalorder %s161, %s164
    %p170 = scmp.eq.s32.totalorder %s11, 0
    %p171 = por %p169, %p170
    %p172 = scmp.ne.s32.totalorder %s161, %s164
    %p173 = scmp.eq.s32.totalorder %s16, 7
    %p174 = por %p172, %p173
    %p175 = scmp.ne.s32.totalorder %s164, %s165
    %p176 = scmp.eq.s32.totalorder %s16, 0
    %p177 = por %p175, %p176
    %p178 = scmp.ne.s32.totalorder %s164, %s165
    %p179 = scmp.eq.s32.totalorder %s17, 7
    %p180 = por %p178, %p179
    %p182 = scmp.ne.s32.totalorder %s165, %s181
    %p183 = scmp.eq.s32.totalorder %s17, 0
    %p184 = por %p182, %p183
    %p185 = scmp.le.s32.totalorder 1, %s11
    %p186 = scmp.lt.s32.totalorder %s11, 9
    %p187 = pnand %p185, %p186
    %p188 = pneg %p187
    // Predicated region
    $region9: #{_forward.5} parent=5 // pred_check
      _
    $region10: #{_forward.5} parent=5 // pred_check_branch
      %190 = sbr.rel (%p187) target = $region12
    $region11: #{_forward.5} parent=5 // pred_region
      %s191 = ssub.s32 %s11, 1
      // Predicated region
      $region13: #{_forward.5} parent=11 // pred_check
        %p192 = pneg %p128
      $region14: #{_forward.5} parent=11 // pred_check_branch
        %194 = sbr.rel (%p192) target = $region16
      $region15: #{_forward.5} parent=11 // pred_region
        _
      $region16: #{_forward.5} parent=11 // pred_fallthru
        _
      // Predicated region
      $region17: #{_forward.5} parent=11 // pred_check
        %p195 = pneg %p149
      $region18: #{_forward.5} parent=11 // pred_check_branch
        %197 = sbr.rel (%p195) target = $region20
      $region19: #{_forward.5} parent=11 // pred_region
        _
      $region20: #{_forward.5} parent=11 // pred_fallthru
        _
    $region12: #{_forward.5} parent=5 // pred_fallthru
      _
    %p198 = scmp.lt.s32.totalorder %s11, 8
    // Predicated region
    $region21: #{_forward.5} parent=5 // pred_check
      %p199 = pneg %p198
    $region22: #{_forward.5} parent=5 // pred_check_branch
      %201 = sbr.rel (%p199) target = $region24
    $region23: #{_forward.5} parent=5 // pred_region
      // Predicated region
      $region25: #{_forward.5} parent=23 // pred_check
        %p202 = pneg %p45
      $region26: #{_forward.5} parent=23 // pred_check_branch
        %204 = sbr.rel (%p202) target = $region28
      $region27: #{_forward.5} parent=23 // pred_region
        %s205 = smul.u32 2, %s19
        %p206 = scmp.lt.s32.totalorder %s18, 1
        %s207 = scalar_select %p206, %s18, 1
        %p208 = scmp.lt.s32.totalorder %s205, 7
        %s209 = scalar_select %p208, %s205, 7
        %s210 = smul.addr %s207, 8
        %s211 = sadd.s32 %s209, %s210
        %s212 = scalar_lea.vmem %s0, %s211
        %s213 = smul.u32 2, %s19
      $region28: #{_forward.5} parent=23 // pred_fallthru
        _
      // Predicated region
      $region29: #{_forward.5} parent=23 // pred_check
        %p214 = pneg %p73
      $region30: #{_forward.5} parent=23 // pred_check_branch
        %216 = sbr.rel (%p214) target = $region32
      $region31: #{_forward.5} parent=23 // pred_region
        %s217 = smul.u32 2, %s19
        %p218 = scmp.lt.s32.totalorder %s18, 1
        %s219 = scalar_select %p218, %s18, 1
        %p220 = scmp.lt.s32.totalorder %s217, 7
        %s221 = scalar_select %p220, %s217, 7
        %s222 = smul.addr %s219, 8
        %s223 = sadd.s32 %s221, %s222
        %s224 = scalar_lea.vmem %s1, %s223
        %s225 = smul.u32 2, %s19
      $region32: #{_forward.5} parent=23 // pred_fallthru
        _
      // Predicated region
      $region33: #{_forward.5} parent=23 // pred_check
        %p226 = pneg %p101
      $region34: #{_forward.5} parent=23 // pred_check_branch
        %228 = sbr.rel (%p226) target = $region36
      $region35: #{_forward.5} parent=23 // pred_region
        %p229 = scmp.lt.s32.totalorder %s18, 1
        %s230 = scalar_select %p229, %s18, 1
        %p231 = scmp.lt.s32.totalorder %s19, 3
        %s232 = scalar_select %p231, %s19, 3
        %s233 = smul.addr %s230, 4
        %s234 = sadd.s32 %s232, %s233
        %s235 = scalar_lea.vmem %s2, %s234
      $region36: #{_forward.5} parent=23 // pred_fallthru
        _
    $region24: #{_forward.5} parent=5 // pred_fallthru
      _
    %p236 = scmp.le.s32.totalorder 1, %s11
    %p237 = scmp.lt.s32.totalorder %s11, 9
    %p238 = pnand %p236, %p237
    %p239 = pneg %p238
    // Predicated region
    $region37: #{_forward.5} parent=5 // pred_check
      _
    $region38: #{_forward.5} parent=5 // pred_check_branch
      %241 = sbr.rel (%p238) target = $region40
    $region39: #{_forward.5} parent=5 // pred_region
      %s242 = ssub.s32 %s11, 1
      %s243 = smul.u32 2, %s21
      %p244 = scmp.lt.s32.totalorder %s20, 1
      %s245 = scalar_select %p244, %s20, 1
      %p246 = scmp.lt.s32.totalorder %s243, 7
      %s247 = scalar_select %p246, %s243, 7
      %s248 = smul.addr %s245, 8
      %s249 = sadd.s32 %s247, %s248
      %s250 = scalar_lea.vmem %s0, %s249
      %p251 = pneg %p51
      %p252 = pneg %p48
      %s253 = smul.u32 2, %s21
      %p254 = scmp.lt.s32.totalorder %s20, 1
      %s255 = scalar_select %p254, %s20, 1
      %p256 = scmp.lt.s32.totalorder %s253, 7
      %s257 = scalar_select %p256, %s253, 7
      %s258 = smul.addr %s255, 8
      %s259 = sadd.s32 %s257, %s258
      %s260 = scalar_lea.vmem %s1, %s259
      %p261 = pneg %p79
      %p262 = pneg %p76
      %p263 = scmp.lt.s32.totalorder %s20, 1
      %s264 = scalar_select %p263, %s20, 1
      %p265 = scmp.lt.s32.totalorder %s21, 3
      %s266 = scalar_select %p265, %s21, 3
      %s267 = smul.addr %s264, 4
      %s268 = sadd.s32 %s266, %s267
      %s269 = scalar_lea.vmem %s2, %s268
      %p270 = pneg %p107
      %p271 = pneg %p104
      %p272 = pneg %p128
      %p273 = pneg %p125
      %p274 = pneg %p149
      %p275 = pneg %p146
      %p276 = pneg %p177
      %p277 = pneg %p174
      %s278 = smul.u32 2, %s21
      %p279 = scmp.lt.s32.totalorder %s20, 1
      %s280 = scalar_select %p279, %s20, 1
      %p281 = scmp.lt.s32.totalorder %s278, 7
      %s282 = scalar_select %p281, %s278, 7
      %s283 = smul.addr %s280, 8
      %s284 = sadd.s32 %s282, %s283
      %s285 = smul.addr %s284, 2
      %s286 = scalar_lea.vmem %s5, %s285
      %s287 = smul.u32 2, %s21
      %p288 = scmp.lt.s32.totalorder %s20, 1
      %s289 = scalar_select %p288, %s20, 1
      %p290 = scmp.lt.s32.totalorder %s287, 7
      %s291 = scalar_select %p290, %s287, 7
      %s292 = smul.addr %s289, 8
      %s293 = sadd.s32 %s291, %s292
      %s294 = scalar_lea.vmem %s0, %s293
      %s295 = smul.u32 2, %s21
      %s296 = smul.u32 2, %s21
      %p297 = scmp.lt.s32.totalorder %s20, 1
      %s298 = scalar_select %p297, %s20, 1
      %p299 = scmp.lt.s32.totalorder %s296, 7
      %s300 = scalar_select %p299, %s296, 7
      %s301 = smul.addr %s298, 8
      %s302 = sadd.s32 %s300, %s301
      %s303 = scalar_lea.vmem %s1, %s302
      %s304 = smul.u32 2, %s21
      %p305 = scmp.lt.s32.totalorder %s20, 1
      %s306 = scalar_select %p305, %s20, 1
      %p307 = scmp.lt.s32.totalorder %s21, 3
      %s308 = scalar_select %p307, %s21, 3
      %s309 = smul.addr %s306, 4
      %s310 = sadd.s32 %s308, %s309
      %s311 = scalar_lea.vmem %s2, %s310
      %s312 = smul.u32 2, %s21
      %p313 = scmp.lt.s32.totalorder %s20, 1
      %s314 = scalar_select %p313, %s20, 1
      %p315 = scmp.lt.s32.totalorder %s312, 7
      %s316 = scalar_select %p315, %s312, 7
      %s317 = smul.addr %s314, 8
      %s318 = sadd.s32 %s316, %s317
      %s319 = smul.addr %s318, 2
      %s320 = scalar_lea.vmem %s5, %s319
      %s321 = smul.u32 2, %s21
      %v323 = vld [vmem:[%s294] sm:$0x3]
      %v324 = vld [vmem:[%s311] sm:$0x1]
      %v327 = vunpack.c.l.s4 1966171168
      %v328 = vunpack.c.0.s8 %v327
      %v329 = vlaneseq
      %v330 = vshrl.u32 %v329, 7
      %v331 = vsub.s32 %v328, %v330
      %v332 = vrot.slane %v323, %v331
      %v333 = vcombine.high %v332, %v332
      %v335 = vunpack.c.l.s4 1966171168
      %v336 = vunpack.c.0.s8 %v335
      %v337 = vlaneseq
      %v338 = vshrl.u32 %v337, 7
      %v339 = vsub.s32 %v336, %v338
      %v340 = vrot.slane %v332, %v339
      %v342 = vunpack.c.l.s4 1966171168
      %v343 = vunpack.c.0.s8 %v342
      %v344 = vlaneseq
      %v345 = vshrl.u32 %v344, 7
      %v346 = vsub.s32 %v343, %v345
      %v347 = vrot.slane %v333, %v346
      %v350 = vld [vmem:[%s303] sm:$0x3]
      %v352 = vshll.u32 %v340, 16
      %v355 = vshll.u32 %v347, 16
      %v358 = vshll.u32 %v324, 16
      %360 = vrot.lane.b32.xlu0 %v352, 127
      %v361 = vpop.permute.xlu0 %360
      %362 = vrot.lane.b32.xlu0 %v355, 127
      %v363 = vpop.permute.xlu0 %362
      %364 = vrot.lane.b32.xlu0 %v358, 127
      %v365 = vpop.permute.xlu0 %364
      %vm366 = vcmask 1039360
      %v367 = vsel %vm366, %v361, %v363
      %v368 = vsel %vm366, %v363, %v365
      %v372 = vcombine.low %v350, %v350
      %v374 = vunpack.c.l.s4 1966171168
      %v375 = vunpack.c.0.s8 %v374
      %v376 = vlaneseq
      %v377 = vshrl.u32 %v376, 7
      %v378 = vsub.s32 %v375, %v377
      %v379 = vrot.slane %v372, %v378
      %v380 = vcombine.high %v379, %v379
      %v382 = vunpack.c.l.s4 1966171168
      %v383 = vunpack.c.0.s8 %v382
      %v384 = vlaneseq
      %v385 = vshrl.u32 %v384, 7
      %v386 = vsub.s32 %v383, %v385
      %v387 = vrot.slane %v379, %v386
      %v389 = vunpack.c.l.s4 1966171168
      %v390 = vunpack.c.0.s8 %v389
      %v391 = vlaneseq
      %v392 = vshrl.u32 %v391, 7
      %v393 = vsub.s32 %v390, %v392
      %v394 = vrot.slane %v380, %v393
      %vm395 = vcmask 1040384
      %vm396 = vsmask.f32 256
      %vm397 = vmand %vm395, %vm396
      %v398 = vsel %vm397, %v340, %v367
      %v399 = vsel %vm397, %v347, %v368
      %vm400 = vcmask 1040384
      %v403 = vsel %vm400, %v398, %v387
      %v406 = vsel %vm400, %v399, %v394
      %v407 = vld [vmem:[%s3] sm:$0x3]
      %v408 = vld [vmem:[%s4] sm:$0xf]
      %410 = vset.pattern.permute.xlu0 0
      %411 = vperm.xlu0 %410, %v408
      %v412 = vpop.permute.xlu0 %411
      %vm414 = vcmask 23552
      %v416 = vsel %vm414, %v407, 0
      %vm418 = vcmask 1041408
      %v419 = vsel %vm400, 4294967295, 65535
      %v420 = vsel %vm418, %v419, 0
      %v421 = vand.u32 %v403, %v420
      %v423 = vand.u32 %v406, %v420
      %425 = vmatprep.subr.bf16.mxu0 %v423
      %426 = vmatpush1.bf16.msra.mxu0 %v421
      %427 = vmatprep.subr.bf16.mxu0 0
      %428 = vmatpush1.bf16.msra.mxu0 0
      %429 = vmatprep.subr.bf16.mxu0 0
      %430 = vmatpush1.bf16.msra.mxu0 0
      %431 = vmatprep.subr.bf16.mxu0 0
      %432 = vmatpush1.bf16.msra.mxu0 0
      %433 = vmatprep.subr.bf16.mxu0 0
      %434 = vmatpush1.bf16.msra.mxu0 0
      %435 = vmatprep.subr.bf16.mxu0 0
      %436 = vmatpush1.bf16.msra.mxu0 0
      %437 = vmatprep.subr.bf16.mxu0 0
      %438 = vmatpush1.bf16.msra.mxu0 0
      %439 = vmatprep.subr.bf16.mxu0 0
      %440 = vmatpush1.bf16.msra.mxu0 0
      %441 = vmatprep.subr.bf16.mxu0 0
      %442 = vmatpush1.bf16.msra.mxu0 0
      %443 = vmatprep.subr.bf16.mxu0 0
      %444 = vmatpush1.bf16.msra.mxu0 0
      %445 = vmatprep.subr.bf16.mxu0 0
      %446 = vmatpush1.bf16.msra.mxu0 0
      %447 = vmatprep.subr.bf16.mxu0 0
      %448 = vmatpush1.bf16.msra.mxu0 0
      %449 = vmatprep.subr.bf16.mxu0 0
      %450 = vmatpush1.bf16.msra.mxu0 0
      %451 = vmatprep.subr.bf16.mxu0 0
      %452 = vmatpush1.bf16.msra.mxu0 0
      %453 = vmatprep.subr.bf16.mxu0 0
      %454 = vmatpush1.bf16.msra.mxu0 0
      %455 = vmatprep.subr.bf16.mxu0 0
      %456 = vmatpush1.bf16.msra.mxu0 0
      %457 = vmatprep.mubr.bf16.mxu0 0
      %458 = vmatmul.mubr.bf16.gmra.mrb[0].mxu0 %v416
      %v459 = vpop.f32.mrb[0].mxu0
      %v460 = vadd.f32 %v412, %v459
      %v461 = vpop.f32.mrb[0].mxu0
      %v462 = vadd.f32 %v412, %v461
      %v463 = vpop.f32.mrb[0].mxu0
      %v464 = vpop.f32.mrb[0].mxu0
      %465 = vdwg.mxu0
      %vm466 = vcmp.ge.f32.partialorder %v460, 0.0
      %vm467 = vcmp.ge.f32.partialorder %v462, 0.0
      %v468 = vmul.f32 %v460, 0.01
      %v469 = vmul.f32 %v462, 0.01
      %v470 = vsel %vm466, %v460, %v468
      %v471 = vsel %vm467, %v462, %v469
      %v472 = vpack.c.bf16 %v470, %v470
      %v473 = vpack.c.bf16 %v471, %v471
      %v476 = vcombine.low %v472, %v473
      %v478 = vunpack.c.l.s4 1983009808
      %v479 = vunpack.c.0.s8 %v478
      %v480 = vlaneseq
      %v481 = vshrl.u32 %v480, 7
      %v482 = vsub.s32 %v479, %v481
      %v483 = vrot.slane %v476, %v482
      %485 = vst [vmem:[%s320] sm:$0xf] %v483
      %s486 = smul.u32 2, %s21
      %p487 = scmp.lt.s32.totalorder %s20, 1
      %s488 = scalar_select %p487, %s20, 1
      %p489 = scmp.lt.s32.totalorder %s486, 7
      %s490 = scalar_select %p489, %s486, 7
      %s491 = smul.addr %s488, 8
      %s492 = sadd.s32 %s490, %s491
      %s493 = smul.addr %s492, 2
      %s494 = scalar_lea.vmem %s5, %s493
      // Predicated region
      $region41: #{_forward.5} parent=39 // pred_check
        %p495 = pneg %p174
      $region42: #{_forward.5} parent=39 // pred_check_branch
        %497 = sbr.rel (%p495) target = $region44
      $region43: #{_forward.5} parent=39 // pred_region
        %s498 = smul.u32 2, %s21
      $region44: #{_forward.5} parent=39 // pred_fallthru
        _
    $region40: #{_forward.5} parent=5 // pred_fallthru
      _
    %p499 = scmp.le.s32.totalorder 2, %s11
    // Predicated region
    $region45: #{_forward.5} parent=5 // pred_check
      %p500 = pneg %p499
    $region46: #{_forward.5} parent=5 // pred_check_branch
      %502 = sbr.rel (%p500) target = $region48
    $region47: #{_forward.5} parent=5 // pred_region
      %s503 = ssub.s32 %s11, 2
      // Predicated region
      $region49: #{_forward.5} parent=47 // pred_check
        %p504 = pneg %p180
      $region50: #{_forward.5} parent=47 // pred_check_branch
        %506 = sbr.rel (%p504) target = $region52
      $region51: #{_forward.5} parent=47 // pred_region
        %s507 = smul.u32 2, %s23
        %p508 = scmp.lt.s32.totalorder %s22, 1
        %s509 = scalar_select %p508, %s22, 1
        %p510 = scmp.lt.s32.totalorder %s507, 7
        %s511 = scalar_select %p510, %s507, 7
        %s512 = smul.addr %s509, 8
        %s513 = sadd.s32 %s511, %s512
        %s514 = smul.addr %s513, 2
        %s515 = scalar_lea.vmem %s5, %s514
      $region52: #{_forward.5} parent=47 // pred_fallthru
        _
    $region48: #{_forward.5} parent=5 // pred_fallthru
      _
  $region6: #{_forward.5} parent=0 // loop_footer
    %s15 = sadd.s32 1, %s11
  $region7: #{_forward.5} parent=0 // loop_footer_branch
    %10 = sbr.rel target = $region3
  $region8: #{_forward.5} parent=0 // loop_exit
    _

// kernel: _forward.6
$region0: #{_forward.6}
  #allocation0 [shape = 'u32[]', space=smem, size = 0x4, offset = 0x4, fixed_abs, tag = 'smem constant byte address 0x4 - core index']
  #allocation1 [shape = 'u32[144,128]{1,0:T(1,128)}', space=vmem, size = 0x12000, scoped, tag = 'internal scratch']
  %s0 = inlined_call_operand.vmem [shape: bf16[2,4,512], index: 0, kind: input, shape index: {}]
  %s1 = inlined_call_operand.vmem [shape: bf16[2,4,511], index: 1, kind: input, shape index: {}]
  %s2 = inlined_call_operand.vmem [shape: bf16[2,2,4,1], index: 2, kind: input, shape index: {}]
  %s3 = inlined_call_operand.vmem [shape: bf16[8,12], index: 3, kind: input, shape index: {}]
  %s4 = inlined_call_operand.vmem [shape: f32[8,1], index: 4, kind: input, shape index: {}]
  %s5 = inlined_call_operand.vmem [shape: bf16[2,8,511], index: 5, kind: output, shape index: {}]
  %s6 = sld [smem:[#allocation0]]
  $region53: #{_forward.6} parent=0
    _
  %s8 = ssub.s32 1, %s6
  %s9 = scalar_select 0, %s8, %s6
  loop: start=0, step=1, limit=6
  $region2: #{_forward.6} parent=0 // loop_pre_header
    _
  $region3: #{_forward.6} parent=0 // loop_header
    %s11 = sphi 0, %s15
    %p12 = scmp.ge.s32.totalorder %s11, 6
    %s18 = sphi 0, %s30
    %s19 = sphi 0, %s26
    %s20 = sphi 0, %s18
    %s21 = sphi 0, %s19
    %s22 = sphi 0, %s20
    %s23 = sphi 0, %s21
    %s35 = sphi 0, %s37
    %s38 = sphi 0, %s35
    %s39 = sphi 0, %s38
    %s55 = sphi 0, %s39
    %s63 = sphi 0, %s65
    %s66 = sphi 0, %s63
    %s67 = sphi 0, %s66
    %s83 = sphi 0, %s67
    %s91 = sphi 0, %s93
    %s94 = sphi 0, %s91
    %s95 = sphi 0, %s94
    %s111 = sphi 0, %s95
    %s115 = sphi 0, %s115
    %s117 = sphi 0, %s115
    %s118 = sphi 0, %s117
    %s132 = sphi 0, %s118
    %s136 = sphi 0, %s136
    %s138 = sphi 0, %s136
    %s139 = sphi 0, %s138
    %s153 = sphi 0, %s139
    %s161 = sphi 0, %s163
    %s164 = sphi 0, %s161
    %s165 = sphi 0, %s164
    %s181 = sphi 0, %s165
  $region4: #{_forward.6} parent=0 // loop_header_branch
    %14 = sbr.rel (%p12) target = $region8
  $region5: #{_forward.6} parent=0 // loop_body
    %s16 = ssub.s32 %s11, 1
    %s17 = ssub.s32 %s11, 2
    %s24 = sadd.s32 1, %s19
    %p25 = scmp.ge.s32.totalorder %s24, 2
    %s26 = scalar_select %p25, 0, %s24
    %s27 = sadd.s32 1, %s18
    %s28 = scalar_select %p25, %s27, %s18
    %p29 = scmp.ge.s32.totalorder %s28, 2
    %s30 = scalar_select %p29, 0, %s28
    %s31 = ssub.s32 %s18, %s30
    %s32 = ssub.s32 %s19, %s26
    %s33 = sor.u32 %s31, %s32
    %p34 = scmp.eq.s32.totalorder %s33, 0
    %s36 = sadd.s32 %s35, 1
    %s37 = scalar_select %p34, %s35, %s36
    %p40 = pneg %p34
    %p41 = scmp.eq.s32.totalorder %s11, 3
    %p42 = por %p40, %p41
    %p43 = scmp.ne.s32.totalorder %s35, %s38
    %p44 = scmp.eq.s32.totalorder %s11, 0
    %p45 = por %p43, %p44
    %p46 = scmp.ne.s32.totalorder %s35, %s38
    %p47 = scmp.eq.s32.totalorder %s16, 3
    %p48 = por %p46, %p47
    %p49 = scmp.ne.s32.totalorder %s38, %s39
    %p50 = scmp.eq.s32.totalorder %s16, 0
    %p51 = por %p49, %p50
    %p52 = scmp.ne.s32.totalorder %s38, %s39
    %p53 = scmp.eq.s32.totalorder %s17, 3
    %p54 = por %p52, %p53
    %p56 = scmp.ne.s32.totalorder %s39, %s55
    %p57 = scmp.eq.s32.totalorder %s17, 0
    %p58 = por %p56, %p57
    %s59 = ssub.s32 %s18, %s30
    %s60 = ssub.s32 %s19, %s26
    %s61 = sor.u32 %s59, %s60
    %p62 = scmp.eq.s32.totalorder %s61, 0
    %s64 = sadd.s32 %s63, 1
    %s65 = scalar_select %p62, %s63, %s64
    %p68 = pneg %p62
    %p69 = scmp.eq.s32.totalorder %s11, 3
    %p70 = por %p68, %p69
    %p71 = scmp.ne.s32.totalorder %s63, %s66
    %p72 = scmp.eq.s32.totalorder %s11, 0
    %p73 = por %p71, %p72
    %p74 = scmp.ne.s32.totalorder %s63, %s66
    %p75 = scmp.eq.s32.totalorder %s16, 3
    %p76 = por %p74, %p75
    %p77 = scmp.ne.s32.totalorder %s66, %s67
    %p78 = scmp.eq.s32.totalorder %s16, 0
    %p79 = por %p77, %p78
    %p80 = scmp.ne.s32.totalorder %s66, %s67
    %p81 = scmp.eq.s32.totalorder %s17, 3
    %p82 = por %p80, %p81
    %p84 = scmp.ne.s32.totalorder %s67, %s83
    %p85 = scmp.eq.s32.totalorder %s17, 0
    %p86 = por %p84, %p85
    %s87 = ssub.s32 %s18, %s30
    %s88 = ssub.s32 %s19, %s26
    %s89 = sor.u32 %s87, %s88
    %p90 = scmp.eq.s32.totalorder %s89, 0
    %s92 = sadd.s32 %s91, 1
    %s93 = scalar_select %p90, %s91, %s92
    %p96 = pneg %p90
    %p97 = scmp.eq.s32.totalorder %s11, 3
    %p98 = por %p96, %p97
    %p99 = scmp.ne.s32.totalorder %s91, %s94
    %p100 = scmp.eq.s32.totalorder %s11, 0
    %p101 = por %p99, %p100
    %p102 = scmp.ne.s32.totalorder %s91, %s94
    %p103 = scmp.eq.s32.totalorder %s16, 3
    %p104 = por %p102, %p103
    %p105 = scmp.ne.s32.totalorder %s94, %s95
    %p106 = scmp.eq.s32.totalorder %s16, 0
    %p107 = por %p105, %p106
    %p108 = scmp.ne.s32.totalorder %s94, %s95
    %p109 = scmp.eq.s32.totalorder %s17, 3
    %p110 = por %p108, %p109
    %p112 = scmp.ne.s32.totalorder %s95, %s111
    %p113 = scmp.eq.s32.totalorder %s17, 0
    %p114 = por %p112, %p113
    %s116 = sadd.s32 %s115, 1
    %p119 = scmp.eq.s32.totalorder %s11, 3
    %p120 = scmp.ne.s32.totalorder %s115, %s117
    %p121 = scmp.eq.s32.totalorder %s11, 0
    %p122 = por %p120, %p121
    %p123 = scmp.ne.s32.totalorder %s115, %s117
    %p124 = scmp.eq.s32.totalorder %s16, 3
    %p125 = por %p123, %p124
    %p126 = scmp.ne.s32.totalorder %s117, %s118
    %p127 = scmp.eq.s32.totalorder %s16, 0
    %p128 = por %p126, %p127
    %p129 = scmp.ne.s32.totalorder %s117, %s118
    %p130 = scmp.eq.s32.totalorder %s17, 3
    %p131 = por %p129, %p130
    %p133 = scmp.ne.s32.totalorder %s118, %s132
    %p134 = scmp.eq.s32.totalorder %s17, 0
    %p135 = por %p133, %p134
    %s137 = sadd.s32 %s136, 1
    %p140 = scmp.eq.s32.totalorder %s11, 3
    %p141 = scmp.ne.s32.totalorder %s136, %s138
    %p142 = scmp.eq.s32.totalorder %s11, 0
    %p143 = por %p141, %p142
    %p144 = scmp.ne.s32.totalorder %s136, %s138
    %p145 = scmp.eq.s32.totalorder %s16, 3
    %p146 = por %p144, %p145
    %p147 = scmp.ne.s32.totalorder %s138, %s139
    %p148 = scmp.eq.s32.totalorder %s16, 0
    %p149 = por %p147, %p148
    %p150 = scmp.ne.s32.totalorder %s138, %s139
    %p151 = scmp.eq.s32.totalorder %s17, 3
    %p152 = por %p150, %p151
    %p154 = scmp.ne.s32.totalorder %s139, %s153
    %p155 = scmp.eq.s32.totalorder %s17, 0
    %p156 = por %p154, %p155
    %s157 = ssub.s32 %s18, %s30
    %s158 = ssub.s32 %s19, %s26
    %s159 = sor.u32 %s157, %s158
    %p160 = scmp.eq.s32.totalorder %s159, 0
    %s162 = sadd.s32 %s161, 1
    %s163 = scalar_select %p160, %s161, %s162
    %p166 = pneg %p160
    %p167 = scmp.eq.s32.totalorder %s11, 3
    %p168 = por %p166, %p167
    %p169 = scmp.ne.s32.totalorder %s161, %s164
    %p170 = scmp.eq.s32.totalorder %s11, 0
    %p171 = por %p169, %p170
    %p172 = scmp.ne.s32.totalorder %s161, %s164
    %p173 = scmp.eq.s32.totalorder %s16, 3
    %p174 = por %p172, %p173
    %p175 = scmp.ne.s32.totalorder %s164, %s165
    %p176 = scmp.eq.s32.totalorder %s16, 0
    %p177 = por %p175, %p176
    %p178 = scmp.ne.s32.totalorder %s164, %s165
    %p179 = scmp.eq.s32.totalorder %s17, 3
    %p180 = por %p178, %p179
    %p182 = scmp.ne.s32.totalorder %s165, %s181
    %p183 = scmp.eq.s32.totalorder %s17, 0
    %p184 = por %p182, %p183
    %p185 = scmp.le.s32.totalorder 1, %s11
    %p186 = scmp.lt.s32.totalorder %s11, 5
    %p187 = pnand %p185, %p186
    %p188 = pneg %p187
    // Predicated region
    $region9: #{_forward.6} parent=5 // pred_check
      _
    $region10: #{_forward.6} parent=5 // pred_check_branch
      %190 = sbr.rel (%p187) target = $region12
    $region11: #{_forward.6} parent=5 // pred_region
      %s191 = ssub.s32 %s11, 1
      // Predicated region
      $region13: #{_forward.6} parent=11 // pred_check
        %p192 = pneg %p128
      $region14: #{_forward.6} parent=11 // pred_check_branch
        %194 = sbr.rel (%p192) target = $region16
      $region15: #{_forward.6} parent=11 // pred_region
        _
      $region16: #{_forward.6} parent=11 // pred_fallthru
        _
      // Predicated region
      $region17: #{_forward.6} parent=11 // pred_check
        %p195 = pneg %p149
      $region18: #{_forward.6} parent=11 // pred_check_branch
        %197 = sbr.rel (%p195) target = $region20
      $region19: #{_forward.6} parent=11 // pred_region
        _
      $region20: #{_forward.6} parent=11 // pred_fallthru
        _
    $region12: #{_forward.6} parent=5 // pred_fallthru
      _
    %p198 = scmp.lt.s32.totalorder %s11, 4
    // Predicated region
    $region21: #{_forward.6} parent=5 // pred_check
      %p199 = pneg %p198
    $region22: #{_forward.6} parent=5 // pred_check_branch
      %201 = sbr.rel (%p199) target = $region24
    $region23: #{_forward.6} parent=5 // pred_region
      // Predicated region
      $region25: #{_forward.6} parent=23 // pred_check
        %p202 = pneg %p45
      $region26: #{_forward.6} parent=23 // pred_check_branch
        %204 = sbr.rel (%p202) target = $region28
      $region27: #{_forward.6} parent=23 // pred_region
        %s205 = smul.u32 2, %s19
        %p206 = scmp.lt.s32.totalorder %s18, 1
        %s207 = scalar_select %p206, %s18, 1
        %p208 = scmp.lt.s32.totalorder %s205, 3
        %s209 = scalar_select %p208, %s205, 3
        %s210 = smul.addr %s207, 4
        %s211 = sadd.s32 %s209, %s210
        %s212 = smul.addr %s211, 2
        %s213 = scalar_lea.vmem %s0, %s212
        %s214 = smul.u32 2, %s19
      $region28: #{_forward.6} parent=23 // pred_fallthru
        _
      // Predicated region
      $region29: #{_forward.6} parent=23 // pred_check
        %p215 = pneg %p73
      $region30: #{_forward.6} parent=23 // pred_check_branch
        %217 = sbr.rel (%p215) target = $region32
      $region31: #{_forward.6} parent=23 // pred_region
        %s218 = smul.u32 2, %s19
        %p219 = scmp.lt.s32.totalorder %s18, 1
        %s220 = scalar_select %p219, %s18, 1
        %p221 = scmp.lt.s32.totalorder %s218, 3
        %s222 = scalar_select %p221, %s218, 3
        %s223 = smul.addr %s220, 4
        %s224 = sadd.s32 %s222, %s223
        %s225 = smul.addr %s224, 2
        %s226 = scalar_lea.vmem %s1, %s225
        %s227 = smul.u32 2, %s19
      $region32: #{_forward.6} parent=23 // pred_fallthru
        _
      // Predicated region
      $region33: #{_forward.6} parent=23 // pred_check
        %p228 = pneg %p101
      $region34: #{_forward.6} parent=23 // pred_check_branch
        %230 = sbr.rel (%p228) target = $region36
      $region35: #{_forward.6} parent=23 // pred_region
        %p231 = scmp.lt.s32.totalorder %s18, 1
        %s232 = scalar_select %p231, %s18, 1
        %p233 = scmp.lt.s32.totalorder %s19, 1
        %s234 = scalar_select %p233, %s19, 1
        %s235 = smul.addr %s232, 2
        %s236 = sadd.s32 %s234, %s235
        %s237 = smul.addr %s236, 2
        %s238 = scalar_lea.vmem %s2, %s237
      $region36: #{_forward.6} parent=23 // pred_fallthru
        _
    $region24: #{_forward.6} parent=5 // pred_fallthru
      _
    %p239 = scmp.le.s32.totalorder 1, %s11
    %p240 = scmp.lt.s32.totalorder %s11, 5
    %p241 = pnand %p239, %p240
    %p242 = pneg %p241
    // Predicated region
    $region37: #{_forward.6} parent=5 // pred_check
      _
    $region38: #{_forward.6} parent=5 // pred_check_branch
      %244 = sbr.rel (%p241) target = $region40
    $region39: #{_forward.6} parent=5 // pred_region
      %s245 = ssub.s32 %s11, 1
      %s246 = smul.u32 2, %s21
      %p247 = scmp.lt.s32.totalorder %s20, 1
      %s248 = scalar_select %p247, %s20, 1
      %p249 = scmp.lt.s32.totalorder %s246, 3
      %s250 = scalar_select %p249, %s246, 3
      %s251 = smul.addr %s248, 4
      %s252 = sadd.s32 %s250, %s251
      %s253 = smul.addr %s252, 2
      %s254 = scalar_lea.vmem %s0, %s253
      %p255 = pneg %p51
      %p256 = pneg %p48
      %s257 = smul.u32 2, %s21
      %p258 = scmp.lt.s32.totalorder %s20, 1
      %s259 = scalar_select %p258, %s20, 1
      %p260 = scmp.lt.s32.totalorder %s257, 3
      %s261 = scalar_select %p260, %s257, 3
      %s262 = smul.addr %s259, 4
      %s263 = sadd.s32 %s261, %s262
      %s264 = smul.addr %s263, 2
      %s265 = scalar_lea.vmem %s1, %s264
      %p266 = pneg %p79
      %p267 = pneg %p76
      %p268 = scmp.lt.s32.totalorder %s20, 1
      %s269 = scalar_select %p268, %s20, 1
      %p270 = scmp.lt.s32.totalorder %s21, 1
      %s271 = scalar_select %p270, %s21, 1
      %s272 = smul.addr %s269, 2
      %s273 = sadd.s32 %s271, %s272
      %s274 = smul.addr %s273, 2
      %s275 = scalar_lea.vmem %s2, %s274
      %p276 = pneg %p107
      %p277 = pneg %p104
      %p278 = pneg %p128
      %p279 = pneg %p125
      %p280 = pneg %p149
      %p281 = pneg %p146
      %p282 = pneg %p177
      %p283 = pneg %p174
      %s284 = smul.u32 2, %s21
      %p285 = scmp.lt.s32.totalorder %s20, 1
      %s286 = scalar_select %p285, %s20, 1
      %p287 = scmp.lt.s32.totalorder %s284, 3
      %s288 = scalar_select %p287, %s284, 3
      %s289 = smul.addr %s286, 4
      %s290 = sadd.s32 %s288, %s289
      %s291 = smul.addr %s290, 4
      %s292 = scalar_lea.vmem %s5, %s291
      %s293 = smul.u32 2, %s21
      %p294 = scmp.lt.s32.totalorder %s20, 1
      %s295 = scalar_select %p294, %s20, 1
      %p296 = scmp.lt.s32.totalorder %s293, 3
      %s297 = scalar_select %p296, %s293, 3
      %s298 = smul.addr %s295, 4
      %s299 = sadd.s32 %s297, %s298
      %s300 = smul.addr %s299, 2
      %s301 = scalar_lea.vmem %s0, %s300
      %s302 = smul.u32 2, %s21
      %s303 = smul.u32 2, %s21
      %p304 = scmp.lt.s32.totalorder %s20, 1
      %s305 = scalar_select %p304, %s20, 1
      %p306 = scmp.lt.s32.totalorder %s303, 3
      %s307 = scalar_select %p306, %s303, 3
      %s308 = smul.addr %s305, 4
      %s309 = sadd.s32 %s307, %s308
      %s310 = smul.addr %s309, 2
      %s311 = scalar_lea.vmem %s1, %s310
      %s312 = smul.u32 2, %s21
      %p313 = scmp.lt.s32.totalorder %s20, 1
      %s314 = scalar_select %p313, %s20, 1
      %p315 = scmp.lt.s32.totalorder %s21, 1
      %s316 = scalar_select %p315, %s21, 1
      %s317 = smul.addr %s314, 2
      %s318 = sadd.s32 %s316, %s317
      %s319 = smul.addr %s318, 2
      %s320 = scalar_lea.vmem %s2, %s319
      %s321 = smul.u32 2, %s21
      %p322 = scmp.lt.s32.totalorder %s20, 1
      %s323 = scalar_select %p322, %s20, 1
      %p324 = scmp.lt.s32.totalorder %s321, 3
      %s325 = scalar_select %p324, %s321, 3
      %s326 = smul.addr %s323, 4
      %s327 = sadd.s32 %s325, %s326
      %s328 = smul.addr %s327, 4
      %s329 = scalar_lea.vmem %s5, %s328
      %s330 = smul.u32 2, %s21
      %v332 = vld [vmem:[%s301] sm:$0xf]
      %v333 = vld [vmem:[%s320] sm:$0x3]
      %v336 = vunpack.c.l.s4 1983009808
      %v337 = vunpack.c.0.s8 %v336
      %v338 = vlaneseq
      %v339 = vshrl.u32 %v338, 7
      %v340 = vsub.s32 %v337, %v339
      %v341 = vrot.slane %v332, %v340
      %v342 = vcombine.high %v341, %v341
      %v343 = vld [vmem:[%s311] sm:$0xf]
      %v345 = vrot.slane %v341, 6
      %v346 = vrot.slane %v342, 6
      %v347 = vrot.slane %v333, 6
      %348 = vrot.lane.b32.xlu0 %v345, 127
      %v349 = vpop.permute.xlu0 %348
      %350 = vrot.lane.b32.xlu0 %v346, 127
      %v351 = vpop.permute.xlu0 %350
      %352 = vrot.lane.b32.xlu0 %v347, 127
      %v353 = vpop.permute.xlu0 %352
      %vm354 = vcmask 1039360
      %v355 = vsel %vm354, %v349, %v351
      %v356 = vsel %vm354, %v351, %v353
      %v359 = vunpack.c.l.s4 1983009808
      %v360 = vunpack.c.0.s8 %v359
      %v361 = vlaneseq
      %v362 = vshrl.u32 %v361, 7
      %v363 = vsub.s32 %v360, %v362
      %v364 = vrot.slane %v343, %v363
      %v365 = vcombine.low %v364, %v364
      %vm366 = vcmask 1041408
      %v369 = vsel %vm366, %v341, %v355
      %v372 = vsel %vm366, %v342, %v356
      %vm373 = vcmask 1043456
      %v375 = vsel %vm373, %v369, %v365
      %v377 = vsel %vm373, %v372, %v364
      %v378 = vld [vmem:[%s3] sm:$0xf]
      %v379 = vld [vmem:[%s4] sm:$0xff]
      %381 = vset.pattern.permute.xlu0 0
      %382 = vperm.xlu0 %381, %v379
      %v383 = vpop.permute.xlu0 %382
      %vm385 = vcmask 97280
      %v387 = vsel %vm385, %v378, 0
      %vm389 = vcmask 1045504
      %v390 = vsel %vm389, %v375, 0
      %v392 = vsel %vm389, %v377, 0
      %394 = vmatprep.subr.bf16.mxu0 %v392
      %395 = vmatpush1.bf16.msra.mxu0 %v390
      %396 = vmatprep.subr.bf16.mxu0 0
      %397 = vmatpush1.bf16.msra.mxu0 0
      %398 = vmatprep.subr.bf16.mxu0 0
      %399 = vmatpush1.bf16.msra.mxu0 0
      %400 = vmatprep.subr.bf16.mxu0 0
      %401 = vmatpush1.bf16.msra.mxu0 0
      %402 = vmatprep.subr.bf16.mxu0 0
      %403 = vmatpush1.bf16.msra.mxu0 0
      %404 = vmatprep.subr.bf16.mxu0 0
      %405 = vmatpush1.bf16.msra.mxu0 0
      %406 = vmatprep.subr.bf16.mxu0 0
      %407 = vmatpush1.bf16.msra.mxu0 0
      %408 = vmatprep.subr.bf16.mxu0 0
      %409 = vmatpush1.bf16.msra.mxu0 0
      %410 = vmatprep.subr.bf16.mxu0 0
      %411 = vmatpush1.bf16.msra.mxu0 0
      %412 = vmatprep.subr.bf16.mxu0 0
      %413 = vmatpush1.bf16.msra.mxu0 0
      %414 = vmatprep.subr.bf16.mxu0 0
      %415 = vmatpush1.bf16.msra.mxu0 0
      %416 = vmatprep.subr.bf16.mxu0 0
      %417 = vmatpush1.bf16.msra.mxu0 0
      %418 = vmatprep.subr.bf16.mxu0 0
      %419 = vmatpush1.bf16.msra.mxu0 0
      %420 = vmatprep.subr.bf16.mxu0 0
      %421 = vmatpush1.bf16.msra.mxu0 0
      %422 = vmatprep.subr.bf16.mxu0 0
      %423 = vmatpush1.bf16.msra.mxu0 0
      %424 = vmatprep.subr.bf16.mxu0 0
      %425 = vmatpush1.bf16.msra.mxu0 0
      %426 = vmatprep.mubr.bf16.mxu0 0
      %427 = vmatmul.mubr.bf16.gmra.mrb[0].mxu0 %v387
      %v428 = vpop.f32.mrb[0].mxu0
      %v429 = vadd.f32 %v383, %v428
      %v430 = vpop.f32.mrb[0].mxu0
      %v431 = vadd.f32 %v383, %v430
      %v432 = vpop.f32.mrb[0].mxu0
      %v433 = vpop.f32.mrb[0].mxu0
      %434 = vdwg.mxu0
      %vm435 = vcmp.ge.f32.partialorder %v429, 0.0
      %vm436 = vcmp.ge.f32.partialorder %v431, 0.0
      %v437 = vmul.f32 %v429, 0.01
      %v438 = vmul.f32 %v431, 0.01
      %v439 = vsel %vm435, %v429, %v437
      %v440 = vsel %vm436, %v431, %v438
      %v441 = vpack.c.bf16 %v439, %v439
      %v442 = vpack.c.bf16 %v440, %v440
      %v445 = vunpack.c.l.b16 %v441
      %v446 = vunpack.c.l.b16 %v442
      %v447 = vpack.c.b16 %v446, %v445
      %449 = vst [vmem:[%s329] sm:$0xff] %v447
      %s450 = smul.u32 2, %s21
      %p451 = scmp.lt.s32.totalorder %s20, 1
      %s452 = scalar_select %p451, %s20, 1
      %p453 = scmp.lt.s32.totalorder %s450, 3
      %s454 = scalar_select %p453, %s450, 3
      %s455 = smul.addr %s452, 4
      %s456 = sadd.s32 %s454, %s455
      %s457 = smul.addr %s456, 4
      %s458 = scalar_lea.vmem %s5, %s457
      // Predicated region
      $region41: #{_forward.6} parent=39 // pred_check
        %p459 = pneg %p174
      $region42: #{_forward.6} parent=39 // pred_check_branch
        %461 = sbr.rel (%p459) target = $region44
      $region43: #{_forward.6} parent=39 // pred_region
        %s462 = smul.u32 2, %s21
      $region44: #{_forward.6} parent=39 // pred_fallthru
        _
    $region40: #{_forward.6} parent=5 // pred_fallthru
      _
    %p463 = scmp.le.s32.totalorder 2, %s11
    // Predicated region
    $region45: #{_forward.6} parent=5 // pred_check
      %p464 = pneg %p463
    $region46: #{_forward.6} parent=5 // pred_check_branch
      %466 = sbr.rel (%p464) target = $region48
    $region47: #{_forward.6} parent=5 // pred_region
      %s467 = ssub.s32 %s11, 2
      // Predicated region
      $region49: #{_forward.6} parent=47 // pred_check
        %p468 = pneg %p180
      $region50: #{_forward.6} parent=47 // pred_check_branch
        %470 = sbr.rel (%p468) target = $region52
      $region51: #{_forward.6} parent=47 // pred_region
        %s471 = smul.u32 2, %s23
        %p472 = scmp.lt.s32.totalorder %s22, 1
        %s473 = scalar_select %p472, %s22, 1
        %p474 = scmp.lt.s32.totalorder %s471, 3
        %s475 = scalar_select %p474, %s471, 3
        %s476 = smul.addr %s473, 4
        %s477 = sadd.s32 %s475, %s476
        %s478 = smul.addr %s477, 4
        %s479 = scalar_lea.vmem %s5, %s478
      $region52: #{_forward.6} parent=47 // pred_fallthru
        _
    $region48: #{_forward.6} parent=5 // pred_fallthru
      _
  $region6: #{_forward.6} parent=0 // loop_footer
    %s15 = sadd.s32 1, %s11
  $region7: #{_forward.6} parent=0 // loop_footer_branch
    %10 = sbr.rel target = $region3
  $region8: #{_forward.6} parent=0 // loop_exit
    _

// kernel: _forward.7
$region0: #{_forward.7}
  #allocation0 [shape = 'u32[]', space=smem, size = 0x4, offset = 0x4, fixed_abs, tag = 'smem constant byte address 0x4 - core index']
  #allocation1 [shape = 'u32[144,128]{1,0:T(1,128)}', space=vmem, size = 0x12000, scoped, tag = 'internal scratch']
  %s0 = inlined_call_operand.vmem [shape: bf16[2,8,511], index: 0, kind: input, shape index: {}]
  %s1 = inlined_call_operand.vmem [shape: bf16[2,2,8,2], index: 1, kind: input, shape index: {}]
  %s2 = inlined_call_operand.vmem [shape: bf16[12,24], index: 2, kind: input, shape index: {}]
  %s3 = inlined_call_operand.vmem [shape: f32[12,1], index: 3, kind: input, shape index: {}]
  %s4 = inlined_call_operand.vmem [shape: bf16[2,12,509], index: 4, kind: output, shape index: {}]
  %s5 = sld [smem:[#allocation0]]
  $region83: #{_forward.7} parent=0
    _
  %s7 = ssub.s32 1, %s5
  %s8 = scalar_select 0, %s7, %s5
  $region1: #{_forward.7} parent=0
    #allocation2 [shape = 'u8[16384]{0}', space=vmem, size = 0x4000, scoped, tag = 'output window, operand 0']
    loop: start=0, step=1, limit=6
    $region2: #{_forward.7} parent=1 // loop_pre_header
      _
    $region3: #{_forward.7} parent=1 // loop_header
      %s10 = sphi 0, %s14
      %p11 = scmp.ge.s32.totalorder %s10, 6
      %s17 = sphi 0, %s29
      %s18 = sphi 0, %s25
      %s19 = sphi 0, %s17
      %s20 = sphi 0, %s18
      %s21 = sphi 0, %s19
      %s22 = sphi 0, %s20
      %s34 = sphi 0, %s36
      %s37 = sphi 0, %s34
      %s38 = sphi 0, %s37
      %s54 = sphi 0, %s38
      %s62 = sphi 0, %s64
      %s65 = sphi 0, %s62
      %s66 = sphi 0, %s65
      %s82 = sphi 0, %s66
      %s86 = sphi 0, %s86
      %s88 = sphi 0, %s86
      %s89 = sphi 0, %s88
      %s103 = sphi 0, %s89
      %s107 = sphi 0, %s107
      %s109 = sphi 0, %s107
      %s110 = sphi 0, %s109
      %s124 = sphi 0, %s110
      %s132 = sphi 0, %s134
      %s135 = sphi 0, %s132
      %s136 = sphi 0, %s135
      %s152 = sphi 0, %s136
    $region4: #{_forward.7} parent=1 // loop_header_branch
      %13 = sbr.rel (%p11) target = $region8
    $region5: #{_forward.7} parent=1 // loop_body
      %s15 = ssub.s32 %s10, 1
      %s16 = ssub.s32 %s10, 2
      %s23 = sadd.s32 1, %s18
      %p24 = scmp.ge.s32.totalorder %s23, 2
      %s25 = scalar_select %p24, 0, %s23
      %s26 = sadd.s32 1, %s17
      %s27 = scalar_select %p24, %s26, %s17
      %p28 = scmp.ge.s32.totalorder %s27, 2
      %s29 = scalar_select %p28, 0, %s27
      %s30 = ssub.s32 %s17, %s29
      %s31 = ssub.s32 %s18, %s25
      %s32 = sor.u32 %s30, %s31
      %p33 = scmp.eq.s32.totalorder %s32, 0
      %s35 = sadd.s32 %s34, 1
      %s36 = scalar_select %p33, %s34, %s35
      %p39 = pneg %p33
      %p40 = scmp.eq.s32.totalorder %s10, 3
      %p41 = por %p39, %p40
      %p42 = scmp.ne.s32.totalorder %s34, %s37
      %p43 = scmp.eq.s32.totalorder %s10, 0
      %p44 = por %p42, %p43
      %p45 = scmp.ne.s32.totalorder %s34, %s37
      %p46 = scmp.eq.s32.totalorder %s15, 3
      %p47 = por %p45, %p46
      %p48 = scmp.ne.s32.totalorder %s37, %s38
      %p49 = scmp.eq.s32.totalorder %s15, 0
      %p50 = por %p48, %p49
      %p51 = scmp.ne.s32.totalorder %s37, %s38
      %p52 = scmp.eq.s32.totalorder %s16, 3
      %p53 = por %p51, %p52
      %p55 = scmp.ne.s32.totalorder %s38, %s54
      %p56 = scmp.eq.s32.totalorder %s16, 0
      %p57 = por %p55, %p56
      %s58 = ssub.s32 %s17, %s29
      %s59 = ssub.s32 %s18, %s25
      %s60 = sor.u32 %s58, %s59
      %p61 = scmp.eq.s32.totalorder %s60, 0
      %s63 = sadd.s32 %s62, 1
      %s64 = scalar_select %p61, %s62, %s63
      %p67 = pneg %p61
      %p68 = scmp.eq.s32.totalorder %s10, 3
      %p69 = por %p67, %p68
      %p70 = scmp.ne.s32.totalorder %s62, %s65
      %p71 = scmp.eq.s32.totalorder %s10, 0
      %p72 = por %p70, %p71
      %p73 = scmp.ne.s32.totalorder %s62, %s65
      %p74 = scmp.eq.s32.totalorder %s15, 3
      %p75 = por %p73, %p74
      %p76 = scmp.ne.s32.totalorder %s65, %s66
      %p77 = scmp.eq.s32.totalorder %s15, 0
      %p78 = por %p76, %p77
      %p79 = scmp.ne.s32.totalorder %s65, %s66
      %p80 = scmp.eq.s32.totalorder %s16, 3
      %p81 = por %p79, %p80
      %p83 = scmp.ne.s32.totalorder %s66, %s82
      %p84 = scmp.eq.s32.totalorder %s16, 0
      %p85 = por %p83, %p84
      %s87 = sadd.s32 %s86, 1
      %p90 = scmp.eq.s32.totalorder %s10, 3
      %p91 = scmp.ne.s32.totalorder %s86, %s88
      %p92 = scmp.eq.s32.totalorder %s10, 0
      %p93 = por %p91, %p92
      %p94 = scmp.ne.s32.totalorder %s86, %s88
      %p95 = scmp.eq.s32.totalorder %s15, 3
      %p96 = por %p94, %p95
      %p97 = scmp.ne.s32.totalorder %s88, %s89
      %p98 = scmp.eq.s32.totalorder %s15, 0
      %p99 = por %p97, %p98
      %p100 = scmp.ne.s32.totalorder %s88, %s89
      %p101 = scmp.eq.s32.totalorder %s16, 3
      %p102 = por %p100, %p101
      %p104 = scmp.ne.s32.totalorder %s89, %s103
      %p105 = scmp.eq.s32.totalorder %s16, 0
      %p106 = por %p104, %p105
      %s108 = sadd.s32 %s107, 1
      %p111 = scmp.eq.s32.totalorder %s10, 3
      %p112 = scmp.ne.s32.totalorder %s107, %s109
      %p113 = scmp.eq.s32.totalorder %s10, 0
      %p114 = por %p112, %p113
      %p115 = scmp.ne.s32.totalorder %s107, %s109
      %p116 = scmp.eq.s32.totalorder %s15, 3
      %p117 = por %p115, %p116
      %p118 = scmp.ne.s32.totalorder %s109, %s110
      %p119 = scmp.eq.s32.totalorder %s15, 0
      %p120 = por %p118, %p119
      %p121 = scmp.ne.s32.totalorder %s109, %s110
      %p122 = scmp.eq.s32.totalorder %s16, 3
      %p123 = por %p121, %p122
      %p125 = scmp.ne.s32.totalorder %s110, %s124
      %p126 = scmp.eq.s32.totalorder %s16, 0
      %p127 = por %p125, %p126
      %s128 = ssub.s32 %s17, %s29
      %s129 = ssub.s32 %s18, %s25
      %s130 = sor.u32 %s128, %s129
      %p131 = scmp.eq.s32.totalorder %s130, 0
      %s133 = sadd.s32 %s132, 1
      %s134 = scalar_select %p131, %s132, %s133
      %p137 = pneg %p131
      %p138 = scmp.eq.s32.totalorder %s10, 3
      %p139 = por %p137, %p138
      %p140 = scmp.ne.s32.totalorder %s132, %s135
      %p141 = scmp.eq.s32.totalorder %s10, 0
      %p142 = por %p140, %p141
      %p143 = scmp.ne.s32.totalorder %s132, %s135
      %p144 = scmp.eq.s32.totalorder %s15, 3
      %p145 = por %p143, %p144
      %p146 = scmp.ne.s32.totalorder %s135, %s136
      %p147 = scmp.eq.s32.totalorder %s15, 0
      %p148 = por %p146, %p147
      %p149 = scmp.ne.s32.totalorder %s135, %s136
      %p150 = scmp.eq.s32.totalorder %s16, 3
      %p151 = por %p149, %p150
      %p153 = scmp.ne.s32.totalorder %s136, %s152
      %p154 = scmp.eq.s32.totalorder %s16, 0
      %p155 = por %p153, %p154
      %p156 = scmp.le.s32.totalorder 1, %s10
      %p157 = scmp.lt.s32.totalorder %s10, 5
      %p158 = pnand %p156, %p157
      %p159 = pneg %p158
      // Predicated region
      $region9: #{_forward.7} parent=5 // pred_check
        _
      $region10: #{_forward.7} parent=5 // pred_check_branch
        %161 = sbr.rel (%p158) target = $region12
      $region11: #{_forward.7} parent=5 // pred_region
        %s162 = ssub.s32 %s10, 1
        // Predicated region
        $region13: #{_forward.7} parent=11 // pred_check
          %p163 = pneg %p99
        $region14: #{_forward.7} parent=11 // pred_check_branch
          %165 = sbr.rel (%p163) target = $region16
        $region15: #{_forward.7} parent=11 // pred_region
          _
        $region16: #{_forward.7} parent=11 // pred_fallthru
          _
        // Predicated region
        $region17: #{_forward.7} parent=11 // pred_check
          %p166 = pneg %p120
        $region18: #{_forward.7} parent=11 // pred_check_branch
          %168 = sbr.rel (%p166) target = $region20
        $region19: #{_forward.7} parent=11 // pred_region
          _
        $region20: #{_forward.7} parent=11 // pred_fallthru
          _
      $region12: #{_forward.7} parent=5 // pred_fallthru
        _
      %p169 = scmp.lt.s32.totalorder %s10, 4
      // Predicated region
      $region21: #{_forward.7} parent=5 // pred_check
        %p170 = pneg %p169
      $region22: #{_forward.7} parent=5 // pred_check_branch
        %172 = sbr.rel (%p170) target = $region24
      $region23: #{_forward.7} parent=5 // pred_region
        // Predicated region
        $region25: #{_forward.7} parent=23 // pred_check
          %p173 = pneg %p44
        $region26: #{_forward.7} parent=23 // pred_check_branch
          %175 = sbr.rel (%p173) target = $region28
        $region27: #{_forward.7} parent=23 // pred_region
          %s176 = smul.u32 2, %s18
          %p177 = scmp.lt.s32.totalorder %s17, 1
          %s178 = scalar_select %p177, %s17, 1
          %p179 = scmp.lt.s32.totalorder %s176, 3
          %s180 = scalar_select %p179, %s176, 3
          %s181 = smul.addr %s178, 4
          %s182 = sadd.s32 %s180, %s181
          %s183 = smul.addr %s182, 4
          %s184 = scalar_lea.vmem %s0, %s183
          %s185 = smul.u32 2, %s18
        $region28: #{_forward.7} parent=23 // pred_fallthru
          _
        // Predicated region
        $region29: #{_forward.7} parent=23 // pred_check
          %p186 = pneg %p72
        $region30: #{_forward.7} parent=23 // pred_check_branch
          %188 = sbr.rel (%p186) target = $region32
        $region31: #{_forward.7} parent=23 // pred_region
          %p189 = scmp.lt.s32.totalorder %s17, 1
          %s190 = scalar_select %p189, %s17, 1
          %p191 = scmp.lt.s32.totalorder %s18, 1
          %s192 = scalar_select %p191, %s18, 1
          %s193 = smul.addr %s190, 2
          %s194 = sadd.s32 %s192, %s193
          %s195 = smul.addr %s194, 4
          %s196 = scalar_lea.vmem %s1, %s195
        $region32: #{_forward.7} parent=23 // pred_fallthru
          _
      $region24: #{_forward.7} parent=5 // pred_fallthru
        _
      %p197 = scmp.le.s32.totalorder 1, %s10
      %p198 = scmp.lt.s32.totalorder %s10, 5
      %p199 = pnand %p197, %p198
      %p200 = pneg %p199
      // Predicated region
      $region33: #{_forward.7} parent=5 // pred_check
        _
      $region34: #{_forward.7} parent=5 // pred_check_branch
        %202 = sbr.rel (%p199) target = $region36
      $region35: #{_forward.7} parent=5 // pred_region
        %s203 = ssub.s32 %s10, 1
        %s204 = smul.u32 2, %s20
        %p205 = scmp.lt.s32.totalorder %s19, 1
        %s206 = scalar_select %p205, %s19, 1
        %p207 = scmp.lt.s32.totalorder %s204, 3
        %s208 = scalar_select %p207, %s204, 3
        %s209 = smul.addr %s206, 4
        %s210 = sadd.s32 %s208, %s209
        %s211 = smul.addr %s210, 4
        %s212 = scalar_lea.vmem %s0, %s211
        %p213 = pneg %p50
        %p214 = pneg %p47
        %p215 = scmp.lt.s32.totalorder %s19, 1
        %s216 = scalar_select %p215, %s19, 1
        %p217 = scmp.lt.s32.totalorder %s20, 1
        %s218 = scalar_select %p217, %s20, 1
        %s219 = smul.addr %s216, 2
        %s220 = sadd.s32 %s218, %s219
        %s221 = smul.addr %s220, 4
        %s222 = scalar_lea.vmem %s1, %s221
        %p223 = pneg %p78
        %p224 = pneg %p75
        %p225 = pneg %p99
        %p226 = pneg %p96
        %p227 = pneg %p120
        %p228 = pneg %p117
        %p229 = pneg %p148
        %p230 = pneg %p145
        %s231 = sand.u32 %s135, 1
        %s232 = sand.u32 %s135, 1
        %s233 = smul.addr %s232, 16
        %s234 = scalar_lea.vmem [#allocation2], %s233
        %s235 = smul.u32 2, %s20
        %p236 = scmp.lt.s32.totalorder %s19, 1
        %s237 = scalar_select %p236, %s19, 1
        %p238 = scmp.lt.s32.totalorder %s235, 3
        %s239 = scalar_select %p238, %s235, 3
        %s240 = smul.addr %s237, 4
        %s241 = sadd.s32 %s239, %s240
        %s242 = smul.addr %s241, 4
        %s243 = scalar_lea.vmem %s0, %s242
        %s244 = smul.u32 2, %s20
        %p245 = scmp.lt.s32.totalorder %s19, 1
        %s246 = scalar_select %p245, %s19, 1
        %p247 = scmp.lt.s32.totalorder %s20, 1
        %s248 = scalar_select %p247, %s20, 1
        %s249 = smul.addr %s246, 2
        %s250 = sadd.s32 %s248, %s249
        %s251 = smul.addr %s250, 4
        %s252 = scalar_lea.vmem %s1, %s251
        %s253 = smul.u32 2, %s20
        %v255 = vld [vmem:[%s243] sm:$0xff]
        %v256 = vld [vmem:[%s252] sm:$0xf]
        %v258 = vunpack.c.l.b16 %v255
        %v259 = vunpack.c.h.b16 %v255
        %v260 = vpack.c.b16 %v258, %v258
        %v261 = vpack.c.b16 %v259, %v259
        %v263 = vrot.slane %v260, 4
        %v264 = vrot.slane %v261, 4
        %v265 = vrot.slane %v256, 4
        %266 = vrot.lane.b32.xlu0 %v263, 127
        %v267 = vpop.permute.xlu0 %266
        %268 = vrot.lane.b32.xlu0 %v264, 127
        %v269 = vpop.permute.xlu0 %268
        %270 = vrot.lane.b32.xlu0 %v265, 127
        %v271 = vpop.permute.xlu0 %270
        %vm272 = vcmask 1039360
        %v273 = vsel %vm272, %v267, %v269
        %v274 = vsel %vm272, %v269, %v271
        %275 = vrot.lane.b32.xlu0 %v260, 126
        %v276 = vpop.permute.xlu0 %275
        %277 = vrot.lane.b32.xlu0 %v261, 126
        %v278 = vpop.permute.xlu0 %277
        %279 = vrot.lane.b32.xlu0 %v256, 126
        %v280 = vpop.permute.xlu0 %279
        %vm281 = vcmask 1031168
        %v282 = vsel %vm281, %v276, %v278
        %v283 = vsel %vm281, %v278, %v280
        %vm284 = vcmask 1043456
        %v287 = vsel %vm284, %v260, %v273
        %v291 = vsel %vm284, %v261, %v274
        %v293 = vld [vmem:[%s2] sm:$0xf]
        %v294 = vld [vmem:[%s2 + $0x4] sm:$0x3]
        %v295 = vld [vmem:[%s3] sm:$0xff]
        %v296 = vld [vmem:[%s3 + $0x8] sm:$0xf]
        %298 = vset.pattern.permute.xlu0 0
        %299 = vperm.xlu0 %298, %v295
        %v300 = vpop.permute.xlu0 %299
        %303 = vset.pattern.permute.xlu0 0
        %304 = vperm.xlu0 %303, %v296
        %v305 = vpop.permute.xlu0 %304
        %v309 = vunpack.c.l.b16 %v293
        %v310 = vunpack.c.l.b16 %v294
        %v311 = vpack.c.b16 %v310, %v309
        %vm312 = vcmask 195584
        %v314 = vsel %vm312, %v311, 0
        %v317 = vsel %vm284, %v282, 0
        %v320 = vsel %vm284, %v283, 0
        %322 = vmatprep.subr.bf16.mxu0 %v291
        %323 = vmatpush1.bf16.msra.mxu0 %v287
        %324 = vmatprep.subr.bf16.mxu0 %v320
        %325 = vmatpush1.bf16.msra.mxu0 %v317
        %326 = vmatprep.subr.bf16.mxu0 0
        %327 = vmatpush1.bf16.msra.mxu0 0
        %328 = vmatprep.subr.bf16.mxu0 0
        %329 = vmatpush1.bf16.msra.mxu0 0
        %330 = vmatprep.subr.bf16.mxu0 0
        %331 = vmatpush1.bf16.msra.mxu0 0
        %332 = vmatprep.subr.bf16.mxu0 0
        %333 = vmatpush1.bf16.msra.mxu0 0
        %334 = vmatprep.subr.bf16.mxu0 0
        %335 = vmatpush1.bf16.msra.mxu0 0
        %336 = vmatprep.subr.bf16.mxu0 0
        %337 = vmatpush1.bf16.msra.mxu0 0
        %338 = vmatprep.subr.bf16.mxu0 0
        %339 = vmatpush1.bf16.msra.mxu0 0
        %340 = vmatprep.subr.bf16.mxu0 0
        %341 = vmatpush1.bf16.msra.mxu0 0
        %342 = vmatprep.subr.bf16.mxu0 0
        %343 = vmatpush1.bf16.msra.mxu0 0
        %344 = vmatprep.subr.bf16.mxu0 0
        %345 = vmatpush1.bf16.msra.mxu0 0
        %346 = vmatprep.subr.bf16.mxu0 0
        %347 = vmatpush1.bf16.msra.mxu0 0
        %348 = vmatprep.subr.bf16.mxu0 0
        %349 = vmatpush1.bf16.msra.mxu0 0
        %350 = vmatprep.subr.bf16.mxu0 0
        %351 = vmatpush1.bf16.msra.mxu0 0
        %352 = vmatprep.subr.bf16.mxu0 0
        %353 = vmatpush1.bf16.msra.mxu0 0
        %354 = vmatprep.mubr.bf16.mxu0 0
        %355 = vmatmul.mubr.bf16.gmra.mrb[0].mxu0 %v314
        %v356 = vpop.f32.mrb[0].mxu0
        %v357 = vadd.f32 %v300, %v356
        %v358 = vpop.f32.mrb[0].mxu0
        %v359 = vadd.f32 %v300, %v358
        %v360 = vpop.f32.mrb[0].mxu0
        %v361 = vadd.f32 %v305, %v360
        %v362 = vpop.f32.mrb[0].mxu0
        %v363 = vadd.f32 %v305, %v362
        %364 = vdwg.mxu0
        %v365 = vpack.c.bf16 %v361, %v357
        %v366 = vpack.c.bf16 %v363, %v359
        %v369 = vunpack.c.l.b16 %v365
        %v370 = vunpack.c.l.b16 %v366
        %v371 = vunpack.c.h.b16 %v365
        %v372 = vunpack.c.h.b16 %v366
        %v373 = vpack.c.b16 %v370, %v369
        %v374 = vpack.c.b16 %v372, %v371
        %377 = vst [vmem:[%s234] sm:$0xff] %v373
        %378 = vst [vmem:[%s234 + $0x8] sm:$0x33] %v374
        %s379 = sand.u32 %s135, 1
        %s380 = sand.u32 %s135, 1
        %s381 = smul.addr %s380, 16
        %s382 = scalar_lea.vmem [#allocation2], %s381
        // Predicated region
        $region37: #{_forward.7} parent=35 // pred_check
          %p383 = pneg %p145
        $region38: #{_forward.7} parent=35 // pred_check_branch
          %385 = sbr.rel (%p383) target = $region40
        $region39: #{_forward.7} parent=35 // pred_region
          %s386 = smul.u32 2, %s20
          %s387 = smul.addr %s19, 8
          %s388 = sadd.s32 %s386, %s387
          %s389 = smul.addr %s388, 4
          %s390 = scalar_lea.vmem %s4, %s389
          // Predicated region
          $region41: #{_forward.7} parent=39 // pred_check
            _
          $region42: #{_forward.7} parent=39 // pred_check_branch
            %392 = sbr.rel (0) target = $region44
          $region43: #{_forward.7} parent=39 // pred_region
            // Predicated region
            $region45: #{_forward.7} parent=43 // pred_check
              _
            $region46: #{_forward.7} parent=43 // pred_check_branch
              %394 = sbr.rel (0) target = $region48
            $region47: #{_forward.7} parent=43 // pred_region
              // Predicated region
              $region60: #{_forward.7} parent=47 // pred_check
                _
              $region61: #{_forward.7} parent=47 // pred_check_branch
                %411 = sbr.rel (0) target = $region63
              $region62: #{_forward.7} parent=47 // pred_region
                loop: start=0, step=1, limit=1
                $region64: #{_forward.7} parent=62 // loop_pre_header
                  _
                $region65: #{_forward.7} parent=62 // loop_header
                  %s413 = sphi 0, %s417
                  %p414 = scmp.ge.s32.totalorder %s413, 1
                  %s418 = sphi %s382, %s382
                  %s419 = sphi %s390, %s390
                $region66: #{_forward.7} parent=62 // loop_header_branch
                  %416 = sbr.rel (%p414) target = $region70
                $region67: #{_forward.7} parent=62 // loop_body
                  %v420 = vld [vmem:[%s418] sm:$0xff]
                  %421 = vst [vmem:[%s419] sm:$0xff] %v420
                  %v422 = vld [vmem:[%s418 + $0x8] sm:$0xff]
                  %423 = vst [vmem:[%s419 + $0x10] sm:$0xff] %v422
                $region68: #{_forward.7} parent=62 // loop_footer
                  %s417 = sadd.s32 1, %s413
                $region69: #{_forward.7} parent=62 // loop_footer_branch
                  %412 = sbr.rel target = $region65
                $region70: #{_forward.7} parent=62 // loop_exit
                  _
              $region63: #{_forward.7} parent=47 // pred_fallthru
                _
              // Predicated region
              $region71: #{_forward.7} parent=47 // pred_check
                _
              $region72: #{_forward.7} parent=47 // pred_check_branch
                %425 = sbr.rel target = $region74
              $region73: #{_forward.7} parent=47 // pred_region
                _
              $region74: #{_forward.7} parent=47 // pred_fallthru
                _
            $region48: #{_forward.7} parent=43 // pred_fallthru
              _
            // Predicated region
            $region49: #{_forward.7} parent=43 // pred_check
              _
            $region50: #{_forward.7} parent=43 // pred_check_branch
              %396 = sbr.rel target = $region52
            $region51: #{_forward.7} parent=43 // pred_region
              loop: start=0, step=1, limit=1
              $region53: #{_forward.7} parent=51 // loop_pre_header
                _
              $region54: #{_forward.7} parent=51 // loop_header
                %s399 = sphi 0, %s403
                %p400 = scmp.ge.s32.totalorder %s399, 1
                %s404 = sphi %s382, %s382
                %s405 = sphi %s390, %s390
              $region55: #{_forward.7} parent=51 // loop_header_branch
                %402 = sbr.rel (%p400) target = $region59
              $region56: #{_forward.7} parent=51 // loop_body
                %v406 = vld [vmem:[%s404] sm:$0xff]
                %407 = vst [vmem:[%s405] sm:$0xff] %v406
                %v408 = vld [vmem:[%s404 + $0x8] sm:$0xff]
                %409 = vst [vmem:[%s405 + $0x10] sm:$0xff] %v408
              $region57: #{_forward.7} parent=51 // loop_footer
                %s403 = sadd.s32 1, %s399
              $region58: #{_forward.7} parent=51 // loop_footer_branch
                %398 = sbr.rel target = $region54
              $region59: #{_forward.7} parent=51 // loop_exit
                _
            $region52: #{_forward.7} parent=43 // pred_fallthru
              _
          $region44: #{_forward.7} parent=39 // pred_fallthru
            _
          %426 = vnop
        $region40: #{_forward.7} parent=35 // pred_fallthru
          _
      $region36: #{_forward.7} parent=5 // pred_fallthru
        _
      %p427 = scmp.le.s32.totalorder 2, %s10
      // Predicated region
      $region75: #{_forward.7} parent=5 // pred_check
        %p428 = pneg %p427
      $region76: #{_forward.7} parent=5 // pred_check_branch
        %430 = sbr.rel (%p428) target = $region78
      $region77: #{_forward.7} parent=5 // pred_region
        %s431 = ssub.s32 %s10, 2
        // Predicated region
        $region79: #{_forward.7} parent=77 // pred_check
          %p432 = pneg %p151
        $region80: #{_forward.7} parent=77 // pred_check_branch
          %434 = sbr.rel (%p432) target = $region82
        $region81: #{_forward.7} parent=77 // pred_region
          %s435 = sand.u32 %s136, 1
          %s436 = sand.u32 %s136, 1
          %s437 = smul.addr %s436, 16
          %s438 = scalar_lea.vmem [#allocation2], %s437
        $region82: #{_forward.7} parent=77 // pred_fallthru
          _
      $region78: #{_forward.7} parent=5 // pred_fallthru
        _
    $region6: #{_forward.7} parent=1 // loop_footer
      %s14 = sadd.s32 1, %s10
    $region7: #{_forward.7} parent=1 // loop_footer_branch
      %9 = sbr.rel target = $region3
    $region8: #{_forward.7} parent=1 // loop_exit
      _

// kernel: _forward.9
$region0: #{_forward.9}
  #allocation0 [shape = 'u32[]', space=smem, size = 0x4, offset = 0x4, fixed_abs, tag = 'smem constant byte address 0x4 - core index']
  #allocation1 [shape = 'u32[144,128]{1,0:T(1,128)}', space=vmem, size = 0x12000, scoped, tag = 'internal scratch']
  %s0 = inlined_call_operand.vmem [shape: bf16[2,8,509], index: 0, kind: input, shape index: {}]
  %s1 = inlined_call_operand.vmem [shape: bf16[2,4,1023], index: 1, kind: input, shape index: {}]
  %s2 = inlined_call_operand.vmem [shape: bf16[2,4,8,1], index: 2, kind: input, shape index: {}]
  %s3 = inlined_call_operand.vmem [shape: bf16[2,4,4,2], index: 3, kind: input, shape index: {}]
  %s4 = inlined_call_operand.vmem [shape: bf16[129,258], index: 4, kind: input, shape index: {}]
  %s5 = inlined_call_operand.vmem [shape: bf16[4,36], index: 5, kind: input, shape index: {}]
  %s6 = inlined_call_operand.vmem [shape: f32[4,1], index: 6, kind: input, shape index: {}]
  %s7 = inlined_call_operand.vmem [shape: bf16[2,4], index: 7, kind: input, shape index: {}]
  %s8 = inlined_call_operand.vmem [shape: f32[2,1], index: 8, kind: input, shape index: {}]
  %s9 = inlined_call_operand.hbm [shape: f32[2,2,1016], index: 9, kind: output, shape index: {}]
  %s10 = sld [smem:[#allocation0]]
  $region69: #{_forward.9} parent=0
    _
  %s12 = ssub.s32 1, %s10
  %s13 = scalar_select 0, %s12, %s10
  $region1: #{_forward.9} parent=0
    #allocation2 [shape = 'u8[4096]{0}', space=vmem, size = 0x1000, scoped, tag = 'output window, operand 0']
    #allocation3 [shape = 's32[2]{0}', space=sflag, size = 0x8, scoped, tag = 'scoped memory for _forward.9']
    %14 = vsyncpa [#allocation3], 0
    %s15 = scalar_lea.sflag [#allocation3], 1
    %16 = vsyncpa %s15, 0
    loop: start=0, step=1, limit=10
    $region2: #{_forward.9} parent=1 // loop_pre_header
      _
    $region3: #{_forward.9} parent=1 // loop_header
      %s18 = sphi 0, %s22
      %p19 = scmp.ge.s32.totalorder %s18, 10
      %s25 = sphi 0, %s37
      %s26 = sphi 0, %s33
      %s27 = sphi 0, %s25
      %s28 = sphi 0, %s26
      %s29 = sphi 0, %s27
      %s30 = sphi 0, %s28
      %s42 = sphi 0, %s44
      %s45 = sphi 0, %s42
      %s46 = sphi 0, %s45
      %s62 = sphi 0, %s46
      %s70 = sphi 0, %s72
      %s73 = sphi 0, %s70
      %s74 = sphi 0, %s73
      %s90 = sphi 0, %s74
      %s98 = sphi 0, %s100
      %s101 = sphi 0, %s98
      %s102 = sphi 0, %s101
      %s118 = sphi 0, %s102
      %s126 = sphi 0, %s128
      %s129 = sphi 0, %s126
      %s130 = sphi 0, %s129
      %s146 = sphi 0, %s130
      %s150 = sphi 0, %s150
      %s152 = sphi 0, %s150
      %s153 = sphi 0, %s152
      %s167 = sphi 0, %s153
      %s171 = sphi 0, %s171
      %s173 = sphi 0, %s171
      %s174 = sphi 0, %s173
      %s188 = sphi 0, %s174
      %s192 = sphi 0, %s192
      %s194 = sphi 0, %s192
      %s195 = sphi 0, %s194
      %s209 = sphi 0, %s195
      %s213 = sphi 0, %s213
      %s215 = sphi 0, %s213
      %s216 = sphi 0, %s215
      %s230 = sphi 0, %s216
      %s234 = sphi 0, %s234
      %s236 = sphi 0, %s234
      %s237 = sphi 0, %s236
      %s251 = sphi 0, %s237
      %s259 = sphi 0, %s261
      %s262 = sphi 0, %s259
      %s263 = sphi 0, %s262
      %s279 = sphi 0, %s263
    $region4: #{_forward.9} parent=1 // loop_header_branch
      %21 = sbr.rel (%p19) target = $region8
    $region5: #{_forward.9} parent=1 // loop_body
      %s23 = ssub.s32 %s18, 1
      %s24 = ssub.s32 %s18, 2
      %s31 = sadd.s32 1, %s26
      %p32 = scmp.ge.s32.totalorder %s31, 4
      %s33 = scalar_select %p32, 0, %s31
      %s34 = sadd.s32 1, %s25
      %s35 = scalar_select %p32, %s34, %s25
      %p36 = scmp.ge.s32.totalorder %s35, 2
      %s37 = scalar_select %p36, 0, %s35
      %s38 = ssub.s32 %s25, %s37
      %s39 = ssub.s32 %s26, %s33
      %s40 = sor.u32 %s38, %s39
      %p41 = scmp.eq.s32.totalorder %s40, 0
      %s43 = sadd.s32 %s42, 1
      %s44 = scalar_select %p41, %s42, %s43
      %p47 = pneg %p41
      %p48 = scmp.eq.s32.totalorder %s18, 7
      %p49 = por %p47, %p48
      %p50 = scmp.ne.s32.totalorder %s42, %s45
      %p51 = scmp.eq.s32.totalorder %s18, 0
      %p52 = por %p50, %p51
      %p53 = scmp.ne.s32.totalorder %s42, %s45
      %p54 = scmp.eq.s32.totalorder %s23, 7
      %p55 = por %p53, %p54
      %p56 = scmp.ne.s32.totalorder %s45, %s46
      %p57 = scmp.eq.s32.totalorder %s23, 0
      %p58 = por %p56, %p57
      %p59 = scmp.ne.s32.totalorder %s45, %s46
      %p60 = scmp.eq.s32.totalorder %s24, 7
      %p61 = por %p59, %p60
      %p63 = scmp.ne.s32.totalorder %s46, %s62
      %p64 = scmp.eq.s32.totalorder %s24, 0
      %p65 = por %p63, %p64
      %s66 = ssub.s32 %s25, %s37
      %s67 = ssub.s32 %s26, %s33
      %s68 = sor.u32 %s66, %s67
      %p69 = scmp.eq.s32.totalorder %s68, 0
      %s71 = sadd.s32 %s70, 1
      %s72 = scalar_select %p69, %s70, %s71
      %p75 = pneg %p69
      %p76 = scmp.eq.s32.totalorder %s18, 7
      %p77 = por %p75, %p76
      %p78 = scmp.ne.s32.totalorder %s70, %s73
      %p79 = scmp.eq.s32.totalorder %s18, 0
      %p80 = por %p78, %p79
      %p81 = scmp.ne.s32.totalorder %s70, %s73
      %p82 = scmp.eq.s32.totalorder %s23, 7
      %p83 = por %p81, %p82
      %p84 = scmp.ne.s32.totalorder %s73, %s74
      %p85 = scmp.eq.s32.totalorder %s23, 0
      %p86 = por %p84, %p85
      %p87 = scmp.ne.s32.totalorder %s73, %s74
      %p88 = scmp.eq.s32.totalorder %s24, 7
      %p89 = por %p87, %p88
      %p91 = scmp.ne.s32.totalorder %s74, %s90
      %p92 = scmp.eq.s32.totalorder %s24, 0
      %p93 = por %p91, %p92
      %s94 = ssub.s32 %s25, %s37
      %s95 = ssub.s32 %s26, %s33
      %s96 = sor.u32 %s94, %s95
      %p97 = scmp.eq.s32.totalorder %s96, 0
      %s99 = sadd.s32 %s98, 1
      %s100 = scalar_select %p97, %s98, %s99
      %p103 = pneg %p97
      %p104 = scmp.eq.s32.totalorder %s18, 7
      %p105 = por %p103, %p104
      %p106 = scmp.ne.s32.totalorder %s98, %s101
      %p107 = scmp.eq.s32.totalorder %s18, 0
      %p108 = por %p106, %p107
      %p109 = scmp.ne.s32.totalorder %s98, %s101
      %p110 = scmp.eq.s32.totalorder %s23, 7
      %p111 = por %p109, %p110
      %p112 = scmp.ne.s32.totalorder %s101, %s102
      %p113 = scmp.eq.s32.totalorder %s23, 0
      %p114 = por %p112, %p113
      %p115 = scmp.ne.s32.totalorder %s101, %s102
      %p116 = scmp.eq.s32.totalorder %s24, 7
      %p117 = por %p115, %p116
      %p119 = scmp.ne.s32.totalorder %s102, %s118
      %p120 = scmp.eq.s32.totalorder %s24, 0
      %p121 = por %p119, %p120
      %s122 = ssub.s32 %s25, %s37
      %s123 = ssub.s32 %s26, %s33
      %s124 = sor.u32 %s122, %s123
      %p125 = scmp.eq.s32.totalorder %s124, 0
      %s127 = sadd.s32 %s126, 1
      %s128 = scalar_select %p125, %s126, %s127
      %p131 = pneg %p125
      %p132 = scmp.eq.s32.totalorder %s18, 7
      %p133 = por %p131, %p132
      %p134 = scmp.ne.s32.totalorder %s126, %s129
      %p135 = scmp.eq.s32.totalorder %s18, 0
      %p136 = por %p134, %p135
      %p137 = scmp.ne.s32.totalorder %s126, %s129
      %p138 = scmp.eq.s32.totalorder %s23, 7
      %p139 = por %p137, %p138
      %p140 = scmp.ne.s32.totalorder %s129, %s130
      %p141 = scmp.eq.s32.totalorder %s23, 0
      %p142 = por %p140, %p141
      %p143 = scmp.ne.s32.totalorder %s129, %s130
      %p144 = scmp.eq.s32.totalorder %s24, 7
      %p145 = por %p143, %p144
      %p147 = scmp.ne.s32.totalorder %s130, %s146
      %p148 = scmp.eq.s32.totalorder %s24, 0
      %p149 = por %p147, %p148
      %s151 = sadd.s32 %s150, 1
      %p154 = scmp.eq.s32.totalorder %s18, 7
      %p155 = scmp.ne.s32.totalorder %s150, %s152
      %p156 = scmp.eq.s32.totalorder %s18, 0
      %p157 = por %p155, %p156
      %p158 = scmp.ne.s32.totalorder %s150, %s152
      %p159 = scmp.eq.s32.totalorder %s23, 7
      %p160 = por %p158, %p159
      %p161 = scmp.ne.s32.totalorder %s152, %s153
      %p162 = scmp.eq.s32.totalorder %s23, 0
      %p163 = por %p161, %p162
      %p164 = scmp.ne.s32.totalorder %s152, %s153
      %p165 = scmp.eq.s32.totalorder %s24, 7
      %p166 = por %p164, %p165
      %p168 = scmp.ne.s32.totalorder %s153, %s167
      %p169 = scmp.eq.s32.totalorder %s24, 0
      %p170 = por %p168, %p169
      %s172 = sadd.s32 %s171, 1
      %p175 = scmp.eq.s32.totalorder %s18, 7
      %p176 = scmp.ne.s32.totalorder %s171, %s173
      %p177 = scmp.eq.s32.totalorder %s18, 0
      %p178 = por %p176, %p177
      %p179 = scmp.ne.s32.totalorder %s171, %s173
      %p180 = scmp.eq.s32.totalorder %s23, 7
      %p181 = por %p179, %p180
      %p182 = scmp.ne.s32.totalorder %s173, %s174
      %p183 = scmp.eq.s32.totalorder %s23, 0
      %p184 = por %p182, %p183
      %p185 = scmp.ne.s32.totalorder %s173, %s174
      %p186 = scmp.eq.s32.totalorder %s24, 7
      %p187 = por %p185, %p186
      %p189 = scmp.ne.s32.totalorder %s174, %s188
      %p190 = scmp.eq.s32.totalorder %s24, 0
      %p191 = por %p189, %p190
      %s193 = sadd.s32 %s192, 1
      %p196 = scmp.eq.s32.totalorder %s18, 7
      %p197 = scmp.ne.s32.totalorder %s192, %s194
      %p198 = scmp.eq.s32.totalorder %s18, 0
      %p199 = por %p197, %p198
      %p200 = scmp.ne.s32.totalorder %s192, %s194
      %p201 = scmp.eq.s32.totalorder %s23, 7
      %p202 = por %p200, %p201
      %p203 = scmp.ne.s32.totalorder %s194, %s195
      %p204 = scmp.eq.s32.totalorder %s23, 0
      %p205 = por %p203, %p204
      %p206 = scmp.ne.s32.totalorder %s194, %s195
      %p207 = scmp.eq.s32.totalorder %s24, 7
      %p208 = por %p206, %p207
      %p210 = scmp.ne.s32.totalorder %s195, %s209
      %p211 = scmp.eq.s32.totalorder %s24, 0
      %p212 = por %p210, %p211
      %s214 = sadd.s32 %s213, 1
      %p217 = scmp.eq.s32.totalorder %s18, 7
      %p218 = scmp.ne.s32.totalorder %s213, %s215
      %p219 = scmp.eq.s32.totalorder %s18, 0
      %p220 = por %p218, %p219
      %p221 = scmp.ne.s32.totalorder %s213, %s215
      %p222 = scmp.eq.s32.totalorder %s23, 7
      %p223 = por %p221, %p222
      %p224 = scmp.ne.s32.totalorder %s215, %s216
      %p225 = scmp.eq.s32.totalorder %s23, 0
      %p226 = por %p224, %p225
      %p227 = scmp.ne.s32.totalorder %s215, %s216
      %p228 = scmp.eq.s32.totalorder %s24, 7
      %p229 = por %p227, %p228
      %p231 = scmp.ne.s32.totalorder %s216, %s230
      %p232 = scmp.eq.s32.totalorder %s24, 0
      %p233 = por %p231, %p232
      %s235 = sadd.s32 %s234, 1
      %p238 = scmp.eq.s32.totalorder %s18, 7
      %p239 = scmp.ne.s32.totalorder %s234, %s236
      %p240 = scmp.eq.s32.totalorder %s18, 0
      %p241 = por %p239, %p240
      %p242 = scmp.ne.s32.totalorder %s234, %s236
      %p243 = scmp.eq.s32.totalorder %s23, 7
      %p244 = por %p242, %p243
      %p245 = scmp.ne.s32.totalorder %s236, %s237
      %p246 = scmp.eq.s32.totalorder %s23, 0
      %p247 = por %p245, %p246
      %p248 = scmp.ne.s32.totalorder %s236, %s237
      %p249 = scmp.eq.s32.totalorder %s24, 7
      %p250 = por %p248, %p249
      %p252 = scmp.ne.s32.totalorder %s237, %s251
      %p253 = scmp.eq.s32.totalorder %s24, 0
      %p254 = por %p252, %p253
      %s255 = ssub.s32 %s25, %s37
      %s256 = ssub.s32 %s26, %s33
      %s257 = sor.u32 %s255, %s256
      %p258 = scmp.eq.s32.totalorder %s257, 0
      %s260 = sadd.s32 %s259, 1
      %s261 = scalar_select %p258, %s259, %s260
      %p264 = pneg %p258
      %p265 = scmp.eq.s32.totalorder %s18, 7
      %p266 = por %p264, %p265
      %p267 = scmp.ne.s32.totalorder %s259, %s262
      %p268 = scmp.eq.s32.totalorder %s18, 0
      %p269 = por %p267, %p268
      %p270 = scmp.ne.s32.totalorder %s259, %s262
      %p271 = scmp.eq.s32.totalorder %s23, 7
      %p272 = por %p270, %p271
      %p273 = scmp.ne.s32.totalorder %s262, %s263
      %p274 = scmp.eq.s32.totalorder %s23, 0
      %p275 = por %p273, %p274
      %p276 = scmp.ne.s32.totalorder %s262, %s263
      %p277 = scmp.eq.s32.totalorder %s24, 7
      %p278 = por %p276, %p277
      %p280 = scmp.ne.s32.totalorder %s263, %s279
      %p281 = scmp.eq.s32.totalorder %s24, 0
      %p282 = por %p280, %p281
      %p283 = scmp.le.s32.totalorder 1, %s18
      %p284 = scmp.lt.s32.totalorder %s18, 9
      %p285 = pnand %p283, %p284
      %p286 = pneg %p285
      // Predicated region
      $region9: #{_forward.9} parent=5 // pred_check
        _
      $region10: #{_forward.9} parent=5 // pred_check_branch
        %288 = sbr.rel (%p285) target = $region12
      $region11: #{_forward.9} parent=5 // pred_region
        %s289 = ssub.s32 %s18, 1
        // Predicated region
        $region13: #{_forward.9} parent=11 // pred_check
          %p290 = pneg %p163
        $region14: #{_forward.9} parent=11 // pred_check_branch
          %292 = sbr.rel (%p290) target = $region16
        $region15: #{_forward.9} parent=11 // pred_region
          _
        $region16: #{_forward.9} parent=11 // pred_fallthru
          _
        // Predicated region
        $region17: #{_forward.9} parent=11 // pred_check
          %p293 = pneg %p184
        $region18: #{_forward.9} parent=11 // pred_check_branch
          %295 = sbr.rel (%p293) target = $region20
        $region19: #{_forward.9} parent=11 // pred_region
          _
        $region20: #{_forward.9} parent=11 // pred_fallthru
          _
        // Predicated region
        $region21: #{_forward.9} parent=11 // pred_check
          %p296 = pneg %p205
        $region22: #{_forward.9} parent=11 // pred_check_branch
          %298 = sbr.rel (%p296) target = $region24
        $region23: #{_forward.9} parent=11 // pred_region
          _
        $region24: #{_forward.9} parent=11 // pred_fallthru
          _
        // Predicated region
        $region25: #{_forward.9} parent=11 // pred_check
          %p299 = pneg %p226
        $region26: #{_forward.9} parent=11 // pred_check_branch
          %301 = sbr.rel (%p299) target = $region28
        $region27: #{_forward.9} parent=11 // pred_region
          _
        $region28: #{_forward.9} parent=11 // pred_fallthru
          _
        // Predicated region
        $region29: #{_forward.9} parent=11 // pred_check
          %p302 = pneg %p247
        $region30: #{_forward.9} parent=11 // pred_check_branch
          %304 = sbr.rel (%p302) target = $region32
        $region31: #{_forward.9} parent=11 // pred_region
          _
        $region32: #{_forward.9} parent=11 // pred_fallthru
          _
      $region12: #{_forward.9} parent=5 // pred_fallthru
        _
      %p305 = scmp.lt.s32.totalorder %s18, 8
      // Predicated region
      $region33: #{_forward.9} parent=5 // pred_check
        %p306 = pneg %p305
      $region34: #{_forward.9} parent=5 // pred_check_branch
        %308 = sbr.rel (%p306) target = $region36
      $region35: #{_forward.9} parent=5 // pred_region
        // Predicated region
        $region37: #{_forward.9} parent=35 // pred_check
          %p309 = pneg %p52
        $region38: #{_forward.9} parent=35 // pred_check_branch
          %311 = sbr.rel (%p309) target = $region40
        $region39: #{_forward.9} parent=35 // pred_region
          %p312 = scmp.lt.s32.totalorder %s25, 1
          %s313 = scalar_select %p312, %s25, 1
          %p314 = scmp.lt.s32.totalorder %s26, 3
          %s315 = scalar_select %p314, %s26, 3
          %s316 = smul.addr %s313, 4
          %s317 = sadd.s32 %s315, %s316
          %s318 = smul.addr %s317, 4
          %s319 = scalar_lea.vmem %s0, %s318
        $region40: #{_forward.9} parent=35 // pred_fallthru
          _
        // Predicated region
        $region41: #{_forward.9} parent=35 // pred_check
          %p320 = pneg %p80
        $region42: #{_forward.9} parent=35 // pred_check_branch
          %322 = sbr.rel (%p320) target = $region44
        $region43: #{_forward.9} parent=35 // pred_region
          %s323 = smul.u32 2, %s26
          %p324 = scmp.lt.s32.totalorder %s25, 1
          %s325 = scalar_select %p324, %s25, 1
          %p326 = scmp.lt.s32.totalorder %s323, 7
          %s327 = scalar_select %p326, %s323, 7
          %s328 = smul.addr %s325, 8
          %s329 = sadd.s32 %s327, %s328
          %s330 = smul.addr %s329, 2
          %s331 = scalar_lea.vmem %s1, %s330
          %s332 = smul.u32 2, %s26
        $region44: #{_forward.9} parent=35 // pred_fallthru
          _
        // Predicated region
        $region45: #{_forward.9} parent=35 // pred_check
          %p333 = pneg %p108
        $region46: #{_forward.9} parent=35 // pred_check_branch
          %335 = sbr.rel (%p333) target = $region48
        $region47: #{_forward.9} parent=35 // pred_region
          %p336 = scmp.lt.s32.totalorder %s25, 1
          %s337 = scalar_select %p336, %s25, 1
          %p338 = scmp.lt.s32.totalorder %s26, 3
          %s339 = scalar_select %p338, %s26, 3
          %s340 = smul.addr %s337, 4
          %s341 = sadd.s32 %s339, %s340
          %s342 = smul.addr %s341, 4
          %s343 = scalar_lea.vmem %s2, %s342
        $region48: #{_forward.9} parent=35 // pred_fallthru
          _
        // Predicated region
        $region49: #{_forward.9} parent=35 // pred_check
          %p344 = pneg %p136
        $region50: #{_forward.9} parent=35 // pred_check_branch
          %346 = sbr.rel (%p344) target = $region52
        $region51: #{_forward.9} parent=35 // pred_region
          %p347 = scmp.lt.s32.totalorder %s25, 1
          %s348 = scalar_select %p347, %s25, 1
          %p349 = scmp.lt.s32.totalorder %s26, 3
          %s350 = scalar_select %p349, %s26, 3
          %s351 = smul.addr %s348, 4
          %s352 = sadd.s32 %s350, %s351
          %s353 = smul.addr %s352, 2
          %s354 = scalar_lea.vmem %s3, %s353
        $region52: #{_forward.9} parent=35 // pred_fallthru
          _
      $region36: #{_forward.9} parent=5 // pred_fallthru
        _
      %p355 = scmp.le.s32.totalorder 1, %s18
      %p356 = scmp.lt.s32.totalorder %s18, 9
      %p357 = pnand %p355, %p356
      %p358 = pneg %p357
      // Predicated region
      $region53: #{_forward.9} parent=5 // pred_check
        _
      $region54: #{_forward.9} parent=5 // pred_check_branch
        %360 = sbr.rel (%p357) target = $region56
      $region55: #{_forward.9} parent=5 // pred_region
        %s361 = ssub.s32 %s18, 1
        %p362 = scmp.lt.s32.totalorder %s27, 1
        %s363 = scalar_select %p362, %s27, 1
        %p364 = scmp.lt.s32.totalorder %s28, 3
        %s365 = scalar_select %p364, %s28, 3
        %s366 = smul.addr %s363, 4
        %s367 = sadd.s32 %s365, %s366
        %s368 = smul.addr %s367, 4
        %s369 = scalar_lea.vmem %s0, %s368
        %p370 = pneg %p58
        %p371 = pneg %p55
        %s372 = smul.u32 2, %s28
        %p373 = scmp.lt.s32.totalorder %s27, 1
        %s374 = scalar_select %p373, %s27, 1
        %p375 = scmp.lt.s32.totalorder %s372, 7
        %s376 = scalar_select %p375, %s372, 7
        %s377 = smul.addr %s374, 8
        %s378 = sadd.s32 %s376, %s377
        %s379 = smul.addr %s378, 2
        %s380 = scalar_lea.vmem %s1, %s379
        %p381 = pneg %p86
        %p382 = pneg %p83
        %p383 = scmp.lt.s32.totalorder %s27, 1
        %s384 = scalar_select %p383, %s27, 1
        %p385 = scmp.lt.s32.totalorder %s28, 3
        %s386 = scalar_select %p385, %s28, 3
        %s387 = smul.addr %s384, 4
        %s388 = sadd.s32 %s386, %s387
        %s389 = smul.addr %s388, 4
        %s390 = scalar_lea.vmem %s2, %s389
        %p391 = pneg %p114
        %p392 = pneg %p111
        %p393 = scmp.lt.s32.totalorder %s27, 1
        %s394 = scalar_select %p393, %s27, 1
        %p395 = scmp.lt.s32.totalorder %s28, 3
        %s396 = scalar_select %p395, %s28, 3
        %s397 = smul.addr %s394, 4
        %s398 = sadd.s32 %s396, %s397
        %s399 = smul.addr %s398, 2
        %s400 = scalar_lea.vmem %s3, %s399
        %p401 = pneg %p142
        %p402 = pneg %p139
        %p403 = pneg %p163
        %p404 = pneg %p160
        %p405 = pneg %p184
        %p406 = pneg %p181
        %p407 = pneg %p205
        %p408 = pneg %p202
        %p409 = pneg %p226
        %p410 = pneg %p223
        %p411 = pneg %p247
        %p412 = pneg %p244
        %p413 = pneg %p275
        %p414 = pneg %p272
        %s415 = sand.u32 %s262, 1
        %s416 = scalar_lea.sflag [#allocation3], %s415
        %s417 = sand.u32 %s262, 1
        %s418 = smul.addr %s417, 4
        %s419 = scalar_lea.vmem [#allocation2], %s418
        %p420 = scmp.lt.s32.totalorder %s27, 1
        %s421 = scalar_select %p420, %s27, 1
        %p422 = scmp.lt.s32.totalorder %s28, 3
        %s423 = scalar_select %p422, %s28, 3
        %s424 = smul.addr %s421, 4
        %s425 = sadd.s32 %s423, %s424
        %s426 = smul.addr %s425, 4
        %s427 = scalar_lea.vmem %s0, %s426
        %s428 = smul.u32 2, %s28
        %p429 = scmp.lt.s32.totalorder %s27, 1
        %s430 = scalar_select %p429, %s27, 1
        %p431 = scmp.lt.s32.totalorder %s428, 7
        %s432 = scalar_select %p431, %s428, 7
        %s433 = smul.addr %s430, 8
        %s434 = sadd.s32 %s432, %s433
        %s435 = smul.addr %s434, 2
        %s436 = scalar_lea.vmem %s1, %s435
        %s437 = smul.u32 2, %s28
        %p438 = scmp.lt.s32.totalorder %s27, 1
        %s439 = scalar_select %p438, %s27, 1
        %p440 = scmp.lt.s32.totalorder %s28, 3
        %s441 = scalar_select %p440, %s28, 3
        %s442 = smul.addr %s439, 4
        %s443 = sadd.s32 %s441, %s442
        %s444 = smul.addr %s443, 4
        %s445 = scalar_lea.vmem %s2, %s444
        %p446 = scmp.lt.s32.totalorder %s27, 1
        %s447 = scalar_select %p446, %s27, 1
        %p448 = scmp.lt.s32.totalorder %s28, 3
        %s449 = scalar_select %p448, %s28, 3
        %s450 = smul.addr %s447, 4
        %s451 = sadd.s32 %s449, %s450
        %s452 = smul.addr %s451, 2
        %s453 = scalar_lea.vmem %s3, %s452
        %s454 = smul.u32 2, %s28
        %v458 = vld [vmem:[%s427] sm:$0xf]
        %v459 = vld [vmem:[%s445] sm:$0xf]
        %s460 = smul.u32 %s28, 128
        %s461 = ssub.s32 509, %s460
        %v462 = vlaneseq
        %v463 = vand.u32 %v462, 127
        %v464 = vadd.s32 %v463, 128
        %v465 = vstv %s461
        %vm466 = vcmp.lt.s32.totalorder %v463, %v465
        %vm467 = vcmp.lt.s32.totalorder %v464, %v465
        %vm468 = vmpackc.low %vm467, %vm466
        %v469 = vsel %vm468, 65537, 0
        %v470 = vlaneseq
        %v471 = vshrl.u32 %v470, 7
        %v472 = vsub.s32 0, %v471
        %v473 = vrot.slane %v469, %v472
        %v474 = vlaneseq
        %v475 = vshrl.u32 %v474, 7
        %v476 = vsub.s32 4, %v475
        %v477 = vrot.slane %v469, %v476
        %vm478 = vcmp.ne.s16.totalorder %v473, 0
        %vm479 = vcmp.ne.s16.totalorder %v477, 0
        %v480 = vsel %vm478, %v458, 0
        %v481 = vsel %vm479, %v459, 0
        %v482 = vld [vmem:[%s4] sm:$0xff]
        %v483 = vld [vmem:[%s4 + $0x8] sm:$0xf]
        %v484 = vld [vmem:[%s4 + $0xc] sm:$0xff]
        %v485 = vld [vmem:[%s4 + $0x14] sm:$0xf]
        %v486 = vld [vmem:[%s4 + $0x18] sm:$0xff]
        %v487 = vld [vmem:[%s4 + $0x20] sm:$0xf]
        %v488 = vld [vmem:[%s4 + $0x24] sm:$0xff]
        %v489 = vld [vmem:[%s4 + $0x2c] sm:$0xf]
        %v490 = vld [vmem:[%s4 + $0x30] sm:$0xff]
        %v491 = vld [vmem:[%s4 + $0x38] sm:$0xf]
        %v492 = vld [vmem:[%s4 + $0x3c] sm:$0xff]
        %v493 = vld [vmem:[%s4 + $0x44] sm:$0xf]
        %v494 = vld [vmem:[%s4 + $0x48] sm:$0xff]
        %v495 = vld [vmem:[%s4 + $0x50] sm:$0xf]
        %v496 = vld [vmem:[%s4 + $0x54] sm:$0xff]
        %v497 = vld [vmem:[%s4 + $0x5c] sm:$0xf]
        %v498 = vld [vmem:[%s4 + $0x60] sm:$0xff]
        %v499 = vld [vmem:[%s4 + $0x68] sm:$0xf]
        %v500 = vld [vmem:[%s4 + $0x6c] sm:$0xff]
        %v501 = vld [vmem:[%s4 + $0x74] sm:$0xf]
        %v502 = vld [vmem:[%s4 + $0x78] sm:$0xff]
        %v503 = vld [vmem:[%s4 + $0x80] sm:$0xf]
        %v504 = vld [vmem:[%s4 + $0x84] sm:$0xff]
        %v505 = vld [vmem:[%s4 + $0x8c] sm:$0xf]
        %v506 = vld [vmem:[%s4 + $0x90] sm:$0xff]
        %v507 = vld [vmem:[%s4 + $0x98] sm:$0xf]
        %v508 = vld [vmem:[%s4 + $0x9c] sm:$0xff]
        %v509 = vld [vmem:[%s4 + $0xa4] sm:$0xf]
        %v510 = vld [vmem:[%s4 + $0xa8] sm:$0xff]
        %v511 = vld [vmem:[%s4 + $0xb0] sm:$0xf]
        %v512 = vld [vmem:[%s4 + $0xb4] sm:$0xff]
        %v513 = vld [vmem:[%s4 + $0xbc] sm:$0xf]
        %v514 = vld [vmem:[%s4 + $0xc0] sm:$0x11]
        %v515 = vld [vmem:[%s4 + $0xc8] sm:$0x1]
        %v550 = vunpack.c.l.b16 %v482
        %v551 = vunpack.c.h.b16 %v482
        %v552 = vunpack.c.l.b16 %v483
        %v553 = vunpack.c.l.b16 %v484
        %v554 = vunpack.c.h.b16 %v484
        %v555 = vunpack.c.l.b16 %v485
        %v556 = vunpack.c.l.b16 %v486
        %v557 = vunpack.c.h.b16 %v486
        %v558 = vunpack.c.l.b16 %v487
        %v559 = vunpack.c.l.b16 %v488
        %v560 = vunpack.c.h.b16 %v488
        %v561 = vunpack.c.l.b16 %v489
        %v562 = vunpack.c.l.b16 %v490
        %v563 = vunpack.c.h.b16 %v490
        %v564 = vunpack.c.l.b16 %v491
        %v565 = vunpack.c.l.b16 %v492
        %v566 = vunpack.c.h.b16 %v492
        %v567 = vunpack.c.l.b16 %v493
        %v568 = vunpack.c.l.b16 %v494
        %v569 = vunpack.c.h.b16 %v494
        %v570 = vunpack.c.l.b16 %v495
        %v571 = vunpack.c.l.b16 %v496
        %v572 = vunpack.c.h.b16 %v496
        %v573 = vunpack.c.l.b16 %v497
        %v574 = vunpack.c.l.b16 %v498
        %v575 = vunpack.c.h.b16 %v498
        %v576 = vunpack.c.l.b16 %v499
        %v577 = vunpack.c.l.b16 %v500
        %v578 = vunpack.c.h.b16 %v500
        %v579 = vunpack.c.l.b16 %v501
        %v580 = vunpack.c.l.b16 %v502
        %v581 = vunpack.c.h.b16 %v502
        %v582 = vunpack.c.l.b16 %v503
        %v583 = vunpack.c.l.b16 %v504
        %v584 = vunpack.c.h.b16 %v504
        %v585 = vunpack.c.l.b16 %v505
        %v586 = vunpack.c.l.b16 %v506
        %v587 = vunpack.c.h.b16 %v506
        %v588 = vunpack.c.l.b16 %v507
        %v589 = vunpack.c.l.b16 %v508
        %v590 = vunpack.c.h.b16 %v508
        %v591 = vunpack.c.l.b16 %v509
        %v592 = vunpack.c.l.b16 %v510
        %v593 = vunpack.c.h.b16 %v510
        %v594 = vunpack.c.l.b16 %v511
        %v595 = vunpack.c.l.b16 %v512
        %v596 = vunpack.c.h.b16 %v512
        %v597 = vunpack.c.l.b16 %v513
        %v598 = vunpack.c.l.b16 %v514
        %v599 = vunpack.c.h.b16 %v514
        %v600 = vunpack.c.l.b16 %v515
        %v601 = vpack.c.b16 %v553, %v550
        %v602 = vpack.c.b16 %v554, %v551
        %v603 = vpack.c.b16 %v555, %v552
        %v604 = vpack.c.b16 %v559, %v556
        %v605 = vpack.c.b16 %v560, %v557
        %v606 = vpack.c.b16 %v561, %v558
        %v607 = vpack.c.b16 %v565, %v562
        %v608 = vpack.c.b16 %v566, %v563
        %v609 = vpack.c.b16 %v567, %v564
        %v610 = vpack.c.b16 %v571, %v568
        %v611 = vpack.c.b16 %v572, %v569
        %v612 = vpack.c.b16 %v573, %v570
        %v613 = vpack.c.b16 %v577, %v574
        %v614 = vpack.c.b16 %v578, %v575
        %v615 = vpack.c.b16 %v579, %v576
        %v616 = vpack.c.b16 %v583, %v580
        %v617 = vpack.c.b16 %v584, %v581
        %v618 = vpack.c.b16 %v585, %v582
        %v619 = vpack.c.b16 %v589, %v586
        %v620 = vpack.c.b16 %v590, %v587
        %v621 = vpack.c.b16 %v591, %v588
        %v622 = vpack.c.b16 %v595, %v592
        %v623 = vpack.c.b16 %v596, %v593
        %v624 = vpack.c.b16 %v597, %v594
        %v625 = vpack.c.b16 %v598, %v598
        %v626 = vpack.c.b16 %v599, %v599
        %v627 = vpack.c.b16 %v600, %v600
        %vm652 = vcmask 7168
        %v654 = vsel %vm652, %v481, 0
        %vm656 = vcmask 1040384
        %v657 = vsel 0, 4294967295, 65535
        %v658 = vsel %vm656, %v657, 0
        %v660 = vand.u32 %v625, %v658
        %v663 = vand.u32 %v626, %v658
        %v666 = vand.u32 %v627, %v658
        %668 = vmatprep.subr.bf16.mxu0 %v602
        %669 = vmatpush1.bf16.msra.mxu0 %v601
        %670 = vmatprep.subr.bf16.mxu0 %v605
        %671 = vmatpush1.bf16.msra.mxu0 %v604
        %672 = vmatprep.subr.bf16.mxu0 %v608
        %673 = vmatpush1.bf16.msra.mxu0 %v607
        %674 = vmatprep.subr.bf16.mxu0 %v611
        %675 = vmatpush1.bf16.msra.mxu0 %v610
        %676 = vmatprep.subr.bf16.mxu0 %v614
        %677 = vmatpush1.bf16.msra.mxu0 %v613
        %678 = vmatprep.subr.bf16.mxu0 %v617
        %679 = vmatpush1.bf16.msra.mxu0 %v616
        %680 = vmatprep.subr.bf16.mxu0 %v620
        %681 = vmatpush1.bf16.msra.mxu0 %v619
        %682 = vmatprep.subr.bf16.mxu0 %v623
        %683 = vmatpush1.bf16.msra.mxu0 %v622
        %684 = vmatprep.subr.bf16.mxu0 %v663
        %685 = vmatpush1.bf16.msra.mxu0 %v660
        %686 = vmatprep.subr.bf16.mxu0 0
        %687 = vmatpush1.bf16.msra.mxu0 0
        %688 = vmatprep.subr.bf16.mxu0 0
        %689 = vmatpush1.bf16.msra.mxu0 0
        %690 = vmatprep.subr.bf16.mxu0 0
        %691 = vmatpush1.bf16.msra.mxu0 0
        %692 = vmatprep.subr.bf16.mxu0 0
        %693 = vmatpush1.bf16.msra.mxu0 0
        %694 = vmatprep.subr.bf16.mxu0 0
        %695 = vmatpush1.bf16.msra.mxu0 0
        %696 = vmatprep.subr.bf16.mxu0 0
        %697 = vmatpush1.bf16.msra.mxu0 0
        %698 = vmatprep.subr.bf16.mxu0 0
        %699 = vmatpush1.bf16.msra.mxu0 0
        %700 = vmatprep.mubr.bf16.mxu0 %v654
        %701 = vmatmul.mubr.bf16.gmra.mrb[0].mxu0 %v480
        %v702 = vpop.f32.mrb[0].mxu0
        %v703 = vadd.f32 0.0, %v702
        %v704 = vpop.f32.mrb[0].mxu0
        %v705 = vadd.f32 0.0, %v704
        %v706 = vpop.f32.mrb[0].mxu0
        %v707 = vpop.f32.mrb[0].mxu0
        %708 = vdwg.mxu0
        %709 = vmatprep.subr.bf16.mxu0 0
        %710 = vmatpush1.bf16.msra.mxu0 %v603
        %711 = vmatprep.subr.bf16.mxu0 0
        %712 = vmatpush1.bf16.msra.mxu0 %v606
        %713 = vmatprep.subr.bf16.mxu0 0
        %714 = vmatpush1.bf16.msra.mxu0 %v609
        %715 = vmatprep.subr.bf16.mxu0 0
        %716 = vmatpush1.bf16.msra.mxu0 %v612
        %717 = vmatprep.subr.bf16.mxu0 0
        %718 = vmatpush1.bf16.msra.mxu0 %v615
        %719 = vmatprep.subr.bf16.mxu0 0
        %720 = vmatpush1.bf16.msra.mxu0 %v618
        %721 = vmatprep.subr.bf16.mxu0 0
        %722 = vmatpush1.bf16.msra.mxu0 %v621
        %723 = vmatprep.subr.bf16.mxu0 0
        %724 = vmatpush1.bf16.msra.mxu0 %v624
        %725 = vmatprep.subr.bf16.mxu0 0
        %726 = vmatpush1.bf16.msra.mxu0 %v666
        %727 = vmatprep.subr.bf16.mxu0 0
        %728 = vmatpush1.bf16.msra.mxu0 0
        %729 = vmatprep.subr.bf16.mxu0 0
        %730 = vmatpush1.bf16.msra.mxu0 0
        %731 = vmatprep.subr.bf16.mxu0 0
        %732 = vmatpush1.bf16.msra.mxu0 0
        %733 = vmatprep.subr.bf16.mxu0 0
        %734 = vmatpush1.bf16.msra.mxu0 0
        %735 = vmatprep.subr.bf16.mxu0 0
        %736 = vmatpush1.bf16.msra.mxu0 0
        %737 = vmatprep.subr.bf16.mxu0 0
        %738 = vmatpush1.bf16.msra.mxu0 0
        %739 = vmatprep.subr.bf16.mxu0 0
        %740 = vmatpush1.bf16.msra.mxu0 0
        %741 = vmatprep.mubr.bf16.mxu0 %v654
        %742 = vmatmul.mubr.bf16.gmra.mrb[0].mxu0 %v480
        %v743 = vpop.f32.mrb[0].mxu0
        %v744 = vadd.f32 0.0, %v743
        %v745 = vpop.f32.mrb[0].mxu0
        %v746 = vpop.f32.mrb[0].mxu0
        %v747 = vpop.f32.mrb[0].mxu0
        %748 = vdwg.mxu0
        %v749 = vpack.c.bf16 %v703, %v703
        %v750 = vpack.c.bf16 %v705, %v705
        %v751 = vpack.c.bf16 %v744, %v744
        %v752 = vld [vmem:[%s436] sm:$0xf]
        %v753 = vld [vmem:[%s453] sm:$0x3]
        %v756 = vunpack.c.l.s4 1983009808
        %v757 = vunpack.c.0.s8 %v756
        %v758 = vlaneseq
        %v759 = vshrl.u32 %v758, 7
        %v760 = vsub.s32 %v757, %v759
        %v761 = vrot.slane %v752, %v760
        %v762 = vcombine.high %v761, %v761
        %v766 = vrot.slane %v749, 4
        %v767 = vrot.slane %v750, 4
        %v768 = vrot.slane %v751, 4
        %769 = vrot.lane.b32.xlu0 %v766, 127
        %v770 = vpop.permute.xlu0 %769
        %771 = vrot.lane.b32.xlu0 %v767, 127
        %v772 = vpop.permute.xlu0 %771
        %773 = vrot.lane.b32.xlu0 %v768, 127
        %v774 = vpop.permute.xlu0 %773
        %vm775 = vcmask 1039360
        %v776 = vsel %vm775, %v770, %v772
        %v777 = vsel %vm775, %v772, %v774
        %778 = vrot.lane.b32.xlu0 %v749, 126
        %v779 = vpop.permute.xlu0 %778
        %780 = vrot.lane.b32.xlu0 %v750, 126
        %v781 = vpop.permute.xlu0 %780
        %782 = vrot.lane.b32.xlu0 %v751, 126
        %v783 = vpop.permute.xlu0 %782
        %vm784 = vcmask 1031168
        %v785 = vsel %vm784, %v779, %v781
        %v786 = vsel %vm784, %v781, %v783
        %v787 = vrot.slane %v761, 4
        %v788 = vrot.slane %v762, 4
        %v790 = vrot.slane %v761, 2
        %v791 = vrot.slane %v762, 2
        %v792 = vrot.slane %v753, 2
        %793 = vrot.lane.b32.xlu0 %v790, 127
        %v794 = vpop.permute.xlu0 %793
        %795 = vrot.lane.b32.xlu0 %v791, 127
        %v796 = vpop.permute.xlu0 %795
        %797 = vrot.lane.b32.xlu0 %v792, 127
        %v798 = vpop.permute.xlu0 %797
        %v799 = vsel %vm775, %v794, %v796
        %v800 = vsel %vm775, %v796, %v798
        %801 = vrot.lane.b32.xlu0 %v761, 126
        %v802 = vpop.permute.xlu0 %801
        %803 = vrot.lane.b32.xlu0 %v762, 126
        %v804 = vpop.permute.xlu0 %803
        %805 = vrot.lane.b32.xlu0 %v753, 126
        %v806 = vpop.permute.xlu0 %805
        %v807 = vsel %vm784, %v802, %v804
        %v808 = vsel %vm784, %v804, %v806
        %vm809 = vcmask 1043456
        %v812 = vsel %vm809, %v749, %v776
        %v816 = vsel %vm809, %v750, %v777
        %v820 = vsel %vm809, %v785, %v787
        %v823 = vsel %vm809, %v786, %v788
        %vm824 = vcmask 1045504
        %v826 = vsel %vm824, %v820, %v799
        %v829 = vsel %vm824, %v823, %v800
        %v831 = vld [vmem:[%s5] sm:$0x3]
        %v832 = vld [vmem:[%s6] sm:$0xf]
        %834 = vset.pattern.permute.xlu0 0
        %835 = vperm.xlu0 %834, %v832
        %v836 = vpop.permute.xlu0 %835
        %vm838 = vcmask 293888
        %v840 = vsel %vm838, %v831, 0
        %vm842 = vcmask 1041408
        %v844 = vsel %vm842, %v807, 0
        %v847 = vsel %vm842, %v808, 0
        %849 = vmatprep.subr.bf16.mxu0 %v816
        %850 = vmatpush1.bf16.msra.mxu0 %v812
        %851 = vmatprep.subr.bf16.mxu0 %v829
        %852 = vmatpush1.bf16.msra.mxu0 %v826
        %853 = vmatprep.subr.bf16.mxu0 %v847
        %854 = vmatpush1.bf16.msra.mxu0 %v844
        %855 = vmatprep.subr.bf16.mxu0 0
        %856 = vmatpush1.bf16.msra.mxu0 0
        %857 = vmatprep.subr.bf16.mxu0 0
        %858 = vmatpush1.bf16.msra.mxu0 0
        %859 = vmatprep.subr.bf16.mxu0 0
        %860 = vmatpush1.bf16.msra.mxu0 0
        %861 = vmatprep.subr.bf16.mxu0 0
        %862 = vmatpush1.bf16.msra.mxu0 0
        %863 = vmatprep.subr.bf16.mxu0 0
        %864 = vmatpush1.bf16.msra.mxu0 0
        %865 = vmatprep.subr.bf16.mxu0 0
        %866 = vmatpush1.bf16.msra.mxu0 0
        %867 = vmatprep.subr.bf16.mxu0 0
        %868 = vmatpush1.bf16.msra.mxu0 0
        %869 = vmatprep.subr.bf16.mxu0 0
        %870 = vmatpush1.bf16.msra.mxu0 0
        %871 = vmatprep.subr.bf16.mxu0 0
        %872 = vmatpush1.bf16.msra.mxu0 0
        %873 = vmatprep.subr.bf16.mxu0 0
        %874 = vmatpush1.bf16.msra.mxu0 0
        %875 = vmatprep.subr.bf16.mxu0 0
        %876 = vmatpush1.bf16.msra.mxu0 0
        %877 = vmatprep.subr.bf16.mxu0 0
        %878 = vmatpush1.bf16.msra.mxu0 0
        %879 = vmatprep.subr.bf16.mxu0 0
        %880 = vmatpush1.bf16.msra.mxu0 0
        %881 = vmatprep.mubr.bf16.mxu0 0
        %882 = vmatmul.mubr.bf16.gmra.mrb[0].mxu0 %v840
        %v883 = vpop.f32.mrb[0].mxu0
        %v884 = vadd.f32 %v836, %v883
        %v885 = vpop.f32.mrb[0].mxu0
        %v886 = vadd.f32 %v836, %v885
        %v887 = vpop.f32.mrb[0].mxu0
        %v888 = vpop.f32.mrb[0].mxu0
        %889 = vdwg.mxu0
        %vm890 = vcmp.ge.f32.partialorder %v884, 0.0
        %vm891 = vcmp.ge.f32.partialorder %v886, 0.0
        %v892 = vmul.f32 %v884, 0.01
        %v893 = vmul.f32 %v886, 0.01
        %v894 = vsel %vm890, %v884, %v892
        %v895 = vsel %vm891, %v886, %v893
        %v896 = vld [vmem:[%s7] sm:$0x1]
        %v897 = vpack.c.bf16 %v894, %v894
        %v898 = vpack.c.bf16 %v895, %v895
        %v899 = vld [vmem:[%s8] sm:$0x3]
        %901 = vset.pattern.permute.xlu0 0
        %902 = vperm.xlu0 %901, %v899
        %v903 = vpop.permute.xlu0 %902
        %vm905 = vcmask 31744
        %v907 = vsel %vm905, %v896, 0
        %v910 = vsel %vm842, %v897, 0
        %v913 = vsel %vm842, %v898, 0
        %915 = vmatprep.subr.bf16.mxu0 %v913
        %916 = vmatpush1.bf16.msra.mxu0 %v910
        %917 = vmatprep.subr.bf16.mxu0 0
        %918 = vmatpush1.bf16.msra.mxu0 0
        %919 = vmatprep.subr.bf16.mxu0 0
        %920 = vmatpush1.bf16.msra.mxu0 0
        %921 = vmatprep.subr.bf16.mxu0 0
        %922 = vmatpush1.bf16.msra.mxu0 0
        %923 = vmatprep.subr.bf16.mxu0 0
        %924 = vmatpush1.bf16.msra.mxu0 0
        %925 = vmatprep.subr.bf16.mxu0 0
        %926 = vmatpush1.bf16.msra.mxu0 0
        %927 = vmatprep.subr.bf16.mxu0 0
        %928 = vmatpush1.bf16.msra.mxu0 0
        %929 = vmatprep.subr.bf16.mxu0 0
        %930 = vmatpush1.bf16.msra.mxu0 0
        %931 = vmatprep.subr.bf16.mxu0 0
        %932 = vmatpush1.bf16.msra.mxu0 0
        %933 = vmatprep.subr.bf16.mxu0 0
        %934 = vmatpush1.bf16.msra.mxu0 0
        %935 = vmatprep.subr.bf16.mxu0 0
        %936 = vmatpush1.bf16.msra.mxu0 0
        %937 = vmatprep.subr.bf16.mxu0 0
        %938 = vmatpush1.bf16.msra.mxu0 0
        %939 = vmatprep.subr.bf16.mxu0 0
        %940 = vmatpush1.bf16.msra.mxu0 0
        %941 = vmatprep.subr.bf16.mxu0 0
        %942 = vmatpush1.bf16.msra.mxu0 0
        %943 = vmatprep.subr.bf16.mxu0 0
        %944 = vmatpush1.bf16.msra.mxu0 0
        %945 = vmatprep.subr.bf16.mxu0 0
        %946 = vmatpush1.bf16.msra.mxu0 0
        %947 = vmatprep.mubr.bf16.mxu0 0
        %948 = vmatmul.mubr.bf16.gmra.mrb[0].mxu0 %v907
        %v949 = vpop.f32.mrb[0].mxu0
        %v950 = vadd.f32 %v903, %v949
        %v951 = vpop.f32.mrb[0].mxu0
        %v952 = vadd.f32 %v903, %v951
        %v953 = vpop.f32.mrb[0].mxu0
        %v954 = vpop.f32.mrb[0].mxu0
        %955 = vdwg.mxu0
        %v956 = vtanh.pop %v950
        %v957 = vtanh.pop %v952
        %v960 = vcombine.low %v956, %v957
        %v962 = vunpack.c.l.s4 1983009808
        %v963 = vunpack.c.0.s8 %v962
        %v964 = vlaneseq
        %v965 = vshrl.u32 %v964, 7
        %v966 = vsub.s32 %v963, %v965
        %v967 = vrot.slane %v960, %v966
        %969 = vst [vmem:[%s419] sm:$0xf] %v967
        %s970 = sand.u32 %s262, 1
        %s971 = scalar_lea.sflag [#allocation3], %s970
        %s972 = sand.u32 %s262, 1
        %s973 = smul.addr %s972, 4
        %s974 = scalar_lea.vmem [#allocation2], %s973
        // Predicated region
        $region57: #{_forward.9} parent=55 // pred_check
          %p975 = pneg %p272
        $region58: #{_forward.9} parent=55 // pred_check_branch
          %977 = sbr.rel (%p975) target = $region60
        $region59: #{_forward.9} parent=55 // pred_region
          %s978 = smul.u32 2, %s28
          %s980 = ssub.s32 64, 64
          %981 = vsyncadd %s971, %s980
          %s982 = smul.addr %s27, 8
          %s983 = sadd.s32 %s978, %s982
          %s984 = smul.addr %s983, 32
          %s985 = scalar_lea.hbm %s9, %s984
          %s987 = sshll.u32 %s974, 4
          %s988 = int_to_ptr.vmem [resolvable:$true] %s987
          %990 = dma.vmem_to_hbm [thread:$0]  %s988, 64, %s985, %s971
        $region60: #{_forward.9} parent=55 // pred_fallthru
          _
      $region56: #{_forward.9} parent=5 // pred_fallthru
        _
      %p991 = scmp.le.s32.totalorder 2, %s18
      // Predicated region
      $region61: #{_forward.9} parent=5 // pred_check
        %p992 = pneg %p991
      $region62: #{_forward.9} parent=5 // pred_check_branch
        %994 = sbr.rel (%p992) target = $region64
      $region63: #{_forward.9} parent=5 // pred_region
        %s995 = ssub.s32 %s18, 2
        // Predicated region
        $region65: #{_forward.9} parent=63 // pred_check
          %p996 = pneg %p278
        $region66: #{_forward.9} parent=63 // pred_check_branch
          %998 = sbr.rel (%p996) target = $region68
        $region67: #{_forward.9} parent=63 // pred_region
          %s999 = sand.u32 %s263, 1
          %s1000 = scalar_lea.sflag [#allocation3], %s999
          %s1001 = sand.u32 %s263, 1
          %s1002 = smul.addr %s1001, 4
          %s1003 = scalar_lea.vmem [#allocation2], %s1002
          %1004 = dma.done %s1000, 64
        $region68: #{_forward.9} parent=63 // pred_fallthru
          _
      $region64: #{_forward.9} parent=5 // pred_fallthru
        _
    $region6: #{_forward.9} parent=1 // loop_footer
      %s22 = sadd.s32 1, %s18
    $region7: #{_forward.9} parent=1 // loop_footer_branch
      %17 = sbr.rel target = $region3
    $region8: #{_forward.9} parent=1 // loop_exit
      _
    %1005 = vsyncpa [#allocation3], 1
    %s1006 = scalar_lea.sflag [#allocation3], 1
    %1007 = vsyncpa %s1006, 1

// kernel: _forward.8
$region0: #{_forward.8}
  #allocation0 [shape = 'u32[]', space=smem, size = 0x4, offset = 0x4, fixed_abs, tag = 'smem constant byte address 0x4 - core index']
  #allocation1 [shape = 'u32[144,128]{1,0:T(1,128)}', space=vmem, size = 0x12000, scoped, tag = 'internal scratch']
  %s0 = inlined_call_operand.vmem [shape: bf16[2,12,509], index: 0, kind: input, shape index: {}]
  %s1 = inlined_call_operand.vmem [shape: bf16[2,8,511], index: 1, kind: input, shape index: {}]
  %s2 = inlined_call_operand.vmem [shape: bf16[2,2,12,1], index: 2, kind: input, shape index: {}]
  %s3 = inlined_call_operand.vmem [shape: bf16[2,2,8,2], index: 3, kind: input, shape index: {}]
  %s4 = inlined_call_operand.vmem [shape: bf16[129,258], index: 4, kind: input, shape index: {}]
  %s5 = inlined_call_operand.vmem [shape: bf16[8,60], index: 5, kind: input, shape index: {}]
  %s6 = inlined_call_operand.vmem [shape: f32[8,1], index: 6, kind: input, shape index: {}]
  %s7 = inlined_call_operand.vmem [shape: bf16[2,8,509], index: 7, kind: output, shape index: {}]
  %s8 = sld [smem:[#allocation0]]
  $region102: #{_forward.8} parent=0
    _
  %s10 = ssub.s32 1, %s8
  %s11 = scalar_select 0, %s10, %s8
  $region1: #{_forward.8} parent=0
    #allocation2 [shape = 'u8[8192]{0}', space=vmem, size = 0x2000, scoped, tag = 'input window, operand 0']
    loop: start=0, step=1, limit=6
    $region2: #{_forward.8} parent=1 // loop_pre_header
      _
    $region3: #{_forward.8} parent=1 // loop_header
      %s13 = sphi 0, %s17
      %p14 = scmp.ge.s32.totalorder %s13, 6
      %s20 = sphi 0, %s32
      %s21 = sphi 0, %s28
      %s22 = sphi 0, %s20
      %s23 = sphi 0, %s21
      %s24 = sphi 0, %s22
      %s25 = sphi 0, %s23
      %s37 = sphi 0, %s39
      %s40 = sphi 0, %s37
      %s41 = sphi 0, %s40
      %s57 = sphi 0, %s41
      %s65 = sphi 0, %s67
      %s68 = sphi 0, %s65
      %s69 = sphi 0, %s68
      %s85 = sphi 0, %s69
      %s93 = sphi 0, %s95
      %s96 = sphi 0, %s93
      %s97 = sphi 0, %s96
      %s113 = sphi 0, %s97
      %s121 = sphi 0, %s123
      %s124 = sphi 0, %s121
      %s125 = sphi 0, %s124
      %s141 = sphi 0, %s125
      %s145 = sphi 0, %s145
      %s147 = sphi 0, %s145
      %s148 = sphi 0, %s147
      %s162 = sphi 0, %s148
      %s166 = sphi 0, %s166
      %s168 = sphi 0, %s166
      %s169 = sphi 0, %s168
      %s183 = sphi 0, %s169
      %s187 = sphi 0, %s187
      %s189 = sphi 0, %s187
      %s190 = sphi 0, %s189
      %s204 = sphi 0, %s190
      %s212 = sphi 0, %s214
      %s215 = sphi 0, %s212
      %s216 = sphi 0, %s215
      %s232 = sphi 0, %s216
    $region4: #{_forward.8} parent=1 // loop_header_branch
      %16 = sbr.rel (%p14) target = $region8
    $region5: #{_forward.8} parent=1 // loop_body
      %s18 = ssub.s32 %s13, 1
      %s19 = ssub.s32 %s13, 2
      %s26 = sadd.s32 1, %s21
      %p27 = scmp.ge.s32.totalorder %s26, 2
      %s28 = scalar_select %p27, 0, %s26
      %s29 = sadd.s32 1, %s20
      %s30 = scalar_select %p27, %s29, %s20
      %p31 = scmp.ge.s32.totalorder %s30, 2
      %s32 = scalar_select %p31, 0, %s30
      %s33 = ssub.s32 %s20, %s32
      %s34 = ssub.s32 %s21, %s28
      %s35 = sor.u32 %s33, %s34
      %p36 = scmp.eq.s32.totalorder %s35, 0
      %s38 = sadd.s32 %s37, 1
      %s39 = scalar_select %p36, %s37, %s38
      %p42 = pneg %p36
      %p43 = scmp.eq.s32.totalorder %s13, 3
      %p44 = por %p42, %p43
      %p45 = scmp.ne.s32.totalorder %s37, %s40
      %p46 = scmp.eq.s32.totalorder %s13, 0
      %p47 = por %p45, %p46
      %p48 = scmp.ne.s32.totalorder %s37, %s40
      %p49 = scmp.eq.s32.totalorder %s18, 3
      %p50 = por %p48, %p49
      %p51 = scmp.ne.s32.totalorder %s40, %s41
      %p52 = scmp.eq.s32.totalorder %s18, 0
      %p53 = por %p51, %p52
      %p54 = scmp.ne.s32.totalorder %s40, %s41
      %p55 = scmp.eq.s32.totalorder %s19, 3
      %p56 = por %p54, %p55
      %p58 = scmp.ne.s32.totalorder %s41, %s57
      %p59 = scmp.eq.s32.totalorder %s19, 0
      %p60 = por %p58, %p59
      %s61 = ssub.s32 %s20, %s32
      %s62 = ssub.s32 %s21, %s28
      %s63 = sor.u32 %s61, %s62
      %p64 = scmp.eq.s32.totalorder %s63, 0
      %s66 = sadd.s32 %s65, 1
      %s67 = scalar_select %p64, %s65, %s66
      %p70 = pneg %p64
      %p71 = scmp.eq.s32.totalorder %s13, 3
      %p72 = por %p70, %p71
      %p73 = scmp.ne.s32.totalorder %s65, %s68
      %p74 = scmp.eq.s32.totalorder %s13, 0
      %p75 = por %p73, %p74
      %p76 = scmp.ne.s32.totalorder %s65, %s68
      %p77 = scmp.eq.s32.totalorder %s18, 3
      %p78 = por %p76, %p77
      %p79 = scmp.ne.s32.totalorder %s68, %s69
      %p80 = scmp.eq.s32.totalorder %s18, 0
      %p81 = por %p79, %p80
      %p82 = scmp.ne.s32.totalorder %s68, %s69
      %p83 = scmp.eq.s32.totalorder %s19, 3
      %p84 = por %p82, %p83
      %p86 = scmp.ne.s32.totalorder %s69, %s85
      %p87 = scmp.eq.s32.totalorder %s19, 0
      %p88 = por %p86, %p87
      %s89 = ssub.s32 %s20, %s32
      %s90 = ssub.s32 %s21, %s28
      %s91 = sor.u32 %s89, %s90
      %p92 = scmp.eq.s32.totalorder %s91, 0
      %s94 = sadd.s32 %s93, 1
      %s95 = scalar_select %p92, %s93, %s94
      %p98 = pneg %p92
      %p99 = scmp.eq.s32.totalorder %s13, 3
      %p100 = por %p98, %p99
      %p101 = scmp.ne.s32.totalorder %s93, %s96
      %p102 = scmp.eq.s32.totalorder %s13, 0
      %p103 = por %p101, %p102
      %p104 = scmp.ne.s32.totalorder %s93, %s96
      %p105 = scmp.eq.s32.totalorder %s18, 3
      %p106 = por %p104, %p105
      %p107 = scmp.ne.s32.totalorder %s96, %s97
      %p108 = scmp.eq.s32.totalorder %s18, 0
      %p109 = por %p107, %p108
      %p110 = scmp.ne.s32.totalorder %s96, %s97
      %p111 = scmp.eq.s32.totalorder %s19, 3
      %p112 = por %p110, %p111
      %p114 = scmp.ne.s32.totalorder %s97, %s113
      %p115 = scmp.eq.s32.totalorder %s19, 0
      %p116 = por %p114, %p115
      %s117 = ssub.s32 %s20, %s32
      %s118 = ssub.s32 %s21, %s28
      %s119 = sor.u32 %s117, %s118
      %p120 = scmp.eq.s32.totalorder %s119, 0
      %s122 = sadd.s32 %s121, 1
      %s123 = scalar_select %p120, %s121, %s122
      %p126 = pneg %p120
      %p127 = scmp.eq.s32.totalorder %s13, 3
      %p128 = por %p126, %p127
      %p129 = scmp.ne.s32.totalorder %s121, %s124
      %p130 = scmp.eq.s32.totalorder %s13, 0
      %p131 = por %p129, %p130
      %p132 = scmp.ne.s32.totalorder %s121, %s124
      %p133 = scmp.eq.s32.totalorder %s18, 3
      %p134 = por %p132, %p133
      %p135 = scmp.ne.s32.totalorder %s124, %s125
      %p136 = scmp.eq.s32.totalorder %s18, 0
      %p137 = por %p135, %p136
      %p138 = scmp.ne.s32.totalorder %s124, %s125
      %p139 = scmp.eq.s32.totalorder %s19, 3
      %p140 = por %p138, %p139
      %p142 = scmp.ne.s32.totalorder %s125, %s141
      %p143 = scmp.eq.s32.totalorder %s19, 0
      %p144 = por %p142, %p143
      %s146 = sadd.s32 %s145, 1
      %p149 = scmp.eq.s32.totalorder %s13, 3
      %p150 = scmp.ne.s32.totalorder %s145, %s147
      %p151 = scmp.eq.s32.totalorder %s13, 0
      %p152 = por %p150, %p151
      %p153 = scmp.ne.s32.totalorder %s145, %s147
      %p154 = scmp.eq.s32.totalorder %s18, 3
      %p155 = por %p153, %p154
      %p156 = scmp.ne.s32.totalorder %s147, %s148
      %p157 = scmp.eq.s32.totalorder %s18, 0
      %p158 = por %p156, %p157
      %p159 = scmp.ne.s32.totalorder %s147, %s148
      %p160 = scmp.eq.s32.totalorder %s19, 3
      %p161 = por %p159, %p160
      %p163 = scmp.ne.s32.totalorder %s148, %s162
      %p164 = scmp.eq.s32.totalorder %s19, 0
      %p165 = por %p163, %p164
      %s167 = sadd.s32 %s166, 1
      %p170 = scmp.eq.s32.totalorder %s13, 3
      %p171 = scmp.ne.s32.totalorder %s166, %s168
      %p172 = scmp.eq.s32.totalorder %s13, 0
      %p173 = por %p171, %p172
      %p174 = scmp.ne.s32.totalorder %s166, %s168
      %p175 = scmp.eq.s32.totalorder %s18, 3
      %p176 = por %p174, %p175
      %p177 = scmp.ne.s32.totalorder %s168, %s169
      %p178 = scmp.eq.s32.totalorder %s18, 0
      %p179 = por %p177, %p178
      %p180 = scmp.ne.s32.totalorder %s168, %s169
      %p181 = scmp.eq.s32.totalorder %s19, 3
      %p182 = por %p180, %p181
      %p184 = scmp.ne.s32.totalorder %s169, %s183
      %p185 = scmp.eq.s32.totalorder %s19, 0
      %p186 = por %p184, %p185
      %s188 = sadd.s32 %s187, 1
      %p191 = scmp.eq.s32.totalorder %s13, 3
      %p192 = scmp.ne.s32.totalorder %s187, %s189
      %p193 = scmp.eq.s32.totalorder %s13, 0
      %p194 = por %p192, %p193
      %p195 = scmp.ne.s32.totalorder %s187, %s189
      %p196 = scmp.eq.s32.totalorder %s18, 3
      %p197 = por %p195, %p196
      %p198 = scmp.ne.s32.totalorder %s189, %s190
      %p199 = scmp.eq.s32.totalorder %s18, 0
      %p200 = por %p198, %p199
      %p201 = scmp.ne.s32.totalorder %s189, %s190
      %p202 = scmp.eq.s32.totalorder %s19, 3
      %p203 = por %p201, %p202
      %p205 = scmp.ne.s32.totalorder %s190, %s204
      %p206 = scmp.eq.s32.totalorder %s19, 0
      %p207 = por %p205, %p206
      %s208 = ssub.s32 %s20, %s32
      %s209 = ssub.s32 %s21, %s28
      %s210 = sor.u32 %s208, %s209
      %p211 = scmp.eq.s32.totalorder %s210, 0
      %s213 = sadd.s32 %s212, 1
      %s214 = scalar_select %p211, %s212, %s213
      %p217 = pneg %p211
      %p218 = scmp.eq.s32.totalorder %s13, 3
      %p219 = por %p217, %p218
      %p220 = scmp.ne.s32.totalorder %s212, %s215
      %p221 = scmp.eq.s32.totalorder %s13, 0
      %p222 = por %p220, %p221
      %p223 = scmp.ne.s32.totalorder %s212, %s215
      %p224 = scmp.eq.s32.totalorder %s18, 3
      %p225 = por %p223, %p224
      %p226 = scmp.ne.s32.totalorder %s215, %s216
      %p227 = scmp.eq.s32.totalorder %s18, 0
      %p228 = por %p226, %p227
      %p229 = scmp.ne.s32.totalorder %s215, %s216
      %p230 = scmp.eq.s32.totalorder %s19, 3
      %p231 = por %p229, %p230
      %p233 = scmp.ne.s32.totalorder %s216, %s232
      %p234 = scmp.eq.s32.totalorder %s19, 0
      %p235 = por %p233, %p234
      %p236 = scmp.le.s32.totalorder 1, %s13
      %p237 = scmp.lt.s32.totalorder %s13, 5
      %p238 = pnand %p236, %p237
      %p239 = pneg %p238
      // Predicated region
      $region9: #{_forward.8} parent=5 // pred_check
        _
      $region10: #{_forward.8} parent=5 // pred_check_branch
        %241 = sbr.rel (%p238) target = $region12
      $region11: #{_forward.8} parent=5 // pred_region
        %s242 = ssub.s32 %s13, 1
        // Predicated region
        $region13: #{_forward.8} parent=11 // pred_check
          %p243 = pneg %p158
        $region14: #{_forward.8} parent=11 // pred_check_branch
          %245 = sbr.rel (%p243) target = $region16
        $region15: #{_forward.8} parent=11 // pred_region
          _
        $region16: #{_forward.8} parent=11 // pred_fallthru
          _
        // Predicated region
        $region17: #{_forward.8} parent=11 // pred_check
          %p246 = pneg %p179
        $region18: #{_forward.8} parent=11 // pred_check_branch
          %248 = sbr.rel (%p246) target = $region20
        $region19: #{_forward.8} parent=11 // pred_region
          _
        $region20: #{_forward.8} parent=11 // pred_fallthru
          _
        // Predicated region
        $region21: #{_forward.8} parent=11 // pred_check
          %p249 = pneg %p200
        $region22: #{_forward.8} parent=11 // pred_check_branch
          %251 = sbr.rel (%p249) target = $region24
        $region23: #{_forward.8} parent=11 // pred_region
          _
        $region24: #{_forward.8} parent=11 // pred_fallthru
          _
      $region12: #{_forward.8} parent=5 // pred_fallthru
        _
      %p252 = scmp.lt.s32.totalorder %s13, 4
      // Predicated region
      $region25: #{_forward.8} parent=5 // pred_check
        %p253 = pneg %p252
      $region26: #{_forward.8} parent=5 // pred_check_branch
        %255 = sbr.rel (%p253) target = $region28
      $region27: #{_forward.8} parent=5 // pred_region
        // Predicated region
        $region29: #{_forward.8} parent=27 // pred_check
          %p256 = pneg %p47
        $region30: #{_forward.8} parent=27 // pred_check_branch
          %258 = sbr.rel (%p256) target = $region32
        $region31: #{_forward.8} parent=27 // pred_region
          %s259 = sand.u32 %s37, 1
          %s260 = sand.u32 %s37, 1
          %s261 = smul.addr %s260, 8
          %s262 = scalar_lea.vmem [#allocation2], %s261
          %s263 = smul.addr %s20, 8
          %s264 = sadd.s32 %s21, %s263
          %s265 = smul.addr %s264, 4
          %s266 = scalar_lea.vmem %s0, %s265
          // Predicated region
          $region33: #{_forward.8} parent=31 // pred_check
            _
          $region34: #{_forward.8} parent=31 // pred_check_branch
            %268 = sbr.rel (0) target = $region36
          $region35: #{_forward.8} parent=31 // pred_region
            // Predicated region
            $region37: #{_forward.8} parent=35 // pred_check
              _
            $region38: #{_forward.8} parent=35 // pred_check_branch
              %270 = sbr.rel target = $region40
            $region39: #{_forward.8} parent=35 // pred_region
              // Predicated region
              $region52: #{_forward.8} parent=39 // pred_check
                _
              $region53: #{_forward.8} parent=39 // pred_check_branch
                %287 = sbr.rel (0) target = $region55
              $region54: #{_forward.8} parent=39 // pred_region
                loop: start=0, step=1, limit=1
                $region56: #{_forward.8} parent=54 // loop_pre_header
                  _
                $region57: #{_forward.8} parent=54 // loop_header
                  %s289 = sphi 0, %s293
                  %p290 = scmp.ge.s32.totalorder %s289, 1
                  %s294 = sphi %s266, %s266
                  %s295 = sphi %s262, %s262
                $region58: #{_forward.8} parent=54 // loop_header_branch
                  %292 = sbr.rel (%p290) target = $region62
                $region59: #{_forward.8} parent=54 // loop_body
                  _
                $region60: #{_forward.8} parent=54 // loop_footer
                  %s293 = sadd.s32 1, %s289
                $region61: #{_forward.8} parent=54 // loop_footer_branch
                  %288 = sbr.rel target = $region57
                $region62: #{_forward.8} parent=54 // loop_exit
                  _
                loop: start=0, step=1, limit=1
                $region63: #{_forward.8} parent=54 // loop_pre_header
                  _
                $region64: #{_forward.8} parent=54 // loop_header
                  %s298 = sphi 0, %s302
                  %p299 = scmp.ge.s32.totalorder %s298, 1
                  %s303 = sphi %s266, %s266
                  %s304 = sphi %s262, %s262
                $region65: #{_forward.8} parent=54 // loop_header_branch
                  %301 = sbr.rel (%p299) target = $region69
                $region66: #{_forward.8} parent=54 // loop_body
                  %v305 = vld [vmem:[%s303] sm:$0xf]
                  %306 = vst [vmem:[%s304] sm:$0xf] %v305
                  %v307 = vld [vmem:[%s303 + $0x10] sm:$0xf]
                  %308 = vst [vmem:[%s304 + $0x4] sm:$0xf] %v307
                $region67: #{_forward.8} parent=54 // loop_footer
                  %s302 = sadd.s32 1, %s298
                $region68: #{_forward.8} parent=54 // loop_footer_branch
                  %297 = sbr.rel target = $region64
                $region69: #{_forward.8} parent=54 // loop_exit
                  _
              $region55: #{_forward.8} parent=39 // pred_fallthru
                _
            $region40: #{_forward.8} parent=35 // pred_fallthru
              _
            // Predicated region
            $region41: #{_forward.8} parent=35 // pred_check
              _
            $region42: #{_forward.8} parent=35 // pred_check_branch
              %272 = sbr.rel (0) target = $region44
            $region43: #{_forward.8} parent=35 // pred_region
              loop: start=0, step=1, limit=1
              $region45: #{_forward.8} parent=43 // loop_pre_header
                _
              $region46: #{_forward.8} parent=43 // loop_header
                %s275 = sphi 0, %s279
                %p276 = scmp.ge.s32.totalorder %s275, 1
                %s280 = sphi %s266, %s266
                %s281 = sphi %s262, %s262
              $region47: #{_forward.8} parent=43 // loop_header_branch
                %278 = sbr.rel (%p276) target = $region51
              $region48: #{_forward.8} parent=43 // loop_body
                %v282 = vld [vmem:[%s280] sm:$0xf]
                %283 = vst [vmem:[%s281] sm:$0xf] %v282
                %v284 = vld [vmem:[%s280 + $0x10] sm:$0xf]
                %285 = vst [vmem:[%s281 + $0x4] sm:$0xf] %v284
              $region49: #{_forward.8} parent=43 // loop_footer
                %s279 = sadd.s32 1, %s275
              $region50: #{_forward.8} parent=43 // loop_footer_branch
                %274 = sbr.rel target = $region46
              $region51: #{_forward.8} parent=43 // loop_exit
                _
            $region44: #{_forward.8} parent=35 // pred_fallthru
              _
          $region36: #{_forward.8} parent=31 // pred_fallthru
            _
          %309 = vnop
        $region32: #{_forward.8} parent=27 // pred_fallthru
          _
        // Predicated region
        $region70: #{_forward.8} parent=27 // pred_check
          %p310 = pneg %p75
        $region71: #{_forward.8} parent=27 // pred_check_branch
          %312 = sbr.rel (%p310) target = $region73
        $region72: #{_forward.8} parent=27 // pred_region
          %s313 = smul.u32 2, %s21
          %p314 = scmp.lt.s32.totalorder %s20, 1
          %s315 = scalar_select %p314, %s20, 1
          %p316 = scmp.lt.s32.totalorder %s313, 3
          %s317 = scalar_select %p316, %s313, 3
          %s318 = smul.addr %s315, 4
          %s319 = sadd.s32 %s317, %s318
          %s320 = smul.addr %s319, 4
          %s321 = scalar_lea.vmem %s1, %s320
          %s322 = smul.u32 2, %s21
        $region73: #{_forward.8} parent=27 // pred_fallthru
          _
        // Predicated region
        $region74: #{_forward.8} parent=27 // pred_check
          %p323 = pneg %p103
        $region75: #{_forward.8} parent=27 // pred_check_branch
          %325 = sbr.rel (%p323) target = $region77
        $region76: #{_forward.8} parent=27 // pred_region
          %p326 = scmp.lt.s32.totalorder %s20, 1
          %s327 = scalar_select %p326, %s20, 1
          %p328 = scmp.lt.s32.totalorder %s21, 1
          %s329 = scalar_select %p328, %s21, 1
          %s330 = smul.addr %s329, 2
          %s331 = smul.addr %s327, 4
          %s332 = sadd.s32 %s330, %s331
          %s333 = smul.addr %s332, 4
          %s334 = scalar_lea.vmem %s2, %s333
        $region77: #{_forward.8} parent=27 // pred_fallthru
          _
        // Predicated region
        $region78: #{_forward.8} parent=27 // pred_check
          %p335 = pneg %p131
        $region79: #{_forward.8} parent=27 // pred_check_branch
          %337 = sbr.rel (%p335) target = $region81
        $region80: #{_forward.8} parent=27 // pred_region
          %p338 = scmp.lt.s32.totalorder %s20, 1
          %s339 = scalar_select %p338, %s20, 1
          %p340 = scmp.lt.s32.totalorder %s21, 1
          %s341 = scalar_select %p340, %s21, 1
          %s342 = smul.addr %s339, 2
          %s343 = sadd.s32 %s341, %s342
          %s344 = smul.addr %s343, 4
          %s345 = scalar_lea.vmem %s3, %s344
        $region81: #{_forward.8} parent=27 // pred_fallthru
          _
      $region28: #{_forward.8} parent=5 // pred_fallthru
        _
      %p346 = scmp.le.s32.totalorder 1, %s13
      %p347 = scmp.lt.s32.totalorder %s13, 5
      %p348 = pnand %p346, %p347
      %p349 = pneg %p348
      // Predicated region
      $region82: #{_forward.8} parent=5 // pred_check
        _
      $region83: #{_forward.8} parent=5 // pred_check_branch
        %351 = sbr.rel (%p348) target = $region85
      $region84: #{_forward.8} parent=5 // pred_region
        %s352 = ssub.s32 %s13, 1
        %s353 = sand.u32 %s40, 1
        %s354 = sand.u32 %s40, 1
        %s355 = smul.addr %s354, 8
        %s356 = scalar_lea.vmem [#allocation2], %s355
        // Predicated region
        $region86: #{_forward.8} parent=84 // pred_check
          %p357 = pneg %p53
        $region87: #{_forward.8} parent=84 // pred_check_branch
          %359 = sbr.rel (%p357) target = $region89
        $region88: #{_forward.8} parent=84 // pred_region
          _
        $region89: #{_forward.8} parent=84 // pred_fallthru
          _
        %s360 = sand.u32 %s40, 1
        %s361 = sand.u32 %s40, 1
        %s362 = smul.addr %s361, 8
        %s363 = scalar_lea.vmem [#allocation2], %s362
        %p364 = pneg %p53
        %p365 = pneg %p50
        %s366 = smul.u32 2, %s23
        %p367 = scmp.lt.s32.totalorder %s22, 1
        %s368 = scalar_select %p367, %s22, 1
        %p369 = scmp.lt.s32.totalorder %s366, 3
        %s370 = scalar_select %p369, %s366, 3
        %s371 = smul.addr %s368, 4
        %s372 = sadd.s32 %s370, %s371
        %s373 = smul.addr %s372, 4
        %s374 = scalar_lea.vmem %s1, %s373
        %p375 = pneg %p81
        %p376 = pneg %p78
        %p377 = scmp.lt.s32.totalorder %s22, 1
        %s378 = scalar_select %p377, %s22, 1
        %p379 = scmp.lt.s32.totalorder %s23, 1
        %s380 = scalar_select %p379, %s23, 1
        %s381 = smul.addr %s380, 2
        %s382 = smul.addr %s378, 4
        %s383 = sadd.s32 %s381, %s382
        %s384 = smul.addr %s383, 4
        %s385 = scalar_lea.vmem %s2, %s384
        %p386 = pneg %p109
        %p387 = pneg %p106
        %p388 = scmp.lt.s32.totalorder %s22, 1
        %s389 = scalar_select %p388, %s22, 1
        %p390 = scmp.lt.s32.totalorder %s23, 1
        %s391 = scalar_select %p390, %s23, 1
        %s392 = smul.addr %s389, 2
        %s393 = sadd.s32 %s391, %s392
        %s394 = smul.addr %s393, 4
        %s395 = scalar_lea.vmem %s3, %s394
        %p396 = pneg %p137
        %p397 = pneg %p134
        %p398 = pneg %p158
        %p399 = pneg %p155
        %p400 = pneg %p179
        %p401 = pneg %p176
        %p402 = pneg %p200
        %p403 = pneg %p197
        %p404 = pneg %p228
        %p405 = pneg %p225
        %s406 = smul.u32 2, %s23
        %p407 = scmp.lt.s32.totalorder %s22, 1
        %s408 = scalar_select %p407, %s22, 1
        %p409 = scmp.lt.s32.totalorder %s406, 3
        %s410 = scalar_select %p409, %s406, 3
        %s411 = smul.addr %s408, 4
        %s412 = sadd.s32 %s410, %s411
        %s413 = smul.addr %s412, 4
        %s414 = scalar_lea.vmem %s7, %s413
        %s415 = smul.u32 2, %s23
        %p416 = scmp.lt.s32.totalorder %s22, 1
        %s417 = scalar_select %p416, %s22, 1
        %p418 = scmp.lt.s32.totalorder %s415, 3
        %s419 = scalar_select %p418, %s415, 3
        %s420 = smul.addr %s417, 4
        %s421 = sadd.s32 %s419, %s420
        %s422 = smul.addr %s421, 4
        %s423 = scalar_lea.vmem %s1, %s422
        %s424 = smul.u32 2, %s23
        %p425 = scmp.lt.s32.totalorder %s22, 1
        %s426 = scalar_select %p425, %s22, 1
        %p427 = scmp.lt.s32.totalorder %s23, 1
        %s428 = scalar_select %p427, %s23, 1
        %s429 = smul.addr %s428, 2
        %s430 = smul.addr %s426, 4
        %s431 = sadd.s32 %s429, %s430
        %s432 = smul.addr %s431, 4
        %s433 = scalar_lea.vmem %s2, %s432
        %p434 = scmp.lt.s32.totalorder %s22, 1
        %s435 = scalar_select %p434, %s22, 1
        %p436 = scmp.lt.s32.totalorder %s23, 1
        %s437 = scalar_select %p436, %s23, 1
        %s438 = smul.addr %s435, 2
        %s439 = sadd.s32 %s437, %s438
        %s440 = smul.addr %s439, 4
        %s441 = scalar_lea.vmem %s3, %s440
        %s442 = smul.u32 2, %s23
        %p443 = scmp.lt.s32.totalorder %s22, 1
        %s444 = scalar_select %p443, %s22, 1
        %p445 = scmp.lt.s32.totalorder %s442, 3
        %s446 = scalar_select %p445, %s442, 3
        %s447 = smul.addr %s444, 4
        %s448 = sadd.s32 %s446, %s447
        %s449 = smul.addr %s448, 4
        %s450 = scalar_lea.vmem %s7, %s449
        %s451 = smul.u32 2, %s23
        %v455 = vld [vmem:[%s356] sm:$0xf]
        %v456 = vld [vmem:[%s356 + $0x4] sm:$0x3]
        %v457 = vld [vmem:[%s433] sm:$0xf]
        %v458 = vld [vmem:[%s433 + $0x4] sm:$0x3]
        %v461 = vunpack.c.l.b16 %v455
        %v462 = vunpack.c.l.b16 %v456
        %v463 = vpack.c.b16 %v462, %v461
        %v467 = vunpack.c.l.b16 %v457
        %v468 = vunpack.c.l.b16 %v458
        %v469 = vpack.c.b16 %v468, %v467
        %s471 = smul.u32 %s23, 128
        %s472 = ssub.s32 509, %s471
        %v473 = vlaneseq
        %v474 = vand.u32 %v473, 127
        %v475 = vadd.s32 %v474, 128
        %v476 = vstv %s472
        %vm477 = vcmp.lt.s32.totalorder %v474, %v476
        %vm478 = vcmp.lt.s32.totalorder %v475, %v476
        %vm479 = vmpackc.low %vm478, %vm477
        %v480 = vsel %vm479, 65537, 0
        %v481 = vlaneseq
        %v482 = vshrl.u32 %v481, 7
        %v483 = vsub.s32 0, %v482
        %v484 = vrot.slane %v480, %v483
        %v485 = vlaneseq
        %v486 = vshrl.u32 %v485, 7
        %v487 = vsub.s32 4, %v486
        %v488 = vrot.slane %v480, %v487
        %vm489 = vcmp.ne.s16.totalorder %v484, 0
        %vm490 = vcmp.ne.s16.totalorder %v488, 0
        %v491 = vsel %vm489, %v463, 0
        %v492 = vsel %vm490, %v469, 0
        %v493 = vld [vmem:[%s4] sm:$0xff]
        %v494 = vld [vmem:[%s4 + $0x8] sm:$0xf]
        %v495 = vld [vmem:[%s4 + $0xc] sm:$0xff]
        %v496 = vld [vmem:[%s4 + $0x14] sm:$0xf]
        %v497 = vld [vmem:[%s4 + $0x18] sm:$0xff]
        %v498 = vld [vmem:[%s4 + $0x20] sm:$0xf]
        %v499 = vld [vmem:[%s4 + $0x24] sm:$0xff]
        %v500 = vld [vmem:[%s4 + $0x2c] sm:$0xf]
        %v501 = vld [vmem:[%s4 + $0x30] sm:$0xff]
        %v502 = vld [vmem:[%s4 + $0x38] sm:$0xf]
        %v503 = vld [vmem:[%s4 + $0x3c] sm:$0xff]
        %v504 = vld [vmem:[%s4 + $0x44] sm:$0xf]
        %v505 = vld [vmem:[%s4 + $0x48] sm:$0xff]
        %v506 = vld [vmem:[%s4 + $0x50] sm:$0xf]
        %v507 = vld [vmem:[%s4 + $0x54] sm:$0xff]
        %v508 = vld [vmem:[%s4 + $0x5c] sm:$0xf]
        %v509 = vld [vmem:[%s4 + $0x60] sm:$0xff]
        %v510 = vld [vmem:[%s4 + $0x68] sm:$0xf]
        %v511 = vld [vmem:[%s4 + $0x6c] sm:$0xff]
        %v512 = vld [vmem:[%s4 + $0x74] sm:$0xf]
        %v513 = vld [vmem:[%s4 + $0x78] sm:$0xff]
        %v514 = vld [vmem:[%s4 + $0x80] sm:$0xf]
        %v515 = vld [vmem:[%s4 + $0x84] sm:$0xff]
        %v516 = vld [vmem:[%s4 + $0x8c] sm:$0xf]
        %v517 = vld [vmem:[%s4 + $0x90] sm:$0xff]
        %v518 = vld [vmem:[%s4 + $0x98] sm:$0xf]
        %v519 = vld [vmem:[%s4 + $0x9c] sm:$0xff]
        %v520 = vld [vmem:[%s4 + $0xa4] sm:$0xf]
        %v521 = vld [vmem:[%s4 + $0xa8] sm:$0xff]
        %v522 = vld [vmem:[%s4 + $0xb0] sm:$0xf]
        %v523 = vld [vmem:[%s4 + $0xb4] sm:$0xff]
        %v524 = vld [vmem:[%s4 + $0xbc] sm:$0xf]
        %v525 = vld [vmem:[%s4 + $0xc0] sm:$0x11]
        %v526 = vld [vmem:[%s4 + $0xc8] sm:$0x1]
        %v561 = vunpack.c.l.b16 %v493
        %v562 = vunpack.c.h.b16 %v493
        %v563 = vunpack.c.l.b16 %v494
        %v564 = vunpack.c.l.b16 %v495
        %v565 = vunpack.c.h.b16 %v495
        %v566 = vunpack.c.l.b16 %v496
        %v567 = vunpack.c.l.b16 %v497
        %v568 = vunpack.c.h.b16 %v497
        %v569 = vunpack.c.l.b16 %v498
        %v570 = vunpack.c.l.b16 %v499
        %v571 = vunpack.c.h.b16 %v499
        %v572 = vunpack.c.l.b16 %v500
        %v573 = vunpack.c.l.b16 %v501
        %v574 = vunpack.c.h.b16 %v501
        %v575 = vunpack.c.l.b16 %v502
        %v576 = vunpack.c.l.b16 %v503
        %v577 = vunpack.c.h.b16 %v503
        %v578 = vunpack.c.l.b16 %v504
        %v579 = vunpack.c.l.b16 %v505
        %v580 = vunpack.c.h.b16 %v505
        %v581 = vunpack.c.l.b16 %v506
        %v582 = vunpack.c.l.b16 %v507
        %v583 = vunpack.c.h.b16 %v507
        %v584 = vunpack.c.l.b16 %v508
        %v585 = vunpack.c.l.b16 %v509
        %v586 = vunpack.c.h.b16 %v509
        %v587 = vunpack.c.l.b16 %v510
        %v588 = vunpack.c.l.b16 %v511
        %v589 = vunpack.c.h.b16 %v511
        %v590 = vunpack.c.l.b16 %v512
        %v591 = vunpack.c.l.b16 %v513
        %v592 = vunpack.c.h.b16 %v513
        %v593 = vunpack.c.l.b16 %v514
        %v594 = vunpack.c.l.b16 %v515
        %v595 = vunpack.c.h.b16 %v515
        %v596 = vunpack.c.l.b16 %v516
        %v597 = vunpack.c.l.b16 %v517
        %v598 = vunpack.c.h.b16 %v517
        %v599 = vunpack.c.l.b16 %v518
        %v600 = vunpack.c.l.b16 %v519
        %v601 = vunpack.c.h.b16 %v519
        %v602 = vunpack.c.l.b16 %v520
        %v603 = vunpack.c.l.b16 %v521
        %v604 = vunpack.c.h.b16 %v521
        %v605 = vunpack.c.l.b16 %v522
        %v606 = vunpack.c.l.b16 %v523
        %v607 = vunpack.c.h.b16 %v523
        %v608 = vunpack.c.l.b16 %v524
        %v609 = vunpack.c.l.b16 %v525
        %v610 = vunpack.c.h.b16 %v525
        %v611 = vunpack.c.l.b16 %v526
        %v612 = vpack.c.b16 %v564, %v561
        %v613 = vpack.c.b16 %v565, %v562
        %v614 = vpack.c.b16 %v566, %v563
        %v615 = vpack.c.b16 %v570, %v567
        %v616 = vpack.c.b16 %v571, %v568
        %v617 = vpack.c.b16 %v572, %v569
        %v618 = vpack.c.b16 %v576, %v573
        %v619 = vpack.c.b16 %v577, %v574
        %v620 = vpack.c.b16 %v578, %v575
        %v621 = vpack.c.b16 %v582, %v579
        %v622 = vpack.c.b16 %v583, %v580
        %v623 = vpack.c.b16 %v584, %v581
        %v624 = vpack.c.b16 %v588, %v585
        %v625 = vpack.c.b16 %v589, %v586
        %v626 = vpack.c.b16 %v590, %v587
        %v627 = vpack.c.b16 %v594, %v591
        %v628 = vpack.c.b16 %v595, %v592
        %v629 = vpack.c.b16 %v596, %v593
        %v630 = vpack.c.b16 %v600, %v597
        %v631 = vpack.c.b16 %v601, %v598
        %v632 = vpack.c.b16 %v602, %v599
        %v633 = vpack.c.b16 %v606, %v603
        %v634 = vpack.c.b16 %v607, %v604
        %v635 = vpack.c.b16 %v608, %v605
        %v636 = vpack.c.b16 %v609, %v609
        %v637 = vpack.c.b16 %v610, %v610
        %v638 = vpack.c.b16 %v611, %v611
        %vm663 = vcmask 7168
        %v665 = vsel %vm663, %v492, 0
        %vm667 = vcmask 1040384
        %v668 = vsel 0, 4294967295, 65535
        %v669 = vsel %vm667, %v668, 0
        %v671 = vand.u32 %v636, %v669
        %v674 = vand.u32 %v637, %v669
        %v677 = vand.u32 %v638, %v669
        %679 = vmatprep.subr.bf16.mxu0 %v613
        %680 = vmatpush1.bf16.msra.mxu0 %v612
        %681 = vmatprep.subr.bf16.mxu0 %v616
        %682 = vmatpush1.bf16.msra.mxu0 %v615
        %683 = vmatprep.subr.bf16.mxu0 %v619
        %684 = vmatpush1.bf16.msra.mxu0 %v618
        %685 = vmatprep.subr.bf16.mxu0 %v622
        %686 = vmatpush1.bf16.msra.mxu0 %v621
        %687 = vmatprep.subr.bf16.mxu0 %v625
        %688 = vmatpush1.bf16.msra.mxu0 %v624
        %689 = vmatprep.subr.bf16.mxu0 %v628
        %690 = vmatpush1.bf16.msra.mxu0 %v627
        %691 = vmatprep.subr.bf16.mxu0 %v631
        %692 = vmatpush1.bf16.msra.mxu0 %v630
        %693 = vmatprep.subr.bf16.mxu0 %v634
        %694 = vmatpush1.bf16.msra.mxu0 %v633
        %695 = vmatprep.subr.bf16.mxu0 %v674
        %696 = vmatpush1.bf16.msra.mxu0 %v671
        %697 = vmatprep.subr.bf16.mxu0 0
        %698 = vmatpush1.bf16.msra.mxu0 0
        %699 = vmatprep.subr.bf16.mxu0 0
        %700 = vmatpush1.bf16.msra.mxu0 0
        %701 = vmatprep.subr.bf16.mxu0 0
        %702 = vmatpush1.bf16.msra.mxu0 0
        %703 = vmatprep.subr.bf16.mxu0 0
        %704 = vmatpush1.bf16.msra.mxu0 0
        %705 = vmatprep.subr.bf16.mxu0 0
        %706 = vmatpush1.bf16.msra.mxu0 0
        %707 = vmatprep.subr.bf16.mxu0 0
        %708 = vmatpush1.bf16.msra.mxu0 0
        %709 = vmatprep.subr.bf16.mxu0 0
        %710 = vmatpush1.bf16.msra.mxu0 0
        %711 = vmatprep.mubr.bf16.mxu0 %v665
        %712 = vmatmul.mubr.bf16.gmra.mrb[0].mxu0 %v491
        %v713 = vpop.f32.mrb[0].mxu0
        %v714 = vadd.f32 0.0, %v713
        %v715 = vpop.f32.mrb[0].mxu0
        %v716 = vadd.f32 0.0, %v715
        %v717 = vpop.f32.mrb[0].mxu0
        %v718 = vadd.f32 0.0, %v717
        %v719 = vpop.f32.mrb[0].mxu0
        %v720 = vadd.f32 0.0, %v719
        %721 = vdwg.mxu0
        %722 = vmatprep.subr.bf16.mxu0 0
        %723 = vmatpush1.bf16.msra.mxu0 %v614
        %724 = vmatprep.subr.bf16.mxu0 0
        %725 = vmatpush1.bf16.msra.mxu0 %v617
        %726 = vmatprep.subr.bf16.mxu0 0
        %727 = vmatpush1.bf16.msra.mxu0 %v620
        %728 = vmatprep.subr.bf16.mxu0 0
        %729 = vmatpush1.bf16.msra.mxu0 %v623
        %730 = vmatprep.subr.bf16.mxu0 0
        %731 = vmatpush1.bf16.msra.mxu0 %v626
        %732 = vmatprep.subr.bf16.mxu0 0
        %733 = vmatpush1.bf16.msra.mxu0 %v629
        %734 = vmatprep.subr.bf16.mxu0 0
        %735 = vmatpush1.bf16.msra.mxu0 %v632
        %736 = vmatprep.subr.bf16.mxu0 0
        %737 = vmatpush1.bf16.msra.mxu0 %v635
        %738 = vmatprep.subr.bf16.mxu0 0
        %739 = vmatpush1.bf16.msra.mxu0 %v677
        %740 = vmatprep.subr.bf16.mxu0 0
        %741 = vmatpush1.bf16.msra.mxu0 0
        %742 = vmatprep.subr.bf16.mxu0 0
        %743 = vmatpush1.bf16.msra.mxu0 0
        %744 = vmatprep.subr.bf16.mxu0 0
        %745 = vmatpush1.bf16.msra.mxu0 0
        %746 = vmatprep.subr.bf16.mxu0 0
        %747 = vmatpush1.bf16.msra.mxu0 0
        %748 = vmatprep.subr.bf16.mxu0 0
        %749 = vmatpush1.bf16.msra.mxu0 0
        %750 = vmatprep.subr.bf16.mxu0 0
        %751 = vmatpush1.bf16.msra.mxu0 0
        %752 = vmatprep.subr.bf16.mxu0 0
        %753 = vmatpush1.bf16.msra.mxu0 0
        %754 = vmatprep.mubr.bf16.mxu0 %v665
        %755 = vmatmul.mubr.bf16.gmra.mrb[0].mxu0 %v491
        %v756 = vpop.f32.mrb[0].mxu0
        %v757 = vadd.f32 0.0, %v756
        %v758 = vpop.f32.mrb[0].mxu0
        %v759 = vpop.f32.mrb[0].mxu0
        %v760 = vadd.f32 0.0, %v759
        %v761 = vpop.f32.mrb[0].mxu0
        %762 = vdwg.mxu0
        %v763 = vpack.c.bf16 %v718, %v714
        %v764 = vpack.c.bf16 %v720, %v716
        %v765 = vpack.c.bf16 %v760, %v757
        %v766 = vld [vmem:[%s423] sm:$0xff]
        %v767 = vld [vmem:[%s441] sm:$0xf]
        %v769 = vunpack.c.l.b16 %v766
        %v770 = vunpack.c.h.b16 %v766
        %v771 = vpack.c.b16 %v769, %v769
        %v772 = vpack.c.b16 %v770, %v770
        %v776 = vrot.slane %v763, 2
        %v777 = vrot.slane %v764, 2
        %v778 = vrot.slane %v765, 2
        %779 = vrot.lane.b32.xlu0 %v776, 127
        %v780 = vpop.permute.xlu0 %779
        %781 = vrot.lane.b32.xlu0 %v777, 127
        %v782 = vpop.permute.xlu0 %781
        %783 = vrot.lane.b32.xlu0 %v778, 127
        %v784 = vpop.permute.xlu0 %783
        %vm785 = vcmask 1039360
        %v786 = vsel %vm785, %v780, %v782
        %v787 = vsel %vm785, %v782, %v784
        %v788 = vrot.slane %v763, 4
        %v789 = vrot.slane %v764, 4
        %v790 = vrot.slane %v765, 4
        %791 = vrot.lane.b32.xlu0 %v788, 126
        %v792 = vpop.permute.xlu0 %791
        %793 = vrot.lane.b32.xlu0 %v789, 126
        %v794 = vpop.permute.xlu0 %793
        %795 = vrot.lane.b32.xlu0 %v790, 126
        %v796 = vpop.permute.xlu0 %795
        %vm797 = vcmask 1031168
        %v798 = vsel %vm797, %v792, %v794
        %v799 = vsel %vm797, %v794, %v796
        %v800 = vrot.slane %v771, 6
        %v801 = vrot.slane %v772, 6
        %v803 = vrot.slane %v771, 2
        %v804 = vrot.slane %v772, 2
        %v805 = vrot.slane %v767, 2
        %806 = vrot.lane.b32.xlu0 %v803, 127
        %v807 = vpop.permute.xlu0 %806
        %808 = vrot.lane.b32.xlu0 %v804, 127
        %v809 = vpop.permute.xlu0 %808
        %810 = vrot.lane.b32.xlu0 %v805, 127
        %v811 = vpop.permute.xlu0 %810
        %v812 = vsel %vm785, %v807, %v809
        %v813 = vsel %vm785, %v809, %v811
        %v814 = vrot.slane %v767, 6
        %815 = vrot.lane.b32.xlu0 %v800, 126
        %v816 = vpop.permute.xlu0 %815
        %817 = vrot.lane.b32.xlu0 %v801, 126
        %v818 = vpop.permute.xlu0 %817
        %819 = vrot.lane.b32.xlu0 %v814, 126
        %v820 = vpop.permute.xlu0 %819
        %v821 = vsel %vm797, %v816, %v818
        %v822 = vsel %vm797, %v818, %v820
        %vm823 = vcmask 1045504
        %v826 = vsel %vm823, %v763, %v786
        %v830 = vsel %vm823, %v764, %v787
        %vm832 = vcmask 1043456
        %v834 = vsel %vm832, %v786, %v798
        %v837 = vsel %vm832, %v787, %v799
        %vm839 = vcmask 1041408
        %v841 = vsel %vm839, %v798, %v800
        %v843 = vsel %vm839, %v799, %v801
        %v845 = vsel %vm823, %v841, %v812
        %v848 = vsel %vm823, %v843, %v813
        %v851 = vsel %vm839, %v812, %v821
        %v853 = vsel %vm839, %v813, %v822
        %v854 = vld [vmem:[%s5] sm:$0xf]
        %v855 = vld [vmem:[%s6] sm:$0xff]
        %857 = vset.pattern.permute.xlu0 0
        %858 = vperm.xlu0 %857, %v855
        %v859 = vpop.permute.xlu0 %858
        %vm861 = vcmask 490496
        %v863 = vsel %vm861, %v854, 0
        %v865 = vsel %vm823, %v851, 0
        %v867 = vsel %vm823, %v853, 0
        %869 = vmatprep.subr.bf16.mxu0 %v830
        %870 = vmatpush1.bf16.msra.mxu0 %v826
        %871 = vmatprep.subr.bf16.mxu0 %v837
        %872 = vmatpush1.bf16.msra.mxu0 %v834
        %873 = vmatprep.subr.bf16.mxu0 %v848
        %874 = vmatpush1.bf16.msra.mxu0 %v845
        %875 = vmatprep.subr.bf16.mxu0 %v867
        %876 = vmatpush1.bf16.msra.mxu0 %v865
        %877 = vmatprep.subr.bf16.mxu0 0
        %878 = vmatpush1.bf16.msra.mxu0 0
        %879 = vmatprep.subr.bf16.mxu0 0
        %880 = vmatpush1.bf16.msra.mxu0 0
        %881 = vmatprep.subr.bf16.mxu0 0
        %882 = vmatpush1.bf16.msra.mxu0 0
        %883 = vmatprep.subr.bf16.mxu0 0
        %884 = vmatpush1.bf16.msra.mxu0 0
        %885 = vmatprep.subr.bf16.mxu0 0
        %886 = vmatpush1.bf16.msra.mxu0 0
        %887 = vmatprep.subr.bf16.mxu0 0
        %888 = vmatpush1.bf16.msra.mxu0 0
        %889 = vmatprep.subr.bf16.mxu0 0
        %890 = vmatpush1.bf16.msra.mxu0 0
        %891 = vmatprep.subr.bf16.mxu0 0
        %892 = vmatpush1.bf16.msra.mxu0 0
        %893 = vmatprep.subr.bf16.mxu0 0
        %894 = vmatpush1.bf16.msra.mxu0 0
        %895 = vmatprep.subr.bf16.mxu0 0
        %896 = vmatpush1.bf16.msra.mxu0 0
        %897 = vmatprep.subr.bf16.mxu0 0
        %898 = vmatpush1.bf16.msra.mxu0 0
        %899 = vmatprep.subr.bf16.mxu0 0
        %900 = vmatpush1.bf16.msra.mxu0 0
        %901 = vmatprep.mubr.bf16.mxu0 0
        %902 = vmatmul.mubr.bf16.gmra.mrb[0].mxu0 %v863
        %v903 = vpop.f32.mrb[0].mxu0
        %v904 = vadd.f32 %v859, %v903
        %v905 = vpop.f32.mrb[0].mxu0
        %v906 = vadd.f32 %v859, %v905
        %v907 = vpop.f32.mrb[0].mxu0
        %v908 = vpop.f32.mrb[0].mxu0
        %909 = vdwg.mxu0
        %vm910 = vcmp.ge.f32.partialorder %v904, 0.0
        %vm911 = vcmp.ge.f32.partialorder %v906, 0.0
        %v912 = vmul.f32 %v904, 0.01
        %v913 = vmul.f32 %v906, 0.01
        %v914 = vsel %vm910, %v904, %v912
        %v915 = vsel %vm911, %v906, %v913
        %v916 = vpack.c.bf16 %v914, %v914
        %v917 = vpack.c.bf16 %v915, %v915
        %v920 = vunpack.c.l.b16 %v916
        %v921 = vunpack.c.l.b16 %v917
        %v922 = vpack.c.b16 %v921, %v920
        %924 = vst [vmem:[%s450] sm:$0xff] %v922
        %s925 = smul.u32 2, %s23
        %p926 = scmp.lt.s32.totalorder %s22, 1
        %s927 = scalar_select %p926, %s22, 1
        %p928 = scmp.lt.s32.totalorder %s925, 3
        %s929 = scalar_select %p928, %s925, 3
        %s930 = smul.addr %s927, 4
        %s931 = sadd.s32 %s929, %s930
        %s932 = smul.addr %s931, 4
        %s933 = scalar_lea.vmem %s7, %s932
        // Predicated region
        $region90: #{_forward.8} parent=84 // pred_check
          %p934 = pneg %p225
        $region91: #{_forward.8} parent=84 // pred_check_branch
          %936 = sbr.rel (%p934) target = $region93
        $region92: #{_forward.8} parent=84 // pred_region
          %s937 = smul.u32 2, %s23
        $region93: #{_forward.8} parent=84 // pred_fallthru
          _
      $region85: #{_forward.8} parent=5 // pred_fallthru
        _
      %p938 = scmp.le.s32.totalorder 2, %s13
      // Predicated region
      $region94: #{_forward.8} parent=5 // pred_check
        %p939 = pneg %p938
      $region95: #{_forward.8} parent=5 // pred_check_branch
        %941 = sbr.rel (%p939) target = $region97
      $region96: #{_forward.8} parent=5 // pred_region
        %s942 = ssub.s32 %s13, 2
        // Predicated region
        $region98: #{_forward.8} parent=96 // pred_check
          %p943 = pneg %p231
        $region99: #{_forward.8} parent=96 // pred_check_branch
          %945 = sbr.rel (%p943) target = $region101
        $region100: #{_forward.8} parent=96 // pred_region
          %s946 = smul.u32 2, %s25
          %p947 = scmp.lt.s32.totalorder %s24, 1
          %s948 = scalar_select %p947, %s24, 1
          %p949 = scmp.lt.s32.totalorder %s946, 3
          %s950 = scalar_select %p949, %s946, 3
          %s951 = smul.addr %s948, 4
          %s952 = sadd.s32 %s950, %s951
          %s953 = smul.addr %s952, 4
          %s954 = scalar_lea.vmem %s7, %s953
        $region101: #{_forward.8} parent=96 // pred_fallthru
          _
      $region97: #{_forward.8} parent=5 // pred_fallthru
        _
    $region6: #{_forward.8} parent=1 // loop_footer
      %s17 = sadd.s32 1, %s13
    $region7: #{_forward.8} parent=1 // loop_footer_branch
      %12 = sbr.rel target = $region3
    $region8: #{_forward.8} parent=1 // loop_exit
      _

</llo_original>
